<compile_context>
chip_gen: v6e
topology: v6e:2x2x1
jax: 0.10.0
libtpu: 0.0.40
codegen_flags: <defaults>
</compile_context>

<pallas_src>
import functools
import math

import jax
import jax.numpy as jnp
from jax.experimental import pallas as pl
from jax.experimental.pallas import tpu as pltpu


# ------------------------- fused MixFFN_skip kernel ---------------------------

def _mixffn_fused_kernel(x_ref, w1_ref, b1_ref, k_ref, cb_ref, g_ref, bt_ref,
                         w2_ref, b2_ref, o_ref, *, H, W):
    """One batch element: out = fc2(gelu(LN(dwconv(fc1(x)) + fc1(x))))."""
    N = H * W
    C2 = w1_ref.shape[1]

    x = x_ref[0]                                               # (N, c1)

    # ---- fc1 (MXU), result stays resident in VMEM -----------------------------
    y = jnp.dot(x, w1_ref[...], preferred_element_type=jnp.float32) + b1_ref[...]

    # ---- depthwise 3x3 conv on the row-major token axis -----------------------
    # Output token t = h*W + w reads input token t + dh*W + dw for each tap.
    # Out-of-range row offsets fall into the zero fill of the shifted slice;
    # column wrap-around is killed by the hoisted left/right border masks.
    taps = k_ref[...]                                          # (9, C2), hoisted
    col = jax.lax.broadcasted_iota(jnp.int32, (N, 1), 0) % W   # token column
    not_left = col >= 1                                        # has a left neighbour
    not_right = col <= W - 2                                   # has a right neighbour

    acc = jnp.zeros((N, C2), jnp.float32)
    for dh in (-1, 0, 1):
        for dw in (-1, 0, 1):
            s = dh * W + dw                                    # token-axis offset
            idx = 3 * (dh + 1) + (dw + 1)
            tap = taps[idx:idx + 1, :]                         # (1, C2)
            if s == 0:
                z = y
            elif s > 0:                                        # z[t] = y[t + s]
                z = jnp.concatenate(
                    [y[s:, :], jnp.zeros((s, C2), jnp.float32)], axis=0)
            else:
                z = jnp.concatenate(
                    [jnp.zeros((-s, C2), jnp.float32), y[:N + s, :]], axis=0)
            if dw == -1:                                       # mask wrapped columns
                z = jnp.where(not_left, z, 0.0)
            elif dw == 1:
                z = jnp.where(not_right, z, 0.0)
            acc = acc + tap * z

    # skip connection: dwconv(fc1(x)) + conv bias + fc1(x)
    s_val = acc + cb_ref[...] + y

    # ---- LayerNorm over channels (eps=1e-5), fused sum / sum-of-squares -------
    inv_c = 1.0 / C2
    mu = jnp.sum(s_val, axis=-1, keepdims=True) * inv_c
    msq = jnp.sum(s_val * s_val, axis=-1, keepdims=True) * inv_c
    var = msq - mu * mu
    normed = (s_val - mu) * jax.lax.rsqrt(var + 1e-5)
    normed = normed * g_ref[...] + bt_ref[...]

    # ---- exact GELU (erf form, torch.nn.GELU default) --------------------------
    act = 0.5 * normed * (1.0 + jax.lax.erf(normed * 0.7071067811865476))

    # ---- fc2 (MXU), lane-dense output store ------------------------------------
    out = jnp.dot(act, w2_ref[...], preferred_element_type=jnp.float32) + b2_ref[...]
    o_ref[0] = out.astype(o_ref.dtype)


def mixffn_skip_forward(x, params, H, W):
    """x: (B, N, c1) with N == H*W (row-major tokens); returns (B, N, c1)."""
    B, N, c1 = x.shape
    assert N == H * W
    c2 = params["w1"].shape[1]

    kernel = functools.partial(_mixffn_fused_kernel, H=H, W=W)
    const = lambda b: (0, 0)          # weights/biases: one block, fetched once

    return pl.pallas_call(
        kernel,
        out_shape=jax.ShapeDtypeStruct((B, N, c1), jnp.float32),
        grid=(B,),
        in_specs=[
            pl.BlockSpec((1, N, c1), lambda b: (b, 0, 0)),    # x (per batch element)
            pl.BlockSpec((c1, c2), const),                    # fc1 weight
            pl.BlockSpec((1, c2), const),                     # fc1 bias
            pl.BlockSpec((9, c2), const),                     # dwconv taps (3x3 -> 9)
            pl.BlockSpec((1, c2), const),                     # dwconv bias
            pl.BlockSpec((1, c2), const),                     # LayerNorm gamma
            pl.BlockSpec((1, c2), const),                     # LayerNorm beta
            pl.BlockSpec((c2, c1), const),                    # fc2 weight
            pl.BlockSpec((1, c1), const),                     # fc2 bias
        ],
        out_specs=pl.BlockSpec((1, N, c1), lambda b: (b, 0, 0)),
        compiler_params=pltpu.CompilerParams(
            dimension_semantics=("parallel",),
            vmem_limit_bytes=48 * 1024 * 1024,
        ),
    )(x,
      params["w1"], params["b1"].reshape(1, c2),
      params["dwk"].reshape(9, c2), params["dwb"].reshape(1, c2),
      params["g1"].reshape(1, c2), params["bt1"].reshape(1, c2),
      params["w2"], params["b2"].reshape(1, c1))


# ------------------------------ pure-JAX reference -----------------------------

def reference(x, params, H, W):
    B, N, c1 = x.shape
    c2 = params["w1"].shape[1]
    hi = jax.lax.Precision.HIGHEST
    y = jnp.dot(x, params["w1"], precision=hi) + params["b1"]            # (B, N, c2)
    y_img = y.reshape(B, H, W, c2)
    kern = params["dwk"][:, :, None, :]                                  # HWIO (3,3,1,c2)
    conv = jax.lax.conv_general_dilated(
        y_img, kern, window_strides=(1, 1), padding="SAME",
        dimension_numbers=("NHWC", "HWIO", "NHWC"), feature_group_count=c2,
        precision=hi)
    conv = conv + params["dwb"]
    s = conv.reshape(B, N, c2) + y
    mean = s.mean(-1, keepdims=True)
    var = ((s - mean) ** 2).mean(-1, keepdims=True)
    ln = (s - mean) / jnp.sqrt(var + 1e-5) * params["g1"] + params["bt1"]
    ax = jax.nn.gelu(ln, approximate=False)
    return jnp.dot(ax, params["w2"], precision=hi) + params["b2"]


# ------------------------------------ main --------------------------------------

if __name__ == "__main__":
    # Small but module-consistent shapes: MixFFN_skip(dims*8, dims*32) with
    # dims=16 -> c1=128, c2=512 (same 1:4 ratio as the real 512/2048), an
    # 8x8 token grid (N=64), batch 2.  Channels are lane-dense (x128).
    B, H, W = 2, 8, 8
    N = H * W
    c1, c2 = 128, 512

    key = jax.random.PRNGKey(0)
    kx, k1, k2, k3, k4, k5, k6, k7 = jax.random.split(key, 8)

    x = jax.random.normal(kx, (B, N, c1), jnp.float32)

    # Deterministic synthetic parameters (shapes from MixFFN_skip.__init__).
    params = {
        "w1": jax.random.normal(k1, (c1, c2), jnp.float32) / math.sqrt(c1),   # fc1
        "b1": jax.random.normal(k2, (c2,), jnp.float32) * 0.01,
        "dwk": jax.random.normal(k3, (3, 3, c2), jnp.float32) * 0.1,          # dwconv (depthwise)
        "dwb": jax.random.normal(k4, (c2,), jnp.float32) * 0.01,
        "g1": 1.0 + 0.1 * jax.random.normal(k5, (c2,), jnp.float32),          # norm1 weight
        "bt1": 0.1 * jax.random.normal(k6, (c2,), jnp.float32),               # norm1 bias
        "w2": jax.random.normal(k7, (c2, c1), jnp.float32) / math.sqrt(c2),   # fc2
        "b2": jnp.zeros((c1,), jnp.float32),
        # norm2 / norm3 exist in the PyTorch module but are unused in forward().
    }

    out = jax.block_until_ready(mixffn_skip_forward(x, params, H, W))
    ref = jax.block_until_ready(reference(x, params, H, W))

    assert out.shape == (B, N, c1)
    max_err = float(jnp.max(jnp.abs(out - ref)))
    assert jnp.allclose(out, ref, rtol=2e-4, atol=2e-4), max_err

    print("KERNEL_OK")
</pallas_src>

<mosaic_0001>
module attributes {stable_mosaic.version = 11 : i64} {
  func.func @_mixffn_fused_kernel(%arg0: i32, %arg1: memref<1x64x128xf32, #tpu.memory_space<vmem>>, %arg2: memref<128x512xf32, #tpu.memory_space<vmem>>, %arg3: memref<1x512xf32, #tpu.memory_space<vmem>>, %arg4: memref<9x512xf32, #tpu.memory_space<vmem>>, %arg5: memref<1x512xf32, #tpu.memory_space<vmem>>, %arg6: memref<1x512xf32, #tpu.memory_space<vmem>>, %arg7: memref<1x512xf32, #tpu.memory_space<vmem>>, %arg8: memref<512x128xf32, #tpu.memory_space<vmem>>, %arg9: memref<1x128xf32, #tpu.memory_space<vmem>>, %arg10: memref<1x64x128xf32, #tpu.memory_space<vmem>>) attributes {dimension_semantics = [#tpu.dimension_semantics<parallel>], iteration_bounds = array<i64: 2>, scalar_prefetch = 0 : i64, scratch_operands = 0 : i64, tpu.core_type = #tpu.core_type<tc>, window_params = [{transform_indices = @transform_0, window_bounds = array<i64: 1, 64, 128>}, {pipeline_mode = #tpu.pipeline_mode<synchronous>, transform_indices = @transform_1, window_bounds = array<i64: 128, 512>}, {pipeline_mode = #tpu.pipeline_mode<synchronous>, transform_indices = @transform_2, window_bounds = array<i64: 1, 512>}, {pipeline_mode = #tpu.pipeline_mode<synchronous>, transform_indices = @transform_3, window_bounds = array<i64: 9, 512>}, {pipeline_mode = #tpu.pipeline_mode<synchronous>, transform_indices = @transform_4, window_bounds = array<i64: 1, 512>}, {pipeline_mode = #tpu.pipeline_mode<synchronous>, transform_indices = @transform_5, window_bounds = array<i64: 1, 512>}, {pipeline_mode = #tpu.pipeline_mode<synchronous>, transform_indices = @transform_6, window_bounds = array<i64: 1, 512>}, {pipeline_mode = #tpu.pipeline_mode<synchronous>, transform_indices = @transform_7, window_bounds = array<i64: 512, 128>}, {pipeline_mode = #tpu.pipeline_mode<synchronous>, transform_indices = @transform_8, window_bounds = array<i64: 1, 128>}, {transform_indices = @transform_9, window_bounds = array<i64: 1, 64, 128>}]} {
    %c0 = arith.constant 0 : index
    %c0_0 = arith.constant 0 : index
    %c0_1 = arith.constant 0 : index
    %0 = vector.load %arg1[%c0, %c0_0, %c0_1] : memref<1x64x128xf32, #tpu.memory_space<vmem>>, vector<1x64x128xf32>
    %1 = vector.shape_cast %0 : vector<1x64x128xf32> to vector<64x128xf32>
    %c0_2 = arith.constant 0 : index
    %c0_3 = arith.constant 0 : index
    %2 = vector.load %arg2[%c0_2, %c0_3] : memref<128x512xf32, #tpu.memory_space<vmem>>, vector<128x512xf32>
    %cst = arith.constant dense<0.000000e+00> : vector<64x512xf32>
    %3 = tpu.matmul %1, %2, %cst {dimension_numbers = #tpu.dot_dimension_numbers<[1], [0], [0], [1], [0, 0, 1, 1], [], []>} : vector<64x128xf32>, vector<128x512xf32>, vector<64x512xf32> -> vector<64x512xf32>
    %c0_4 = arith.constant 0 : index
    %c0_5 = arith.constant 0 : index
    %4 = vector.load %arg3[%c0_4, %c0_5] : memref<1x512xf32, #tpu.memory_space<vmem>>, vector<1x512xf32>
    %5 = vector.broadcast %4 : vector<1x512xf32> to vector<64x512xf32>
    %6 = arith.addf %3, %5 : vector<64x512xf32>
    %c0_6 = arith.constant 0 : index
    %c0_7 = arith.constant 0 : index
    %7 = vector.load %arg4[%c0_6, %c0_7] : memref<9x512xf32, #tpu.memory_space<vmem>>, vector<9x512xf32>
    %8 = tpu.iota {dimensions = array<i32: 0>} : vector<64x1xi32>
    %c8_i32 = arith.constant 8 : i32
    %c0_i32 = arith.constant 0 : i32
    %9 = arith.cmpi eq, %c8_i32, %c0_i32 : i32
    %c1_i32 = arith.constant 1 : i32
    %10 = arith.select %9, %c1_i32, %c8_i32 : i32
    %11 = vector.broadcast %10 : i32 to vector<64x1xi32>
    %12 = arith.remsi %8, %11 : vector<64x1xi32>
    %c0_i32_8 = arith.constant 0 : i32
    %13 = vector.broadcast %c0_i32_8 : i32 to vector<64x1xi32>
    %14 = arith.cmpi ne, %12, %13 : vector<64x1xi32>
    %c0_i32_9 = arith.constant 0 : i32
    %15 = vector.broadcast %c0_i32_9 : i32 to vector<64x1xi32>
    %16 = arith.cmpi slt, %12, %15 : vector<64x1xi32>
    %c0_i32_10 = arith.constant 0 : i32
    %17 = arith.cmpi slt, %10, %c0_i32_10 : i32
    %18 = vector.broadcast %17 : i1 to vector<64x1xi1>
    %19 = vector.broadcast %18 : vector<64x1xi1> to vector<64x1xi1>
    %20 = arith.xori %16, %19 : vector<64x1xi1>
    %21 = arith.andi %20, %14 : vector<64x1xi1>
    %22 = vector.broadcast %10 : i32 to vector<64x1xi32>
    %23 = arith.addi %12, %22 : vector<64x1xi32>
    %24 = arith.select %21, %23, %12 : vector<64x1xi1>, vector<64x1xi32>
    %c1_i32_11 = arith.constant 1 : i32
    %25 = vector.broadcast %c1_i32_11 : i32 to vector<64x1xi32>
    %26 = arith.cmpi sge, %24, %25 : vector<64x1xi32>
    %c6_i32 = arith.constant 6 : i32
    %27 = vector.broadcast %c6_i32 : i32 to vector<64x1xi32>
    %28 = arith.cmpi sle, %24, %27 : vector<64x1xi32>
    %cst_12 = arith.constant 0.000000e+00 : f32
    %29 = vector.broadcast %cst_12 : f32 to vector<64x512xf32>
    %30 = vector.extract_strided_slice %7 {offsets = [0, 0], sizes = [1, 512], strides = [1, 1]} : vector<9x512xf32> to vector<1x512xf32>
    %cst_13 = arith.constant 0.000000e+00 : f32
    %31 = vector.broadcast %cst_13 : f32 to vector<9x512xf32>
    %32 = vector.extract_strided_slice %6 {offsets = [0, 0], sizes = [55, 512], strides = [1, 1]} : vector<64x512xf32> to vector<55x512xf32>
    %33 = tpu.concatenate %31, %32 in 0 : vector<9x512xf32>, vector<55x512xf32> -> vector<64x512xf32>
    %cst_14 = arith.constant 0.000000e+00 : f32
    %34 = vector.shape_cast %26 : vector<64x1xi1> to vector<64x1xi1>
    %35 = vector.broadcast %34 : vector<64x1xi1> to vector<64x512xi1>
    %36 = vector.broadcast %cst_14 : f32 to vector<64x512xf32>
    %37 = arith.select %35, %33, %36 : vector<64x512xi1>, vector<64x512xf32>
    %38 = vector.broadcast %30 : vector<1x512xf32> to vector<64x512xf32>
    %39 = arith.mulf %38, %37 : vector<64x512xf32>
    %40 = arith.addf %29, %39 : vector<64x512xf32>
    %41 = vector.extract_strided_slice %7 {offsets = [1, 0], sizes = [1, 512], strides = [1, 1]} : vector<9x512xf32> to vector<1x512xf32>
    %cst_15 = arith.constant 0.000000e+00 : f32
    %42 = vector.broadcast %cst_15 : f32 to vector<8x512xf32>
    %43 = vector.extract_strided_slice %6 {offsets = [0, 0], sizes = [56, 512], strides = [1, 1]} : vector<64x512xf32> to vector<56x512xf32>
    %44 = tpu.concatenate %42, %43 in 0 : vector<8x512xf32>, vector<56x512xf32> -> vector<64x512xf32>
    %45 = vector.broadcast %41 : vector<1x512xf32> to vector<64x512xf32>
    %46 = arith.mulf %45, %44 : vector<64x512xf32>
    %47 = arith.addf %40, %46 : vector<64x512xf32>
    %48 = vector.extract_strided_slice %7 {offsets = [2, 0], sizes = [1, 512], strides = [1, 1]} : vector<9x512xf32> to vector<1x512xf32>
    %cst_16 = arith.constant 0.000000e+00 : f32
    %49 = vector.broadcast %cst_16 : f32 to vector<7x512xf32>
    %50 = vector.extract_strided_slice %6 {offsets = [0, 0], sizes = [57, 512], strides = [1, 1]} : vector<64x512xf32> to vector<57x512xf32>
    %51 = tpu.concatenate %49, %50 in 0 : vector<7x512xf32>, vector<57x512xf32> -> vector<64x512xf32>
    %cst_17 = arith.constant 0.000000e+00 : f32
    %52 = vector.shape_cast %28 : vector<64x1xi1> to vector<64x1xi1>
    %53 = vector.broadcast %52 : vector<64x1xi1> to vector<64x512xi1>
    %54 = vector.broadcast %cst_17 : f32 to vector<64x512xf32>
    %55 = arith.select %53, %51, %54 : vector<64x512xi1>, vector<64x512xf32>
    %56 = vector.broadcast %48 : vector<1x512xf32> to vector<64x512xf32>
    %57 = arith.mulf %56, %55 : vector<64x512xf32>
    %58 = arith.addf %47, %57 : vector<64x512xf32>
    %59 = vector.extract_strided_slice %7 {offsets = [3, 0], sizes = [1, 512], strides = [1, 1]} : vector<9x512xf32> to vector<1x512xf32>
    %cst_18 = arith.constant 0.000000e+00 : f32
    %60 = vector.broadcast %cst_18 : f32 to vector<1x512xf32>
    %61 = vector.extract_strided_slice %6 {offsets = [0, 0], sizes = [63, 512], strides = [1, 1]} : vector<64x512xf32> to vector<63x512xf32>
    %62 = tpu.concatenate %60, %61 in 0 : vector<1x512xf32>, vector<63x512xf32> -> vector<64x512xf32>
    %cst_19 = arith.constant 0.000000e+00 : f32
    %63 = vector.shape_cast %26 : vector<64x1xi1> to vector<64x1xi1>
    %64 = vector.broadcast %63 : vector<64x1xi1> to vector<64x512xi1>
    %65 = vector.broadcast %cst_19 : f32 to vector<64x512xf32>
    %66 = arith.select %64, %62, %65 : vector<64x512xi1>, vector<64x512xf32>
    %67 = vector.broadcast %59 : vector<1x512xf32> to vector<64x512xf32>
    %68 = arith.mulf %67, %66 : vector<64x512xf32>
    %69 = arith.addf %58, %68 : vector<64x512xf32>
    %70 = vector.extract_strided_slice %7 {offsets = [4, 0], sizes = [1, 512], strides = [1, 1]} : vector<9x512xf32> to vector<1x512xf32>
    %71 = vector.broadcast %70 : vector<1x512xf32> to vector<64x512xf32>
    %72 = arith.mulf %71, %6 : vector<64x512xf32>
    %73 = arith.addf %69, %72 : vector<64x512xf32>
    %74 = vector.extract_strided_slice %7 {offsets = [5, 0], sizes = [1, 512], strides = [1, 1]} : vector<9x512xf32> to vector<1x512xf32>
    %75 = vector.extract_strided_slice %6 {offsets = [1, 0], sizes = [63, 512], strides = [1, 1]} : vector<64x512xf32> to vector<63x512xf32>
    %cst_20 = arith.constant 0.000000e+00 : f32
    %76 = vector.broadcast %cst_20 : f32 to vector<1x512xf32>
    %77 = tpu.concatenate %75, %76 in 0 : vector<63x512xf32>, vector<1x512xf32> -> vector<64x512xf32>
    %cst_21 = arith.constant 0.000000e+00 : f32
    %78 = vector.shape_cast %28 : vector<64x1xi1> to vector<64x1xi1>
    %79 = vector.broadcast %78 : vector<64x1xi1> to vector<64x512xi1>
    %80 = vector.broadcast %cst_21 : f32 to vector<64x512xf32>
    %81 = arith.select %79, %77, %80 : vector<64x512xi1>, vector<64x512xf32>
    %82 = vector.broadcast %74 : vector<1x512xf32> to vector<64x512xf32>
    %83 = arith.mulf %82, %81 : vector<64x512xf32>
    %84 = arith.addf %73, %83 : vector<64x512xf32>
    %85 = vector.extract_strided_slice %7 {offsets = [6, 0], sizes = [1, 512], strides = [1, 1]} : vector<9x512xf32> to vector<1x512xf32>
    %86 = vector.extract_strided_slice %6 {offsets = [7, 0], sizes = [57, 512], strides = [1, 1]} : vector<64x512xf32> to vector<57x512xf32>
    %cst_22 = arith.constant 0.000000e+00 : f32
    %87 = vector.broadcast %cst_22 : f32 to vector<7x512xf32>
    %88 = tpu.concatenate %86, %87 in 0 : vector<57x512xf32>, vector<7x512xf32> -> vector<64x512xf32>
    %cst_23 = arith.constant 0.000000e+00 : f32
    %89 = vector.shape_cast %26 : vector<64x1xi1> to vector<64x1xi1>
    %90 = vector.broadcast %89 : vector<64x1xi1> to vector<64x512xi1>
    %91 = vector.broadcast %cst_23 : f32 to vector<64x512xf32>
    %92 = arith.select %90, %88, %91 : vector<64x512xi1>, vector<64x512xf32>
    %93 = vector.broadcast %85 : vector<1x512xf32> to vector<64x512xf32>
    %94 = arith.mulf %93, %92 : vector<64x512xf32>
    %95 = arith.addf %84, %94 : vector<64x512xf32>
    %96 = vector.extract_strided_slice %7 {offsets = [7, 0], sizes = [1, 512], strides = [1, 1]} : vector<9x512xf32> to vector<1x512xf32>
    %97 = vector.extract_strided_slice %6 {offsets = [8, 0], sizes = [56, 512], strides = [1, 1]} : vector<64x512xf32> to vector<56x512xf32>
    %cst_24 = arith.constant 0.000000e+00 : f32
    %98 = vector.broadcast %cst_24 : f32 to vector<8x512xf32>
    %99 = tpu.concatenate %97, %98 in 0 : vector<56x512xf32>, vector<8x512xf32> -> vector<64x512xf32>
    %100 = vector.broadcast %96 : vector<1x512xf32> to vector<64x512xf32>
    %101 = arith.mulf %100, %99 : vector<64x512xf32>
    %102 = arith.addf %95, %101 : vector<64x512xf32>
    %103 = vector.extract_strided_slice %7 {offsets = [8, 0], sizes = [1, 512], strides = [1, 1]} : vector<9x512xf32> to vector<1x512xf32>
    %104 = vector.extract_strided_slice %6 {offsets = [9, 0], sizes = [55, 512], strides = [1, 1]} : vector<64x512xf32> to vector<55x512xf32>
    %cst_25 = arith.constant 0.000000e+00 : f32
    %105 = vector.broadcast %cst_25 : f32 to vector<9x512xf32>
    %106 = tpu.concatenate %104, %105 in 0 : vector<55x512xf32>, vector<9x512xf32> -> vector<64x512xf32>
    %cst_26 = arith.constant 0.000000e+00 : f32
    %107 = vector.shape_cast %28 : vector<64x1xi1> to vector<64x1xi1>
    %108 = vector.broadcast %107 : vector<64x1xi1> to vector<64x512xi1>
    %109 = vector.broadcast %cst_26 : f32 to vector<64x512xf32>
    %110 = arith.select %108, %106, %109 : vector<64x512xi1>, vector<64x512xf32>
    %111 = vector.broadcast %103 : vector<1x512xf32> to vector<64x512xf32>
    %112 = arith.mulf %111, %110 : vector<64x512xf32>
    %113 = arith.addf %102, %112 : vector<64x512xf32>
    %c0_27 = arith.constant 0 : index
    %c0_28 = arith.constant 0 : index
    %114 = vector.load %arg5[%c0_27, %c0_28] : memref<1x512xf32, #tpu.memory_space<vmem>>, vector<1x512xf32>
    %115 = vector.broadcast %114 : vector<1x512xf32> to vector<64x512xf32>
    %116 = arith.addf %113, %115 : vector<64x512xf32>
    %117 = arith.addf %116, %6 : vector<64x512xf32>
    %cst_29 = arith.constant dense<0.000000e+00> : vector<64xf32>
    %118 = vector.multi_reduction <add>, %117, %cst_29 [1] : vector<64x512xf32> to vector<64xf32>
    %119 = vector.shape_cast %118 : vector<64xf32> to vector<64x1xf32>
    %cst_30 = arith.constant 0.001953125 : f32
    %120 = vector.broadcast %cst_30 : f32 to vector<64x1xf32>
    %121 = arith.mulf %119, %120 : vector<64x1xf32>
    %122 = arith.mulf %117, %117 : vector<64x512xf32>
    %cst_31 = arith.constant dense<0.000000e+00> : vector<64xf32>
    %123 = vector.multi_reduction <add>, %122, %cst_31 [1] : vector<64x512xf32> to vector<64xf32>
    %124 = vector.shape_cast %123 : vector<64xf32> to vector<64x1xf32>
    %cst_32 = arith.constant 0.001953125 : f32
    %125 = vector.broadcast %cst_32 : f32 to vector<64x1xf32>
    %126 = arith.mulf %124, %125 : vector<64x1xf32>
    %127 = arith.mulf %121, %121 : vector<64x1xf32>
    %128 = arith.subf %126, %127 : vector<64x1xf32>
    %129 = vector.broadcast %121 : vector<64x1xf32> to vector<64x512xf32>
    %130 = arith.subf %117, %129 : vector<64x512xf32>
    %cst_33 = arith.constant 9.99999974E-6 : f32
    %131 = vector.broadcast %cst_33 : f32 to vector<64x1xf32>
    %132 = arith.addf %128, %131 : vector<64x1xf32>
    %133 = math.rsqrt %132 : vector<64x1xf32>
    %134 = vector.broadcast %133 : vector<64x1xf32> to vector<64x512xf32>
    %135 = arith.mulf %130, %134 : vector<64x512xf32>
    %c0_34 = arith.constant 0 : index
    %c0_35 = arith.constant 0 : index
    %136 = vector.load %arg6[%c0_34, %c0_35] : memref<1x512xf32, #tpu.memory_space<vmem>>, vector<1x512xf32>
    %137 = vector.broadcast %136 : vector<1x512xf32> to vector<64x512xf32>
    %138 = arith.mulf %135, %137 : vector<64x512xf32>
    %c0_36 = arith.constant 0 : index
    %c0_37 = arith.constant 0 : index
    %139 = vector.load %arg7[%c0_36, %c0_37] : memref<1x512xf32, #tpu.memory_space<vmem>>, vector<1x512xf32>
    %140 = vector.broadcast %139 : vector<1x512xf32> to vector<64x512xf32>
    %141 = arith.addf %138, %140 : vector<64x512xf32>
    %cst_38 = arith.constant 5.000000e-01 : f32
    %142 = vector.broadcast %cst_38 : f32 to vector<64x512xf32>
    %143 = arith.mulf %142, %141 : vector<64x512xf32>
    %cst_39 = arith.constant 0.707106769 : f32
    %144 = vector.broadcast %cst_39 : f32 to vector<64x512xf32>
    %145 = arith.mulf %141, %144 : vector<64x512xf32>
    %146 = math.erf %145 : vector<64x512xf32>
    %cst_40 = arith.constant 1.000000e+00 : f32
    %147 = vector.broadcast %cst_40 : f32 to vector<64x512xf32>
    %148 = arith.addf %147, %146 : vector<64x512xf32>
    %149 = arith.mulf %143, %148 : vector<64x512xf32>
    %c0_41 = arith.constant 0 : index
    %c0_42 = arith.constant 0 : index
    %150 = vector.load %arg8[%c0_41, %c0_42] : memref<512x128xf32, #tpu.memory_space<vmem>>, vector<512x128xf32>
    %cst_43 = arith.constant dense<0.000000e+00> : vector<64x128xf32>
    %151 = tpu.matmul %149, %150, %cst_43 {dimension_numbers = #tpu.dot_dimension_numbers<[1], [0], [0], [1], [0, 0, 1, 1], [], []>} : vector<64x512xf32>, vector<512x128xf32>, vector<64x128xf32> -> vector<64x128xf32>
    %c0_44 = arith.constant 0 : index
    %c0_45 = arith.constant 0 : index
    %152 = vector.load %arg9[%c0_44, %c0_45] : memref<1x128xf32, #tpu.memory_space<vmem>>, vector<1x128xf32>
    %153 = vector.broadcast %152 : vector<1x128xf32> to vector<64x128xf32>
    %154 = arith.addf %151, %153 : vector<64x128xf32>
    %c0_46 = arith.constant 0 : index
    %c0_47 = arith.constant 0 : index
    %c0_48 = arith.constant 0 : index
    %155 = vector.load %arg10[%c0_46, %c0_47, %c0_48] : memref<1x64x128xf32, #tpu.memory_space<vmem>>, vector<1x64x128xf32>
    %156 = vector.shape_cast %155 : vector<1x64x128xf32> to vector<64x128xf32>
    %157 = vector.shape_cast %154 : vector<64x128xf32> to vector<1x64x128xf32>
    tpu.vector_store %arg10[%c0_46, %c0_47, %c0_48], %157 {strides = array<i32>} : memref<1x64x128xf32, #tpu.memory_space<vmem>>, vector<1x64x128xf32>,
    return
  }
  func.func @transform_0(%arg0: i32) -> (i32, i32, i32) {
    %c0_i32 = arith.constant 0 : i32
    %c0_i32_0 = arith.constant 0 : i32
    %c0_i32_1 = arith.constant 0 : i32
    return %arg0, %c0_i32, %c0_i32_0 : i32, i32, i32
  }
  func.func @transform_1(%arg0: i32) -> (i32, i32) {
    %c0_i32 = arith.constant 0 : i32
    %c0_i32_0 = arith.constant 0 : i32
    %c0_i32_1 = arith.constant 0 : i32
    return %c0_i32, %c0_i32_0 : i32, i32
  }
  func.func @transform_2(%arg0: i32) -> (i32, i32) {
    %c0_i32 = arith.constant 0 : i32
    %c0_i32_0 = arith.constant 0 : i32
    %c0_i32_1 = arith.constant 0 : i32
    return %c0_i32, %c0_i32_0 : i32, i32
  }
  func.func @transform_3(%arg0: i32) -> (i32, i32) {
    %c0_i32 = arith.constant 0 : i32
    %c0_i32_0 = arith.constant 0 : i32
    %c0_i32_1 = arith.constant 0 : i32
    return %c0_i32, %c0_i32_0 : i32, i32
  }
  func.func @transform_4(%arg0: i32) -> (i32, i32) {
    %c0_i32 = arith.constant 0 : i32
    %c0_i32_0 = arith.constant 0 : i32
    %c0_i32_1 = arith.constant 0 : i32
    return %c0_i32, %c0_i32_0 : i32, i32
  }
  func.func @transform_5(%arg0: i32) -> (i32, i32) {
    %c0_i32 = arith.constant 0 : i32
    %c0_i32_0 = arith.constant 0 : i32
    %c0_i32_1 = arith.constant 0 : i32
    return %c0_i32, %c0_i32_0 : i32, i32
  }
  func.func @transform_6(%arg0: i32) -> (i32, i32) {
    %c0_i32 = arith.constant 0 : i32
    %c0_i32_0 = arith.constant 0 : i32
    %c0_i32_1 = arith.constant 0 : i32
    return %c0_i32, %c0_i32_0 : i32, i32
  }
  func.func @transform_7(%arg0: i32) -> (i32, i32) {
    %c0_i32 = arith.constant 0 : i32
    %c0_i32_0 = arith.constant 0 : i32
    %c0_i32_1 = arith.constant 0 : i32
    return %c0_i32, %c0_i32_0 : i32, i32
  }
  func.func @transform_8(%arg0: i32) -> (i32, i32) {
    %c0_i32 = arith.constant 0 : i32
    %c0_i32_0 = arith.constant 0 : i32
    %c0_i32_1 = arith.constant 0 : i32
    return %c0_i32, %c0_i32_0 : i32, i32
  }
  func.func @transform_9(%arg0: i32) -> (i32, i32, i32) {
    %c0_i32 = arith.constant 0 : i32
    %c0_i32_0 = arith.constant 0 : i32
    %c0_i32_1 = arith.constant 0 : i32
    return %arg0, %c0_i32, %c0_i32_0 : i32, i32, i32
  }
}

</mosaic_0001>

<llo_original>
// kernel: tpu_custom_call.1
$region0: #{tpu_custom_call.1}
  #allocation0 [shape = 'u32[]', space=smem, size = 0x4, offset = 0x4, fixed_abs, tag = 'smem constant byte address 0x4 - core index']
  #allocation1 [shape = 'u32[144,128]{1,0:T(1,128)}', space=vmem, size = 0x12000, scoped, tag = 'internal scratch']
  %s0 = inlined_call_operand.hbm [shape: f32[2,64,128], index: 0, kind: input, shape index: {}]
  %s1 = inlined_call_operand.hbm [shape: f32[128,512], index: 1, kind: input, shape index: {}]
  %s2 = inlined_call_operand.hbm [shape: f32[1,512], index: 2, kind: input, shape index: {}]
  %s3 = inlined_call_operand.hbm [shape: f32[9,512], index: 3, kind: input, shape index: {}]
  %s4 = inlined_call_operand.vmem [shape: f32[1,512], index: 4, kind: input, shape index: {}]
  %s5 = inlined_call_operand.vmem [shape: f32[1,512], index: 5, kind: input, shape index: {}]
  %s6 = inlined_call_operand.hbm [shape: f32[1,512], index: 6, kind: input, shape index: {}]
  %s7 = inlined_call_operand.hbm [shape: f32[512,128], index: 7, kind: input, shape index: {}]
  %s8 = inlined_call_operand.vmem [shape: f32[1,128], index: 8, kind: input, shape index: {}]
  %s9 = inlined_call_operand.hbm [shape: f32[2,64,128], index: 9, kind: output, shape index: {}]
  %s10 = sld [smem:[#allocation0]]
  $region93: #{tpu_custom_call.1} parent=0
    _
  %s12 = ssub.s32 1, %s10
  %s13 = scalar_select 0, %s12, %s10
  $region1: #{tpu_custom_call.1} parent=0
    #allocation2 [shape = 'u8[65536]{0}', space=vmem, size = 0x10000, scoped, tag = 'input window, operand 0']
    #allocation3 [shape = 's32[2]{0}', space=sflag, size = 0x8, scoped, tag = 'scoped memory for tpu_custom_call.1']
    #allocation4 [shape = 's32[2]{0}', space=sflag, size = 0x8, scoped, tag = 'scoped memory for tpu_custom_call.1']
    #allocation5 [shape = 'u8[262144]{0}', space=vmem, size = 0x40000, scoped, tag = 'input window, operand 1, single buffered']
    #allocation6 [shape = 's32[1]{0}', space=sflag, size = 0x4, scoped, tag = 'scoped memory for tpu_custom_call.1']
    #allocation7 [shape = 'u8[2048]{0}', space=vmem, size = 0x800, scoped, tag = 'input window, operand 2, single buffered']
    #allocation8 [shape = 'u8[32768]{0}', space=vmem, size = 0x8000, scoped, tag = 'input window, operand 3, single buffered']
    #allocation9 [shape = 's32[1]{0}', space=sflag, size = 0x4, scoped, tag = 'scoped memory for tpu_custom_call.1']
    #allocation10 [shape = 'u8[2048]{0}', space=vmem, size = 0x800, scoped, tag = 'input window, operand 6, single buffered']
    #allocation11 [shape = 'u8[262144]{0}', space=vmem, size = 0x40000, scoped, tag = 'input window, operand 7, single buffered']
    #allocation12 [shape = 's32[1]{0}', space=sflag, size = 0x4, scoped, tag = 'scoped memory for tpu_custom_call.1']
    #allocation13 [shape = 'u8[65536]{0}', space=vmem, size = 0x10000, scoped, tag = 'output window, operand 0']
    %14 = vsyncpa [#allocation3], 0
    %s15 = scalar_lea.sflag [#allocation3], 1
    %16 = vsyncpa %s15, 0
    %17 = vsyncpa [#allocation6], 0
    %18 = vsyncpa [#allocation9], 0
    %19 = vsyncpa [#allocation12], 0
    %20 = vsyncpa [#allocation4], 0
    %s21 = scalar_lea.sflag [#allocation4], 1
    %22 = vsyncpa %s21, 0
    loop: start=0, step=1, limit=4
    $region2: #{tpu_custom_call.1} parent=1 // loop_pre_header
      _
    $region3: #{tpu_custom_call.1} parent=1 // loop_header
      %s24 = sphi 0, %s28
      %p25 = scmp.ge.s32.totalorder %s24, 4
      %s34 = sphi 0, %s36
      %s37 = sphi 0, %s34
      %s38 = sphi 0, %s37
      %s54 = sphi 0, %s38
      %s58 = sphi 0, %s58
      %s60 = sphi 0, %s58
      %s61 = sphi 0, %s60
      %s75 = sphi 0, %s61
      %s79 = sphi 0, %s79
      %s81 = sphi 0, %s79
      %s82 = sphi 0, %s81
      %s96 = sphi 0, %s82
      %s100 = sphi 0, %s100
      %s102 = sphi 0, %s100
      %s103 = sphi 0, %s102
      %s117 = sphi 0, %s103
      %s121 = sphi 0, %s121
      %s123 = sphi 0, %s121
      %s124 = sphi 0, %s123
      %s138 = sphi 0, %s124
      %s142 = sphi 0, %s142
      %s144 = sphi 0, %s142
      %s145 = sphi 0, %s144
      %s159 = sphi 0, %s145
      %s163 = sphi 0, %s163
      %s165 = sphi 0, %s163
      %s166 = sphi 0, %s165
      %s180 = sphi 0, %s166
      %s184 = sphi 0, %s184
      %s186 = sphi 0, %s184
      %s187 = sphi 0, %s186
      %s201 = sphi 0, %s187
      %s205 = sphi 0, %s205
      %s207 = sphi 0, %s205
      %s208 = sphi 0, %s207
      %s222 = sphi 0, %s208
      %s228 = sphi 0, %s230
      %s231 = sphi 0, %s228
      %s232 = sphi 0, %s231
      %s248 = sphi 0, %s232
    $region4: #{tpu_custom_call.1} parent=1 // loop_header_branch
      %27 = sbr.rel (%p25) target = $region8
    $region5: #{tpu_custom_call.1} parent=1 // loop_body
      %s29 = ssub.s32 %s24, 1
      %s30 = ssub.s32 %s24, 2
      %s31 = sadd.s32 %s24, 1
      %s32 = ssub.s32 %s24, %s31
      %p33 = scmp.eq.s32.totalorder %s32, 0
      %s35 = sadd.s32 %s34, 1
      %s36 = scalar_select %p33, %s34, %s35
      %p39 = pneg %p33
      %p40 = scmp.eq.s32.totalorder %s24, 1
      %p41 = por %p39, %p40
      %p42 = scmp.ne.s32.totalorder %s34, %s37
      %p43 = scmp.eq.s32.totalorder %s24, 0
      %p44 = por %p42, %p43
      %p45 = scmp.ne.s32.totalorder %s34, %s37
      %p46 = scmp.eq.s32.totalorder %s29, 1
      %p47 = por %p45, %p46
      %p48 = scmp.ne.s32.totalorder %s37, %s38
      %p49 = scmp.eq.s32.totalorder %s29, 0
      %p50 = por %p48, %p49
      %p51 = scmp.ne.s32.totalorder %s37, %s38
      %p52 = scmp.eq.s32.totalorder %s30, 1
      %p53 = por %p51, %p52
      %p55 = scmp.ne.s32.totalorder %s38, %s54
      %p56 = scmp.eq.s32.totalorder %s30, 0
      %p57 = por %p55, %p56
      %s59 = sadd.s32 %s58, 1
      %p62 = scmp.eq.s32.totalorder %s24, 1
      %p63 = scmp.ne.s32.totalorder %s58, %s60
      %p64 = scmp.eq.s32.totalorder %s24, 0
      %p65 = por %p63, %p64
      %p66 = scmp.ne.s32.totalorder %s58, %s60
      %p67 = scmp.eq.s32.totalorder %s29, 1
      %p68 = por %p66, %p67
      %p69 = scmp.ne.s32.totalorder %s60, %s61
      %p70 = scmp.eq.s32.totalorder %s29, 0
      %p71 = por %p69, %p70
      %p72 = scmp.ne.s32.totalorder %s60, %s61
      %p73 = scmp.eq.s32.totalorder %s30, 1
      %p74 = por %p72, %p73
      %p76 = scmp.ne.s32.totalorder %s61, %s75
      %p77 = scmp.eq.s32.totalorder %s30, 0
      %p78 = por %p76, %p77
      %s80 = sadd.s32 %s79, 1
      %p83 = scmp.eq.s32.totalorder %s24, 1
      %p84 = scmp.ne.s32.totalorder %s79, %s81
      %p85 = scmp.eq.s32.totalorder %s24, 0
      %p86 = por %p84, %p85
      %p87 = scmp.ne.s32.totalorder %s79, %s81
      %p88 = scmp.eq.s32.totalorder %s29, 1
      %p89 = por %p87, %p88
      %p90 = scmp.ne.s32.totalorder %s81, %s82
      %p91 = scmp.eq.s32.totalorder %s29, 0
      %p92 = por %p90, %p91
      %p93 = scmp.ne.s32.totalorder %s81, %s82
      %p94 = scmp.eq.s32.totalorder %s30, 1
      %p95 = por %p93, %p94
      %p97 = scmp.ne.s32.totalorder %s82, %s96
      %p98 = scmp.eq.s32.totalorder %s30, 0
      %p99 = por %p97, %p98
      %s101 = sadd.s32 %s100, 1
      %p104 = scmp.eq.s32.totalorder %s24, 1
      %p105 = scmp.ne.s32.totalorder %s100, %s102
      %p106 = scmp.eq.s32.totalorder %s24, 0
      %p107 = por %p105, %p106
      %p108 = scmp.ne.s32.totalorder %s100, %s102
      %p109 = scmp.eq.s32.totalorder %s29, 1
      %p110 = por %p108, %p109
      %p111 = scmp.ne.s32.totalorder %s102, %s103
      %p112 = scmp.eq.s32.totalorder %s29, 0
      %p113 = por %p111, %p112
      %p114 = scmp.ne.s32.totalorder %s102, %s103
      %p115 = scmp.eq.s32.totalorder %s30, 1
      %p116 = por %p114, %p115
      %p118 = scmp.ne.s32.totalorder %s103, %s117
      %p119 = scmp.eq.s32.totalorder %s30, 0
      %p120 = por %p118, %p119
      %s122 = sadd.s32 %s121, 1
      %p125 = scmp.eq.s32.totalorder %s24, 1
      %p126 = scmp.ne.s32.totalorder %s121, %s123
      %p127 = scmp.eq.s32.totalorder %s24, 0
      %p128 = por %p126, %p127
      %p129 = scmp.ne.s32.totalorder %s121, %s123
      %p130 = scmp.eq.s32.totalorder %s29, 1
      %p131 = por %p129, %p130
      %p132 = scmp.ne.s32.totalorder %s123, %s124
      %p133 = scmp.eq.s32.totalorder %s29, 0
      %p134 = por %p132, %p133
      %p135 = scmp.ne.s32.totalorder %s123, %s124
      %p136 = scmp.eq.s32.totalorder %s30, 1
      %p137 = por %p135, %p136
      %p139 = scmp.ne.s32.totalorder %s124, %s138
      %p140 = scmp.eq.s32.totalorder %s30, 0
      %p141 = por %p139, %p140
      %s143 = sadd.s32 %s142, 1
      %p146 = scmp.eq.s32.totalorder %s24, 1
      %p147 = scmp.ne.s32.totalorder %s142, %s144
      %p148 = scmp.eq.s32.totalorder %s24, 0
      %p149 = por %p147, %p148
      %p150 = scmp.ne.s32.totalorder %s142, %s144
      %p151 = scmp.eq.s32.totalorder %s29, 1
      %p152 = por %p150, %p151
      %p153 = scmp.ne.s32.totalorder %s144, %s145
      %p154 = scmp.eq.s32.totalorder %s29, 0
      %p155 = por %p153, %p154
      %p156 = scmp.ne.s32.totalorder %s144, %s145
      %p157 = scmp.eq.s32.totalorder %s30, 1
      %p158 = por %p156, %p157
      %p160 = scmp.ne.s32.totalorder %s145, %s159
      %p161 = scmp.eq.s32.totalorder %s30, 0
      %p162 = por %p160, %p161
      %s164 = sadd.s32 %s163, 1
      %p167 = scmp.eq.s32.totalorder %s24, 1
      %p168 = scmp.ne.s32.totalorder %s163, %s165
      %p169 = scmp.eq.s32.totalorder %s24, 0
      %p170 = por %p168, %p169
      %p171 = scmp.ne.s32.totalorder %s163, %s165
      %p172 = scmp.eq.s32.totalorder %s29, 1
      %p173 = por %p171, %p172
      %p174 = scmp.ne.s32.totalorder %s165, %s166
      %p175 = scmp.eq.s32.totalorder %s29, 0
      %p176 = por %p174, %p175
      %p177 = scmp.ne.s32.totalorder %s165, %s166
      %p178 = scmp.eq.s32.totalorder %s30, 1
      %p179 = por %p177, %p178
      %p181 = scmp.ne.s32.totalorder %s166, %s180
      %p182 = scmp.eq.s32.totalorder %s30, 0
      %p183 = por %p181, %p182
      %s185 = sadd.s32 %s184, 1
      %p188 = scmp.eq.s32.totalorder %s24, 1
      %p189 = scmp.ne.s32.totalorder %s184, %s186
      %p190 = scmp.eq.s32.totalorder %s24, 0
      %p191 = por %p189, %p190
      %p192 = scmp.ne.s32.totalorder %s184, %s186
      %p193 = scmp.eq.s32.totalorder %s29, 1
      %p194 = por %p192, %p193
      %p195 = scmp.ne.s32.totalorder %s186, %s187
      %p196 = scmp.eq.s32.totalorder %s29, 0
      %p197 = por %p195, %p196
      %p198 = scmp.ne.s32.totalorder %s186, %s187
      %p199 = scmp.eq.s32.totalorder %s30, 1
      %p200 = por %p198, %p199
      %p202 = scmp.ne.s32.totalorder %s187, %s201
      %p203 = scmp.eq.s32.totalorder %s30, 0
      %p204 = por %p202, %p203
      %s206 = sadd.s32 %s205, 1
      %p209 = scmp.eq.s32.totalorder %s24, 1
      %p210 = scmp.ne.s32.totalorder %s205, %s207
      %p211 = scmp.eq.s32.totalorder %s24, 0
      %p212 = por %p210, %p211
      %p213 = scmp.ne.s32.totalorder %s205, %s207
      %p214 = scmp.eq.s32.totalorder %s29, 1
      %p215 = por %p213, %p214
      %p216 = scmp.ne.s32.totalorder %s207, %s208
      %p217 = scmp.eq.s32.totalorder %s29, 0
      %p218 = por %p216, %p217
      %p219 = scmp.ne.s32.totalorder %s207, %s208
      %p220 = scmp.eq.s32.totalorder %s30, 1
      %p221 = por %p219, %p220
      %p223 = scmp.ne.s32.totalorder %s208, %s222
      %p224 = scmp.eq.s32.totalorder %s30, 0
      %p225 = por %p223, %p224
      %s226 = ssub.s32 %s24, %s31
      %p227 = scmp.eq.s32.totalorder %s226, 0
      %s229 = sadd.s32 %s228, 1
      %s230 = scalar_select %p227, %s228, %s229
      %p233 = pneg %p227
      %p234 = scmp.eq.s32.totalorder %s24, 1
      %p235 = por %p233, %p234
      %p236 = scmp.ne.s32.totalorder %s228, %s231
      %p237 = scmp.eq.s32.totalorder %s24, 0
      %p238 = por %p236, %p237
      %p239 = scmp.ne.s32.totalorder %s228, %s231
      %p240 = scmp.eq.s32.totalorder %s29, 1
      %p241 = por %p239, %p240
      %p242 = scmp.ne.s32.totalorder %s231, %s232
      %p243 = scmp.eq.s32.totalorder %s29, 0
      %p244 = por %p242, %p243
      %p245 = scmp.ne.s32.totalorder %s231, %s232
      %p246 = scmp.eq.s32.totalorder %s30, 1
      %p247 = por %p245, %p246
      %p249 = scmp.ne.s32.totalorder %s232, %s248
      %p250 = scmp.eq.s32.totalorder %s30, 0
      %p251 = por %p249, %p250
      %p252 = scmp.le.s32.totalorder 1, %s24
      %p253 = scmp.lt.s32.totalorder %s24, 3
      %p254 = pnand %p252, %p253
      %p255 = pneg %p254
      // Predicated region
      $region9: #{tpu_custom_call.1} parent=5 // pred_check
        _
      $region10: #{tpu_custom_call.1} parent=5 // pred_check_branch
        %257 = sbr.rel (%p254) target = $region12
      $region11: #{tpu_custom_call.1} parent=5 // pred_region
        %s258 = ssub.s32 %s24, 1
        // Predicated region
        $region13: #{tpu_custom_call.1} parent=11 // pred_check
          %p259 = pneg %p71
        $region14: #{tpu_custom_call.1} parent=11 // pred_check_branch
          %261 = sbr.rel (%p259) target = $region16
        $region15: #{tpu_custom_call.1} parent=11 // pred_region
          %s263 = ssub.s32 8192, 8192
          %264 = vsyncadd [#allocation6], %s263
          %s265 = sshll.u32 [#allocation5], 4
          %s266 = int_to_ptr.vmem [resolvable:$true] %s265
          %271 = dma.hbm_to_vmem [thread:$0]  %s1, 8192, %s266, [#allocation6], 512, 512, 32
        $region16: #{tpu_custom_call.1} parent=11 // pred_fallthru
          _
        // Predicated region
        $region17: #{tpu_custom_call.1} parent=11 // pred_check
          %p272 = pneg %p92
        $region18: #{tpu_custom_call.1} parent=11 // pred_check_branch
          %274 = sbr.rel (%p272) target = $region20
        $region19: #{tpu_custom_call.1} parent=11 // pred_region
          %s276 = ssub.s32 64, 64
          %277 = vsyncadd [#allocation6], %s276
          %s279 = sshll.u32 [#allocation7], 4
          %s280 = int_to_ptr.vmem [resolvable:$true] %s279
          %282 = dma.hbm_to_vmem [thread:$0]  %s2, 64, %s280, [#allocation6]
        $region20: #{tpu_custom_call.1} parent=11 // pred_fallthru
          _
        // Predicated region
        $region21: #{tpu_custom_call.1} parent=11 // pred_check
          %p283 = pneg %p113
        $region22: #{tpu_custom_call.1} parent=11 // pred_check_branch
          %285 = sbr.rel (%p283) target = $region24
        $region23: #{tpu_custom_call.1} parent=11 // pred_region
          %s287 = ssub.s32 1024, 1024
          %288 = vsyncadd [#allocation9], %s287
          %s289 = sshll.u32 [#allocation8], 4
          %s290 = int_to_ptr.vmem [resolvable:$true] %s289
          %295 = dma.hbm_to_vmem [thread:$0]  %s3, 1024, %s290, [#allocation9], 512, 512, 32
        $region24: #{tpu_custom_call.1} parent=11 // pred_fallthru
          _
        // Predicated region
        $region25: #{tpu_custom_call.1} parent=11 // pred_check
          %p296 = pneg %p134
        $region26: #{tpu_custom_call.1} parent=11 // pred_check_branch
          %298 = sbr.rel (%p296) target = $region28
        $region27: #{tpu_custom_call.1} parent=11 // pred_region
          _
        $region28: #{tpu_custom_call.1} parent=11 // pred_fallthru
          _
        // Predicated region
        $region29: #{tpu_custom_call.1} parent=11 // pred_check
          %p299 = pneg %p155
        $region30: #{tpu_custom_call.1} parent=11 // pred_check_branch
          %301 = sbr.rel (%p299) target = $region32
        $region31: #{tpu_custom_call.1} parent=11 // pred_region
          _
        $region32: #{tpu_custom_call.1} parent=11 // pred_fallthru
          _
        // Predicated region
        $region33: #{tpu_custom_call.1} parent=11 // pred_check
          %p302 = pneg %p176
        $region34: #{tpu_custom_call.1} parent=11 // pred_check_branch
          %304 = sbr.rel (%p302) target = $region36
        $region35: #{tpu_custom_call.1} parent=11 // pred_region
          %s306 = ssub.s32 64, 64
          %307 = vsyncadd [#allocation9], %s306
          %s309 = sshll.u32 [#allocation10], 4
          %s310 = int_to_ptr.vmem [resolvable:$true] %s309
          %312 = dma.hbm_to_vmem [thread:$0]  %s6, 64, %s310, [#allocation9]
        $region36: #{tpu_custom_call.1} parent=11 // pred_fallthru
          _
        // Predicated region
        $region37: #{tpu_custom_call.1} parent=11 // pred_check
          %p313 = pneg %p197
        $region38: #{tpu_custom_call.1} parent=11 // pred_check_branch
          %315 = sbr.rel (%p313) target = $region40
        $region39: #{tpu_custom_call.1} parent=11 // pred_region
          %s317 = ssub.s32 8192, 8192
          %318 = vsyncadd [#allocation12], %s317
          %s319 = sshll.u32 [#allocation11], 4
          %s320 = int_to_ptr.vmem [resolvable:$true] %s319
          %325 = dma.hbm_to_vmem [thread:$0]  %s7, 8192, %s320, [#allocation12], 128, 128, 8
        $region40: #{tpu_custom_call.1} parent=11 // pred_fallthru
          _
        // Predicated region
        $region41: #{tpu_custom_call.1} parent=11 // pred_check
          %p326 = pneg %p218
        $region42: #{tpu_custom_call.1} parent=11 // pred_check_branch
          %328 = sbr.rel (%p326) target = $region44
        $region43: #{tpu_custom_call.1} parent=11 // pred_region
          _
        $region44: #{tpu_custom_call.1} parent=11 // pred_fallthru
          _
      $region12: #{tpu_custom_call.1} parent=5 // pred_fallthru
        _
      %p329 = scmp.lt.s32.totalorder %s24, 2
      // Predicated region
      $region45: #{tpu_custom_call.1} parent=5 // pred_check
        %p330 = pneg %p329
      $region46: #{tpu_custom_call.1} parent=5 // pred_check_branch
        %332 = sbr.rel (%p330) target = $region48
      $region47: #{tpu_custom_call.1} parent=5 // pred_region
        // Predicated region
        $region49: #{tpu_custom_call.1} parent=47 // pred_check
          %p333 = pneg %p44
        $region50: #{tpu_custom_call.1} parent=47 // pred_check_branch
          %335 = sbr.rel (%p333) target = $region52
        $region51: #{tpu_custom_call.1} parent=47 // pred_region
          %s336 = sand.u32 %s34, 1
          %s337 = scalar_lea.sflag [#allocation3], %s336
          %s338 = sand.u32 %s34, 1
          %s339 = smul.addr %s338, 64
          %s340 = scalar_lea.vmem [#allocation2], %s339
          %s342 = ssub.s32 1024, 1024
          %343 = vsyncadd %s337, %s342
          %s344 = smul.addr %s24, 8
          %s345 = smul.addr %s344, 128
          %s346 = scalar_lea.hbm %s0, %s345
          %s347 = sshll.u32 %s340, 4
          %s348 = int_to_ptr.vmem [resolvable:$true] %s347
          %353 = dma.hbm_to_vmem [thread:$0]  %s346, 1024, %s348, %s337, 128, 128, 8
        $region52: #{tpu_custom_call.1} parent=47 // pred_fallthru
          _
      $region48: #{tpu_custom_call.1} parent=5 // pred_fallthru
        _
      %p354 = scmp.le.s32.totalorder 1, %s24
      %p355 = scmp.lt.s32.totalorder %s24, 3
      %p356 = pnand %p354, %p355
      %p357 = pneg %p356
      // Predicated region
      $region53: #{tpu_custom_call.1} parent=5 // pred_check
        _
      $region54: #{tpu_custom_call.1} parent=5 // pred_check_branch
        %359 = sbr.rel (%p356) target = $region56
      $region55: #{tpu_custom_call.1} parent=5 // pred_region
        %s360 = ssub.s32 %s24, 1
        %s361 = sand.u32 %s37, 1
        %s362 = scalar_lea.sflag [#allocation3], %s361
        %s363 = sand.u32 %s37, 1
        %s364 = smul.addr %s363, 64
        %s365 = scalar_lea.vmem [#allocation2], %s364
        // Predicated region
        $region57: #{tpu_custom_call.1} parent=55 // pred_check
          %p366 = pneg %p50
        $region58: #{tpu_custom_call.1} parent=55 // pred_check_branch
          %368 = sbr.rel (%p366) target = $region60
        $region59: #{tpu_custom_call.1} parent=55 // pred_region
          %369 = dma.done %s362, 1024
        $region60: #{tpu_custom_call.1} parent=55 // pred_fallthru
          _
        // Predicated region
        $region61: #{tpu_custom_call.1} parent=55 // pred_check
          %p370 = pneg %p71
        $region62: #{tpu_custom_call.1} parent=55 // pred_check_branch
          %372 = sbr.rel (%p370) target = $region64
        $region63: #{tpu_custom_call.1} parent=55 // pred_region
          %373 = dma.done [#allocation6], 8192
        $region64: #{tpu_custom_call.1} parent=55 // pred_fallthru
          _
        // Predicated region
        $region65: #{tpu_custom_call.1} parent=55 // pred_check
          %p374 = pneg %p92
        $region66: #{tpu_custom_call.1} parent=55 // pred_check_branch
          %376 = sbr.rel (%p374) target = $region68
        $region67: #{tpu_custom_call.1} parent=55 // pred_region
          %377 = dma.done [#allocation6], 64
        $region68: #{tpu_custom_call.1} parent=55 // pred_fallthru
          _
        // Predicated region
        $region69: #{tpu_custom_call.1} parent=55 // pred_check
          %p378 = pneg %p113
        $region70: #{tpu_custom_call.1} parent=55 // pred_check_branch
          %380 = sbr.rel (%p378) target = $region72
        $region71: #{tpu_custom_call.1} parent=55 // pred_region
          %381 = dma.done [#allocation9], 1024
        $region72: #{tpu_custom_call.1} parent=55 // pred_fallthru
          _
        // Predicated region
        $region73: #{tpu_custom_call.1} parent=55 // pred_check
          %p382 = pneg %p176
        $region74: #{tpu_custom_call.1} parent=55 // pred_check_branch
          %384 = sbr.rel (%p382) target = $region76
        $region75: #{tpu_custom_call.1} parent=55 // pred_region
          %385 = dma.done [#allocation9], 64
        $region76: #{tpu_custom_call.1} parent=55 // pred_fallthru
          _
        // Predicated region
        $region77: #{tpu_custom_call.1} parent=55 // pred_check
          %p386 = pneg %p197
        $region78: #{tpu_custom_call.1} parent=55 // pred_check_branch
          %388 = sbr.rel (%p386) target = $region80
        $region79: #{tpu_custom_call.1} parent=55 // pred_region
          %389 = dma.done [#allocation12], 8192
        $region80: #{tpu_custom_call.1} parent=55 // pred_fallthru
          _
        %s390 = sand.u32 %s37, 1
        %s391 = scalar_lea.sflag [#allocation3], %s390
        %s392 = sand.u32 %s37, 1
        %s393 = smul.addr %s392, 64
        %s394 = scalar_lea.vmem [#allocation2], %s393
        %p395 = pneg %p50
        %p396 = pneg %p47
        %p397 = pneg %p71
        %p398 = pneg %p68
        %p399 = pneg %p92
        %p400 = pneg %p89
        %p401 = pneg %p113
        %p402 = pneg %p110
        %p403 = pneg %p134
        %p404 = pneg %p131
        %p405 = pneg %p155
        %p406 = pneg %p152
        %p407 = pneg %p176
        %p408 = pneg %p173
        %p409 = pneg %p197
        %p410 = pneg %p194
        %p411 = pneg %p218
        %p412 = pneg %p215
        %p413 = pneg %p244
        %p414 = pneg %p241
        %s415 = sand.u32 %s231, 1
        %s416 = scalar_lea.sflag [#allocation4], %s415
        %s417 = sand.u32 %s231, 1
        %s418 = smul.addr %s417, 64
        %s419 = scalar_lea.vmem [#allocation13], %s418
        %v420 = vld [vmem:[%s365] sm:$0xff]
        %v421 = vld [vmem:[%s365 + $0x8] sm:$0xff]
        %v422 = vld [vmem:[%s365 + $0x10] sm:$0xff]
        %v423 = vld [vmem:[%s365 + $0x18] sm:$0xff]
        %v424 = vld [vmem:[%s365 + $0x20] sm:$0xff]
        %v425 = vld [vmem:[%s365 + $0x28] sm:$0xff]
        %v426 = vld [vmem:[%s365 + $0x30] sm:$0xff]
        %v427 = vld [vmem:[%s365 + $0x38] sm:$0xff]
        %v428 = vld [vmem:[#allocation5] sm:$0xff]
        %v429 = vld [vmem:[#allocation5 + $0x8] sm:$0xff]
        %v430 = vld [vmem:[#allocation5 + $0x10] sm:$0xff]
        %v431 = vld [vmem:[#allocation5 + $0x18] sm:$0xff]
        %v432 = vld [vmem:[#allocation5 + $0x20] sm:$0xff]
        %v433 = vld [vmem:[#allocation5 + $0x28] sm:$0xff]
        %v434 = vld [vmem:[#allocation5 + $0x30] sm:$0xff]
        %v435 = vld [vmem:[#allocation5 + $0x38] sm:$0xff]
        %v436 = vld [vmem:[#allocation5 + $0x40] sm:$0xff]
        %v437 = vld [vmem:[#allocation5 + $0x48] sm:$0xff]
        %v438 = vld [vmem:[#allocation5 + $0x50] sm:$0xff]
        %v439 = vld [vmem:[#allocation5 + $0x58] sm:$0xff]
        %v440 = vld [vmem:[#allocation5 + $0x60] sm:$0xff]
        %v441 = vld [vmem:[#allocation5 + $0x68] sm:$0xff]
        %v442 = vld [vmem:[#allocation5 + $0x70] sm:$0xff]
        %v443 = vld [vmem:[#allocation5 + $0x78] sm:$0xff]
        %v444 = vld [vmem:[#allocation5 + $0x80] sm:$0xff]
        %v445 = vld [vmem:[#allocation5 + $0x88] sm:$0xff]
        %v446 = vld [vmem:[#allocation5 + $0x90] sm:$0xff]
        %v447 = vld [vmem:[#allocation5 + $0x98] sm:$0xff]
        %v448 = vld [vmem:[#allocation5 + $0xa0] sm:$0xff]
        %v449 = vld [vmem:[#allocation5 + $0xa8] sm:$0xff]
        %v450 = vld [vmem:[#allocation5 + $0xb0] sm:$0xff]
        %v451 = vld [vmem:[#allocation5 + $0xb8] sm:$0xff]
        %v452 = vld [vmem:[#allocation5 + $0xc0] sm:$0xff]
        %v453 = vld [vmem:[#allocation5 + $0xc8] sm:$0xff]
        %v454 = vld [vmem:[#allocation5 + $0xd0] sm:$0xff]
        %v455 = vld [vmem:[#allocation5 + $0xd8] sm:$0xff]
        %v456 = vld [vmem:[#allocation5 + $0xe0] sm:$0xff]
        %v457 = vld [vmem:[#allocation5 + $0xe8] sm:$0xff]
        %v458 = vld [vmem:[#allocation5 + $0xf0] sm:$0xff]
        %v459 = vld [vmem:[#allocation5 + $0xf8] sm:$0xff]
        %v460 = vld [vmem:[#allocation5 + $0x100] sm:$0xff]
        %v461 = vld [vmem:[#allocation5 + $0x108] sm:$0xff]
        %v462 = vld [vmem:[#allocation5 + $0x110] sm:$0xff]
        %v463 = vld [vmem:[#allocation5 + $0x118] sm:$0xff]
        %v464 = vld [vmem:[#allocation5 + $0x120] sm:$0xff]
        %v465 = vld [vmem:[#allocation5 + $0x128] sm:$0xff]
        %v466 = vld [vmem:[#allocation5 + $0x130] sm:$0xff]
        %v467 = vld [vmem:[#allocation5 + $0x138] sm:$0xff]
        %v468 = vld [vmem:[#allocation5 + $0x140] sm:$0xff]
        %v469 = vld [vmem:[#allocation5 + $0x148] sm:$0xff]
        %v470 = vld [vmem:[#allocation5 + $0x150] sm:$0xff]
        %v471 = vld [vmem:[#allocation5 + $0x158] sm:$0xff]
        %v472 = vld [vmem:[#allocation5 + $0x160] sm:$0xff]
        %v473 = vld [vmem:[#allocation5 + $0x168] sm:$0xff]
        %v474 = vld [vmem:[#allocation5 + $0x170] sm:$0xff]
        %v475 = vld [vmem:[#allocation5 + $0x178] sm:$0xff]
        %v476 = vld [vmem:[#allocation5 + $0x180] sm:$0xff]
        %v477 = vld [vmem:[#allocation5 + $0x188] sm:$0xff]
        %v478 = vld [vmem:[#allocation5 + $0x190] sm:$0xff]
        %v479 = vld [vmem:[#allocation5 + $0x198] sm:$0xff]
        %v480 = vld [vmem:[#allocation5 + $0x1a0] sm:$0xff]
        %v481 = vld [vmem:[#allocation5 + $0x1a8] sm:$0xff]
        %v482 = vld [vmem:[#allocation5 + $0x1b0] sm:$0xff]
        %v483 = vld [vmem:[#allocation5 + $0x1b8] sm:$0xff]
        %v484 = vld [vmem:[#allocation5 + $0x1c0] sm:$0xff]
        %v485 = vld [vmem:[#allocation5 + $0x1c8] sm:$0xff]
        %v486 = vld [vmem:[#allocation5 + $0x1d0] sm:$0xff]
        %v487 = vld [vmem:[#allocation5 + $0x1d8] sm:$0xff]
        %v488 = vld [vmem:[#allocation5 + $0x1e0] sm:$0xff]
        %v489 = vld [vmem:[#allocation5 + $0x1e8] sm:$0xff]
        %v490 = vld [vmem:[#allocation5 + $0x1f0] sm:$0xff]
        %v491 = vld [vmem:[#allocation5 + $0x1f8] sm:$0xff]
        %v492 = vld [vmem:[#allocation7] sm:$0xf]
        %v494 = vlaneseq
        %v495 = vshrl.u32 %v494, 7
        %v496 = vsub.s32 0, %v495
        %v497 = vrot.slane %v492, %v496
        %v498 = vlaneseq
        %v499 = vshrl.u32 %v498, 7
        %v500 = vsub.s32 1, %v499
        %v501 = vrot.slane %v492, %v500
        %v502 = vlaneseq
        %v503 = vshrl.u32 %v502, 7
        %v504 = vsub.s32 2, %v503
        %v505 = vrot.slane %v492, %v504
        %v506 = vlaneseq
        %v507 = vshrl.u32 %v506, 7
        %v508 = vsub.s32 3, %v507
        %v509 = vrot.slane %v492, %v508
        %514 = vmatprep.subr.mxu0 %v489
        %515 = vmatpush1.msra.mxu0 %v488
        %516 = vmatprep.subr.mxu0 %v485
        %517 = vmatpush1.msra.mxu0 %v484
        %518 = vmatprep.subr.mxu0 %v481
        %519 = vmatpush1.msra.mxu0 %v480
        %520 = vmatprep.subr.mxu0 %v477
        %521 = vmatpush1.msra.mxu0 %v476
        %522 = vmatprep.subr.mxu0 %v473
        %523 = vmatpush1.msra.mxu0 %v472
        %524 = vmatprep.subr.mxu0 %v469
        %525 = vmatpush1.msra.mxu0 %v468
        %526 = vmatprep.subr.mxu0 %v465
        %527 = vmatpush1.msra.mxu0 %v464
        %528 = vmatprep.subr.mxu0 %v461
        %529 = vmatpush1.msra.mxu0 %v460
        %530 = vmatprep.subr.mxu0 %v457
        %531 = vmatpush1.msra.mxu0 %v456
        %532 = vmatprep.subr.mxu0 %v453
        %533 = vmatpush1.msra.mxu0 %v452
        %534 = vmatprep.subr.mxu0 %v449
        %535 = vmatpush1.msra.mxu0 %v448
        %536 = vmatprep.subr.mxu0 %v445
        %537 = vmatpush1.msra.mxu0 %v444
        %538 = vmatprep.subr.mxu0 %v441
        %539 = vmatpush1.msra.mxu0 %v440
        %540 = vmatprep.subr.mxu0 %v437
        %541 = vmatpush1.msra.mxu0 %v436
        %542 = vmatprep.subr.mxu0 %v433
        %543 = vmatpush1.msra.mxu0 %v432
        %544 = vmatprep.subr.mxu0 %v429
        %545 = vmatpush1.msra.mxu0 %v428
        %546 = vmatprep.subr.mxu0 0.0
        %547 = vmatpush2.msra.mxu0 0.0
        %548 = vmatprep.subr.mxu0 0.0
        %549 = vmatpush2.msra.mxu0 0.0
        %550 = vmatprep.subr.mxu0 0.0
        %551 = vmatpush2.msra.mxu0 0.0
        %552 = vmatprep.subr.mxu0 0.0
        %553 = vmatpush2.msra.mxu0 0.0
        %554 = vmatprep.subr.mxu0 0.0
        %555 = vmatpush2.msra.mxu0 0.0
        %556 = vmatprep.subr.mxu0 0.0
        %557 = vmatpush2.msra.mxu0 0.0
        %558 = vmatprep.subr.mxu0 0.0
        %559 = vmatpush2.msra.mxu0 0.0
        %560 = vmatprep.subr.mxu0 0.0
        %561 = vmatpush2.msra.mxu0 0.0
        %562 = vmatprep.subr.mxu0 0.0
        %563 = vmatpush2.msra.mxu0 0.0
        %564 = vmatprep.subr.mxu0 0.0
        %565 = vmatpush2.msra.mxu0 0.0
        %566 = vmatprep.subr.mxu0 0.0
        %567 = vmatpush2.msra.mxu0 0.0
        %568 = vmatprep.subr.mxu0 0.0
        %569 = vmatpush2.msra.mxu0 0.0
        %570 = vmatprep.subr.mxu0 0.0
        %571 = vmatpush2.msra.mxu0 0.0
        %572 = vmatprep.subr.mxu0 0.0
        %573 = vmatpush2.msra.mxu0 0.0
        %574 = vmatprep.subr.mxu0 0.0
        %575 = vmatpush2.msra.mxu0 0.0
        %576 = vmatprep.subr.mxu0 0.0
        %577 = vmatpush2.msra.mxu0 0.0
        %578 = vmatprep.mubr.f32.mxu0 0.0
        %579 = vmatmul.mubr.f32.gmra.mxu0 %v420
        %v580 = vpop.f32.mrf.mxu0
        %v581 = vadd.f32 %v497, %v580
        %v582 = vpop.f32.mrf.mxu0
        %v583 = vadd.f32 %v501, %v582
        %584 = vmatprep.mubr.f32.mxu0 0.0
        %585 = vmatmul.mubr.f32.gmra.mxu0 %v421
        %v586 = vpop.f32.mrf.mxu0
        %v587 = vadd.f32 %v497, %v586
        %v588 = vpop.f32.mrf.mxu0
        %v589 = vadd.f32 %v501, %v588
        %590 = vmatprep.mubr.f32.mxu0 0.0
        %591 = vmatmul.mubr.f32.gmra.mxu0 %v422
        %v592 = vpop.f32.mrf.mxu0
        %v593 = vadd.f32 %v497, %v592
        %v594 = vpop.f32.mrf.mxu0
        %v595 = vadd.f32 %v501, %v594
        %596 = vmatprep.mubr.f32.mxu0 0.0
        %597 = vmatmul.mubr.f32.gmra.mxu0 %v423
        %v598 = vpop.f32.mrf.mxu0
        %v599 = vadd.f32 %v497, %v598
        %v600 = vpop.f32.mrf.mxu0
        %v601 = vadd.f32 %v501, %v600
        %602 = vmatprep.mubr.f32.mxu0 0.0
        %603 = vmatmul.mubr.f32.gmra.mxu0 %v424
        %v604 = vpop.f32.mrf.mxu0
        %v605 = vadd.f32 %v497, %v604
        %v606 = vpop.f32.mrf.mxu0
        %v607 = vadd.f32 %v501, %v606
        %608 = vmatprep.mubr.f32.mxu0 0.0
        %609 = vmatmul.mubr.f32.gmra.mxu0 %v425
        %v610 = vpop.f32.mrf.mxu0
        %v611 = vadd.f32 %v497, %v610
        %v612 = vpop.f32.mrf.mxu0
        %v613 = vadd.f32 %v501, %v612
        %614 = vmatprep.mubr.f32.mxu0 0.0
        %615 = vmatmul.mubr.f32.gmra.mxu0 %v426
        %v616 = vpop.f32.mrf.mxu0
        %v617 = vadd.f32 %v497, %v616
        %v618 = vpop.f32.mrf.mxu0
        %v619 = vadd.f32 %v501, %v618
        %620 = vmatprep.mubr.f32.mxu0 0.0
        %621 = vmatmul.mubr.f32.gmra.mxu0 %v427
        %v622 = vpop.f32.mrf.mxu0
        %v623 = vadd.f32 %v497, %v622
        %v624 = vpop.f32.mrf.mxu0
        %v625 = vadd.f32 %v501, %v624
        %626 = vdwg.mxu0
        %627 = vmatprep.subr.mxu0 %v491
        %628 = vmatpush1.msra.mxu0 %v490
        %629 = vmatprep.subr.mxu0 %v487
        %630 = vmatpush1.msra.mxu0 %v486
        %631 = vmatprep.subr.mxu0 %v483
        %632 = vmatpush1.msra.mxu0 %v482
        %633 = vmatprep.subr.mxu0 %v479
        %634 = vmatpush1.msra.mxu0 %v478
        %635 = vmatprep.subr.mxu0 %v475
        %636 = vmatpush1.msra.mxu0 %v474
        %637 = vmatprep.subr.mxu0 %v471
        %638 = vmatpush1.msra.mxu0 %v470
        %639 = vmatprep.subr.mxu0 %v467
        %640 = vmatpush1.msra.mxu0 %v466
        %641 = vmatprep.subr.mxu0 %v463
        %642 = vmatpush1.msra.mxu0 %v462
        %643 = vmatprep.subr.mxu0 %v459
        %644 = vmatpush1.msra.mxu0 %v458
        %645 = vmatprep.subr.mxu0 %v455
        %646 = vmatpush1.msra.mxu0 %v454
        %647 = vmatprep.subr.mxu0 %v451
        %648 = vmatpush1.msra.mxu0 %v450
        %649 = vmatprep.subr.mxu0 %v447
        %650 = vmatpush1.msra.mxu0 %v446
        %651 = vmatprep.subr.mxu0 %v443
        %652 = vmatpush1.msra.mxu0 %v442
        %653 = vmatprep.subr.mxu0 %v439
        %654 = vmatpush1.msra.mxu0 %v438
        %655 = vmatprep.subr.mxu0 %v435
        %656 = vmatpush1.msra.mxu0 %v434
        %657 = vmatprep.subr.mxu0 %v431
        %658 = vmatpush1.msra.mxu0 %v430
        %659 = vmatprep.subr.mxu0 0.0
        %660 = vmatpush2.msra.mxu0 0.0
        %661 = vmatprep.subr.mxu0 0.0
        %662 = vmatpush2.msra.mxu0 0.0
        %663 = vmatprep.subr.mxu0 0.0
        %664 = vmatpush2.msra.mxu0 0.0
        %665 = vmatprep.subr.mxu0 0.0
        %666 = vmatpush2.msra.mxu0 0.0
        %667 = vmatprep.subr.mxu0 0.0
        %668 = vmatpush2.msra.mxu0 0.0
        %669 = vmatprep.subr.mxu0 0.0
        %670 = vmatpush2.msra.mxu0 0.0
        %671 = vmatprep.subr.mxu0 0.0
        %672 = vmatpush2.msra.mxu0 0.0
        %673 = vmatprep.subr.mxu0 0.0
        %674 = vmatpush2.msra.mxu0 0.0
        %675 = vmatprep.subr.mxu0 0.0
        %676 = vmatpush2.msra.mxu0 0.0
        %677 = vmatprep.subr.mxu0 0.0
        %678 = vmatpush2.msra.mxu0 0.0
        %679 = vmatprep.subr.mxu0 0.0
        %680 = vmatpush2.msra.mxu0 0.0
        %681 = vmatprep.subr.mxu0 0.0
        %682 = vmatpush2.msra.mxu0 0.0
        %683 = vmatprep.subr.mxu0 0.0
        %684 = vmatpush2.msra.mxu0 0.0
        %685 = vmatprep.subr.mxu0 0.0
        %686 = vmatpush2.msra.mxu0 0.0
        %687 = vmatprep.subr.mxu0 0.0
        %688 = vmatpush2.msra.mxu0 0.0
        %689 = vmatprep.subr.mxu0 0.0
        %690 = vmatpush2.msra.mxu0 0.0
        %691 = vmatprep.mubr.f32.mxu0 0.0
        %692 = vmatmul.mubr.f32.gmra.mxu0 %v420
        %v693 = vpop.f32.mrf.mxu0
        %v694 = vadd.f32 %v505, %v693
        %v695 = vpop.f32.mrf.mxu0
        %v696 = vadd.f32 %v509, %v695
        %697 = vmatprep.mubr.f32.mxu0 0.0
        %698 = vmatmul.mubr.f32.gmra.mxu0 %v421
        %v699 = vpop.f32.mrf.mxu0
        %v700 = vadd.f32 %v505, %v699
        %v701 = vpop.f32.mrf.mxu0
        %v702 = vadd.f32 %v509, %v701
        %703 = vmatprep.mubr.f32.mxu0 0.0
        %704 = vmatmul.mubr.f32.gmra.mxu0 %v422
        %v705 = vpop.f32.mrf.mxu0
        %v706 = vadd.f32 %v505, %v705
        %v707 = vpop.f32.mrf.mxu0
        %v708 = vadd.f32 %v509, %v707
        %709 = vmatprep.mubr.f32.mxu0 0.0
        %710 = vmatmul.mubr.f32.gmra.mxu0 %v423
        %v711 = vpop.f32.mrf.mxu0
        %v712 = vadd.f32 %v505, %v711
        %v713 = vpop.f32.mrf.mxu0
        %v714 = vadd.f32 %v509, %v713
        %715 = vmatprep.mubr.f32.mxu0 0.0
        %716 = vmatmul.mubr.f32.gmra.mxu0 %v424
        %v717 = vpop.f32.mrf.mxu0
        %v718 = vadd.f32 %v505, %v717
        %v719 = vpop.f32.mrf.mxu0
        %v720 = vadd.f32 %v509, %v719
        %721 = vmatprep.mubr.f32.mxu0 0.0
        %722 = vmatmul.mubr.f32.gmra.mxu0 %v425
        %v723 = vpop.f32.mrf.mxu0
        %v724 = vadd.f32 %v505, %v723
        %v725 = vpop.f32.mrf.mxu0
        %v726 = vadd.f32 %v509, %v725
        %727 = vmatprep.mubr.f32.mxu0 0.0
        %728 = vmatmul.mubr.f32.gmra.mxu0 %v426
        %v729 = vpop.f32.mrf.mxu0
        %v730 = vadd.f32 %v505, %v729
        %v731 = vpop.f32.mrf.mxu0
        %v732 = vadd.f32 %v509, %v731
        %733 = vmatprep.mubr.f32.mxu0 0.0
        %734 = vmatmul.mubr.f32.gmra.mxu0 %v427
        %v735 = vpop.f32.mrf.mxu0
        %v736 = vadd.f32 %v505, %v735
        %v737 = vpop.f32.mrf.mxu0
        %v738 = vadd.f32 %v509, %v737
        %739 = vdwg.mxu0
        %v740 = vld [vmem:[#allocation8] sm:$0xff]
        %v741 = vld [vmem:[#allocation8 + $0x8] sm:$0xff]
        %v742 = vld [vmem:[#allocation8 + $0x10] sm:$0xff]
        %v743 = vld [vmem:[#allocation8 + $0x18] sm:$0xff]
        %v744 = vld [vmem:[#allocation8 + $0x20] sm:$0x1]
        %v745 = vld [vmem:[#allocation8 + $0x28] sm:$0x1]
        %v746 = vld [vmem:[#allocation8 + $0x30] sm:$0x1]
        %v747 = vld [vmem:[#allocation8 + $0x38] sm:$0x1]
        %v748 = vlaneseq
        %v749 = vshrl.u32 %v748, 7
        %v750 = vadd.s32 %v749, 8
        %v751 = vadd.s32 %v749, 16
        %v752 = vadd.s32 %v749, 24
        %v753 = vadd.s32 %v749, 32
        %v754 = vadd.s32 %v749, 40
        %v755 = vadd.s32 %v749, 48
        %v756 = vadd.s32 %v749, 56
        %vm757 = vcmp.lt.s32.totalorder %v749, 0
        %v758 = vsub.s32 0, %v749
        %v759 = vsel %vm757, %v758, %v749
        %v760 = vshrl.u32 %v759, 3
        %v761 = vand.u32 %v759, 7
        %v762 = vsub.s32 0, %v761
        %v763 = vsel %vm757, %v762, %v761
        %vm764 = vcmp.lt.s32.totalorder %v750, 0
        %v765 = vsub.s32 0, %v750
        %v766 = vsel %vm764, %v765, %v750
        %v767 = vshrl.u32 %v766, 3
        %v768 = vand.u32 %v766, 7
        %v769 = vsub.s32 0, %v768
        %v770 = vsel %vm764, %v769, %v768
        %vm771 = vcmp.lt.s32.totalorder %v751, 0
        %v772 = vsub.s32 0, %v751
        %v773 = vsel %vm771, %v772, %v751
        %v774 = vshrl.u32 %v773, 3
        %v775 = vand.u32 %v773, 7
        %v776 = vsub.s32 0, %v775
        %v777 = vsel %vm771, %v776, %v775
        %vm778 = vcmp.lt.s32.totalorder %v752, 0
        %v779 = vsub.s32 0, %v752
        %v780 = vsel %vm778, %v779, %v752
        %v781 = vshrl.u32 %v780, 3
        %v782 = vand.u32 %v780, 7
        %v783 = vsub.s32 0, %v782
        %v784 = vsel %vm778, %v783, %v782
        %vm785 = vcmp.lt.s32.totalorder %v753, 0
        %v786 = vsub.s32 0, %v753
        %v787 = vsel %vm785, %v786, %v753
        %v788 = vshrl.u32 %v787, 3
        %v789 = vand.u32 %v787, 7
        %v790 = vsub.s32 0, %v789
        %v791 = vsel %vm785, %v790, %v789
        %vm792 = vcmp.lt.s32.totalorder %v754, 0
        %v793 = vsub.s32 0, %v754
        %v794 = vsel %vm792, %v793, %v754
        %v795 = vshrl.u32 %v794, 3
        %v796 = vand.u32 %v794, 7
        %v797 = vsub.s32 0, %v796
        %v798 = vsel %vm792, %v797, %v796
        %vm799 = vcmp.lt.s32.totalorder %v755, 0
        %v800 = vsub.s32 0, %v755
        %v801 = vsel %vm799, %v800, %v755
        %v802 = vshrl.u32 %v801, 3
        %v803 = vand.u32 %v801, 7
        %v804 = vsub.s32 0, %v803
        %v805 = vsel %vm799, %v804, %v803
        %vm806 = vcmp.lt.s32.totalorder %v756, 0
        %v807 = vsub.s32 0, %v756
        %v808 = vsel %vm806, %v807, %v756
        %v809 = vshrl.u32 %v808, 3
        %v810 = vand.u32 %v808, 7
        %v811 = vsub.s32 0, %v810
        %v812 = vsel %vm806, %v811, %v810
        %vm813 = vcmp.ne.s32.totalorder %v763, 0
        %vm814 = vcmp.ne.s32.totalorder %v770, 0
        %vm815 = vcmp.ne.s32.totalorder %v777, 0
        %vm816 = vcmp.ne.s32.totalorder %v784, 0
        %vm817 = vcmp.ne.s32.totalorder %v791, 0
        %vm818 = vcmp.ne.s32.totalorder %v798, 0
        %vm819 = vcmp.ne.s32.totalorder %v805, 0
        %vm820 = vcmp.ne.s32.totalorder %v812, 0
        %vm821 = vcmp.lt.s32.totalorder %v763, 0
        %vm822 = vcmp.lt.s32.totalorder %v770, 0
        %vm823 = vcmp.lt.s32.totalorder %v777, 0
        %vm824 = vcmp.lt.s32.totalorder %v784, 0
        %vm825 = vcmp.lt.s32.totalorder %v791, 0
        %vm826 = vcmp.lt.s32.totalorder %v798, 0
        %vm827 = vcmp.lt.s32.totalorder %v805, 0
        %vm828 = vcmp.lt.s32.totalorder %v812, 0
        %vm829 = vmand %vm821, %vm813
        %vm830 = vmand %vm822, %vm814
        %vm831 = vmand %vm823, %vm815
        %vm832 = vmand %vm824, %vm816
        %vm833 = vmand %vm825, %vm817
        %vm834 = vmand %vm826, %vm818
        %vm835 = vmand %vm827, %vm819
        %vm836 = vmand %vm828, %vm820
        %v837 = vadd.s32 %v763, 8
        %v838 = vadd.s32 %v770, 8
        %v839 = vadd.s32 %v777, 8
        %v840 = vadd.s32 %v784, 8
        %v841 = vadd.s32 %v791, 8
        %v842 = vadd.s32 %v798, 8
        %v843 = vadd.s32 %v805, 8
        %v844 = vadd.s32 %v812, 8
        %v845 = vsel %vm829, %v837, %v763
        %v846 = vsel %vm830, %v838, %v770
        %v847 = vsel %vm831, %v839, %v777
        %v848 = vsel %vm832, %v840, %v784
        %v849 = vsel %vm833, %v841, %v791
        %v850 = vsel %vm834, %v842, %v798
        %v851 = vsel %vm835, %v843, %v805
        %v852 = vsel %vm836, %v844, %v812
        %vm853 = vcmp.ge.s32.totalorder %v845, 1
        %vm854 = vcmp.ge.s32.totalorder %v846, 1
        %vm855 = vcmp.ge.s32.totalorder %v847, 1
        %vm856 = vcmp.ge.s32.totalorder %v848, 1
        %vm857 = vcmp.ge.s32.totalorder %v849, 1
        %vm858 = vcmp.ge.s32.totalorder %v850, 1
        %vm859 = vcmp.ge.s32.totalorder %v851, 1
        %vm860 = vcmp.ge.s32.totalorder %v852, 1
        %vm861 = vcmp.le.s32.totalorder %v845, 6
        %vm862 = vcmp.le.s32.totalorder %v846, 6
        %vm863 = vcmp.le.s32.totalorder %v847, 6
        %vm864 = vcmp.le.s32.totalorder %v848, 6
        %vm865 = vcmp.le.s32.totalorder %v849, 6
        %vm866 = vcmp.le.s32.totalorder %v850, 6
        %vm867 = vcmp.le.s32.totalorder %v851, 6
        %vm868 = vcmp.le.s32.totalorder %v852, 6
        %vm897 = vcmask 1040384
        %v898 = vrot.slane %v581, 7
        %v899 = vrot.slane %v583, 7
        %v900 = vrot.slane %v694, 7
        %v901 = vrot.slane %v696, 7
        %v902 = vrot.slane %v587, 7
        %v903 = vsel %vm897, %v898, %v902
        %v904 = vrot.slane %v589, 7
        %v905 = vsel %vm897, %v899, %v904
        %v906 = vrot.slane %v700, 7
        %v907 = vsel %vm897, %v900, %v906
        %v908 = vrot.slane %v702, 7
        %v909 = vsel %vm897, %v901, %v908
        %v910 = vrot.slane %v593, 7
        %v911 = vsel %vm897, %v902, %v910
        %v912 = vrot.slane %v595, 7
        %v913 = vsel %vm897, %v904, %v912
        %v914 = vrot.slane %v706, 7
        %v915 = vsel %vm897, %v906, %v914
        %v916 = vrot.slane %v708, 7
        %v917 = vsel %vm897, %v908, %v916
        %v918 = vrot.slane %v599, 7
        %v919 = vsel %vm897, %v910, %v918
        %v920 = vrot.slane %v601, 7
        %v921 = vsel %vm897, %v912, %v920
        %v922 = vrot.slane %v712, 7
        %v923 = vsel %vm897, %v914, %v922
        %v924 = vrot.slane %v714, 7
        %v925 = vsel %vm897, %v916, %v924
        %v926 = vrot.slane %v605, 7
        %v927 = vsel %vm897, %v918, %v926
        %v928 = vrot.slane %v607, 7
        %v929 = vsel %vm897, %v920, %v928
        %v930 = vrot.slane %v718, 7
        %v931 = vsel %vm897, %v922, %v930
        %v932 = vrot.slane %v720, 7
        %v933 = vsel %vm897, %v924, %v932
        %v934 = vrot.slane %v611, 7
        %v935 = vsel %vm897, %v926, %v934
        %v936 = vrot.slane %v613, 7
        %v937 = vsel %vm897, %v928, %v936
        %v938 = vrot.slane %v724, 7
        %v939 = vsel %vm897, %v930, %v938
        %v940 = vrot.slane %v726, 7
        %v941 = vsel %vm897, %v932, %v940
        %v942 = vrot.slane %v617, 7
        %v943 = vsel %vm897, %v934, %v942
        %v944 = vrot.slane %v619, 7
        %v945 = vsel %vm897, %v936, %v944
        %v946 = vrot.slane %v730, 7
        %v947 = vsel %vm897, %v938, %v946
        %v948 = vrot.slane %v732, 7
        %v949 = vsel %vm897, %v940, %v948
        %v978 = vsel %vm897, 0.0, %v898
        %v979 = vsel %vm897, 0.0, %v899
        %v980 = vsel %vm897, 0.0, %v900
        %v981 = vsel %vm897, 0.0, %v901
        %v982 = vsel %vm853, 1, 0
        %v983 = vsel %vm854, 1, 0
        %v984 = vsel %vm855, 1, 0
        %v985 = vsel %vm856, 1, 0
        %v986 = vsel %vm857, 1, 0
        %v987 = vsel %vm858, 1, 0
        %v988 = vsel %vm859, 1, 0
        %v989 = vsel %vm860, 1, 0
        %vm990 = vcmp.eq.s32.totalorder %v982, 1
        %vm991 = vcmp.eq.s32.totalorder %v983, 1
        %vm992 = vcmp.eq.s32.totalorder %v984, 1
        %vm993 = vcmp.eq.s32.totalorder %v985, 1
        %vm994 = vcmp.eq.s32.totalorder %v986, 1
        %vm995 = vcmp.eq.s32.totalorder %v987, 1
        %vm996 = vcmp.eq.s32.totalorder %v988, 1
        %vm997 = vcmp.eq.s32.totalorder %v989, 1
        %v998 = vsel %vm991, %v978, 0.0
        %v999 = vsel %vm991, %v979, 0.0
        %v1000 = vsel %vm991, %v980, 0.0
        %v1001 = vsel %vm991, %v981, 0.0
        %v1002 = vsel %vm992, %v903, 0.0
        %v1003 = vsel %vm992, %v905, 0.0
        %v1004 = vsel %vm992, %v907, 0.0
        %v1005 = vsel %vm992, %v909, 0.0
        %v1006 = vsel %vm993, %v911, 0.0
        %v1007 = vsel %vm993, %v913, 0.0
        %v1008 = vsel %vm993, %v915, 0.0
        %v1009 = vsel %vm993, %v917, 0.0
        %v1010 = vsel %vm994, %v919, 0.0
        %v1011 = vsel %vm994, %v921, 0.0
        %v1012 = vsel %vm994, %v923, 0.0
        %v1013 = vsel %vm994, %v925, 0.0
        %v1014 = vsel %vm995, %v927, 0.0
        %v1015 = vsel %vm995, %v929, 0.0
        %v1016 = vsel %vm995, %v931, 0.0
        %v1017 = vsel %vm995, %v933, 0.0
        %v1018 = vsel %vm996, %v935, 0.0
        %v1019 = vsel %vm996, %v937, 0.0
        %v1020 = vsel %vm996, %v939, 0.0
        %v1021 = vsel %vm996, %v941, 0.0
        %v1022 = vsel %vm997, %v943, 0.0
        %v1023 = vsel %vm997, %v945, 0.0
        %v1024 = vsel %vm997, %v947, 0.0
        %v1025 = vsel %vm997, %v949, 0.0
        %v1026 = vlaneseq
        %v1027 = vshrl.u32 %v1026, 7
        %v1028 = vsub.s32 0, %v1027
        %v1029 = vrot.slane %v740, %v1028
        %v1030 = vlaneseq
        %v1031 = vshrl.u32 %v1030, 7
        %v1032 = vsub.s32 0, %v1031
        %v1033 = vrot.slane %v741, %v1032
        %v1034 = vlaneseq
        %v1035 = vshrl.u32 %v1034, 7
        %v1036 = vsub.s32 0, %v1035
        %v1037 = vrot.slane %v742, %v1036
        %v1038 = vlaneseq
        %v1039 = vshrl.u32 %v1038, 7
        %v1040 = vsub.s32 0, %v1039
        %v1041 = vrot.slane %v743, %v1040
        %v1042 = vmul.f32 %v1029, 0.0
        %v1043 = vmul.f32 %v1033, 0.0
        %v1044 = vmul.f32 %v1037, 0.0
        %v1045 = vmul.f32 %v1041, 0.0
        %v1046 = vmul.f32 %v1029, %v998
        %v1047 = vmul.f32 %v1033, %v999
        %v1048 = vmul.f32 %v1037, %v1000
        %v1049 = vmul.f32 %v1041, %v1001
        %v1050 = vmul.f32 %v1029, %v1002
        %v1051 = vmul.f32 %v1033, %v1003
        %v1052 = vmul.f32 %v1037, %v1004
        %v1053 = vmul.f32 %v1041, %v1005
        %v1054 = vmul.f32 %v1029, %v1006
        %v1055 = vmul.f32 %v1033, %v1007
        %v1056 = vmul.f32 %v1037, %v1008
        %v1057 = vmul.f32 %v1041, %v1009
        %v1058 = vmul.f32 %v1029, %v1010
        %v1059 = vmul.f32 %v1033, %v1011
        %v1060 = vmul.f32 %v1037, %v1012
        %v1061 = vmul.f32 %v1041, %v1013
        %v1062 = vmul.f32 %v1029, %v1014
        %v1063 = vmul.f32 %v1033, %v1015
        %v1064 = vmul.f32 %v1037, %v1016
        %v1065 = vmul.f32 %v1041, %v1017
        %v1066 = vmul.f32 %v1029, %v1018
        %v1067 = vmul.f32 %v1033, %v1019
        %v1068 = vmul.f32 %v1037, %v1020
        %v1069 = vmul.f32 %v1041, %v1021
        %v1070 = vmul.f32 %v1029, %v1022
        %v1071 = vmul.f32 %v1033, %v1023
        %v1072 = vmul.f32 %v1037, %v1024
        %v1073 = vmul.f32 %v1041, %v1025
        %v1074 = vadd.f32 %v1042, 0.0
        %v1075 = vadd.f32 %v1043, 0.0
        %v1076 = vadd.f32 %v1044, 0.0
        %v1077 = vadd.f32 %v1045, 0.0
        %v1078 = vadd.f32 %v1046, 0.0
        %v1079 = vadd.f32 %v1047, 0.0
        %v1080 = vadd.f32 %v1048, 0.0
        %v1081 = vadd.f32 %v1049, 0.0
        %v1082 = vadd.f32 %v1050, 0.0
        %v1083 = vadd.f32 %v1051, 0.0
        %v1084 = vadd.f32 %v1052, 0.0
        %v1085 = vadd.f32 %v1053, 0.0
        %v1086 = vadd.f32 %v1054, 0.0
        %v1087 = vadd.f32 %v1055, 0.0
        %v1088 = vadd.f32 %v1056, 0.0
        %v1089 = vadd.f32 %v1057, 0.0
        %v1090 = vadd.f32 %v1058, 0.0
        %v1091 = vadd.f32 %v1059, 0.0
        %v1092 = vadd.f32 %v1060, 0.0
        %v1093 = vadd.f32 %v1061, 0.0
        %v1094 = vadd.f32 %v1062, 0.0
        %v1095 = vadd.f32 %v1063, 0.0
        %v1096 = vadd.f32 %v1064, 0.0
        %v1097 = vadd.f32 %v1065, 0.0
        %v1098 = vadd.f32 %v1066, 0.0
        %v1099 = vadd.f32 %v1067, 0.0
        %v1100 = vadd.f32 %v1068, 0.0
        %v1101 = vadd.f32 %v1069, 0.0
        %v1102 = vadd.f32 %v1070, 0.0
        %v1103 = vadd.f32 %v1071, 0.0
        %v1104 = vadd.f32 %v1072, 0.0
        %v1105 = vadd.f32 %v1073, 0.0
        %v1106 = vlaneseq
        %v1107 = vshrl.u32 %v1106, 7
        %v1108 = vsub.s32 1, %v1107
        %v1109 = vrot.slane %v740, %v1108
        %v1110 = vlaneseq
        %v1111 = vshrl.u32 %v1110, 7
        %v1112 = vsub.s32 1, %v1111
        %v1113 = vrot.slane %v741, %v1112
        %v1114 = vlaneseq
        %v1115 = vshrl.u32 %v1114, 7
        %v1116 = vsub.s32 1, %v1115
        %v1117 = vrot.slane %v742, %v1116
        %v1118 = vlaneseq
        %v1119 = vshrl.u32 %v1118, 7
        %v1120 = vsub.s32 1, %v1119
        %v1121 = vrot.slane %v743, %v1120
        %v1122 = vmul.f32 %v1109, 0.0
        %v1123 = vmul.f32 %v1113, 0.0
        %v1124 = vmul.f32 %v1117, 0.0
        %v1125 = vmul.f32 %v1121, 0.0
        %v1126 = vmul.f32 %v1109, %v581
        %v1127 = vmul.f32 %v1113, %v583
        %v1128 = vmul.f32 %v1117, %v694
        %v1129 = vmul.f32 %v1121, %v696
        %v1130 = vmul.f32 %v1109, %v587
        %v1131 = vmul.f32 %v1113, %v589
        %v1132 = vmul.f32 %v1117, %v700
        %v1133 = vmul.f32 %v1121, %v702
        %v1134 = vmul.f32 %v1109, %v593
        %v1135 = vmul.f32 %v1113, %v595
        %v1136 = vmul.f32 %v1117, %v706
        %v1137 = vmul.f32 %v1121, %v708
        %v1138 = vmul.f32 %v1109, %v599
        %v1139 = vmul.f32 %v1113, %v601
        %v1140 = vmul.f32 %v1117, %v712
        %v1141 = vmul.f32 %v1121, %v714
        %v1142 = vmul.f32 %v1109, %v605
        %v1143 = vmul.f32 %v1113, %v607
        %v1144 = vmul.f32 %v1117, %v718
        %v1145 = vmul.f32 %v1121, %v720
        %v1146 = vmul.f32 %v1109, %v611
        %v1147 = vmul.f32 %v1113, %v613
        %v1148 = vmul.f32 %v1117, %v724
        %v1149 = vmul.f32 %v1121, %v726
        %v1150 = vmul.f32 %v1109, %v617
        %v1151 = vmul.f32 %v1113, %v619
        %v1152 = vmul.f32 %v1117, %v730
        %v1153 = vmul.f32 %v1121, %v732
        %v1154 = vadd.f32 %v1074, %v1122
        %v1155 = vadd.f32 %v1075, %v1123
        %v1156 = vadd.f32 %v1076, %v1124
        %v1157 = vadd.f32 %v1077, %v1125
        %v1158 = vadd.f32 %v1078, %v1126
        %v1159 = vadd.f32 %v1079, %v1127
        %v1160 = vadd.f32 %v1080, %v1128
        %v1161 = vadd.f32 %v1081, %v1129
        %v1162 = vadd.f32 %v1082, %v1130
        %v1163 = vadd.f32 %v1083, %v1131
        %v1164 = vadd.f32 %v1084, %v1132
        %v1165 = vadd.f32 %v1085, %v1133
        %v1166 = vadd.f32 %v1086, %v1134
        %v1167 = vadd.f32 %v1087, %v1135
        %v1168 = vadd.f32 %v1088, %v1136
        %v1169 = vadd.f32 %v1089, %v1137
        %v1170 = vadd.f32 %v1090, %v1138
        %v1171 = vadd.f32 %v1091, %v1139
        %v1172 = vadd.f32 %v1092, %v1140
        %v1173 = vadd.f32 %v1093, %v1141
        %v1174 = vadd.f32 %v1094, %v1142
        %v1175 = vadd.f32 %v1095, %v1143
        %v1176 = vadd.f32 %v1096, %v1144
        %v1177 = vadd.f32 %v1097, %v1145
        %v1178 = vadd.f32 %v1098, %v1146
        %v1179 = vadd.f32 %v1099, %v1147
        %v1180 = vadd.f32 %v1100, %v1148
        %v1181 = vadd.f32 %v1101, %v1149
        %v1182 = vadd.f32 %v1102, %v1150
        %v1183 = vadd.f32 %v1103, %v1151
        %v1184 = vadd.f32 %v1104, %v1152
        %v1185 = vadd.f32 %v1105, %v1153
        %vm1190 = vcmask 1046528
        %v1191 = vrot.slane %v581, 1
        %v1192 = vrot.slane %v583, 1
        %v1193 = vrot.slane %v694, 1
        %v1194 = vrot.slane %v696, 1
        %v1195 = vrot.slane %v587, 1
        %v1196 = vsel %vm1190, %v1191, %v1195
        %v1197 = vrot.slane %v589, 1
        %v1198 = vsel %vm1190, %v1192, %v1197
        %v1199 = vrot.slane %v700, 1
        %v1200 = vsel %vm1190, %v1193, %v1199
        %v1201 = vrot.slane %v702, 1
        %v1202 = vsel %vm1190, %v1194, %v1201
        %v1203 = vrot.slane %v593, 1
        %v1204 = vsel %vm1190, %v1195, %v1203
        %v1205 = vrot.slane %v595, 1
        %v1206 = vsel %vm1190, %v1197, %v1205
        %v1207 = vrot.slane %v706, 1
        %v1208 = vsel %vm1190, %v1199, %v1207
        %v1209 = vrot.slane %v708, 1
        %v1210 = vsel %vm1190, %v1201, %v1209
        %v1211 = vrot.slane %v599, 1
        %v1212 = vsel %vm1190, %v1203, %v1211
        %v1213 = vrot.slane %v601, 1
        %v1214 = vsel %vm1190, %v1205, %v1213
        %v1215 = vrot.slane %v712, 1
        %v1216 = vsel %vm1190, %v1207, %v1215
        %v1217 = vrot.slane %v714, 1
        %v1218 = vsel %vm1190, %v1209, %v1217
        %v1219 = vrot.slane %v605, 1
        %v1220 = vsel %vm1190, %v1211, %v1219
        %v1221 = vrot.slane %v607, 1
        %v1222 = vsel %vm1190, %v1213, %v1221
        %v1223 = vrot.slane %v718, 1
        %v1224 = vsel %vm1190, %v1215, %v1223
        %v1225 = vrot.slane %v720, 1
        %v1226 = vsel %vm1190, %v1217, %v1225
        %v1227 = vrot.slane %v611, 1
        %v1228 = vsel %vm1190, %v1219, %v1227
        %v1229 = vrot.slane %v613, 1
        %v1230 = vsel %vm1190, %v1221, %v1229
        %v1231 = vrot.slane %v724, 1
        %v1232 = vsel %vm1190, %v1223, %v1231
        %v1233 = vrot.slane %v726, 1
        %v1234 = vsel %vm1190, %v1225, %v1233
        %v1235 = vrot.slane %v617, 1
        %v1236 = vsel %vm1190, %v1227, %v1235
        %v1237 = vrot.slane %v619, 1
        %v1238 = vsel %vm1190, %v1229, %v1237
        %v1239 = vrot.slane %v730, 1
        %v1240 = vsel %vm1190, %v1231, %v1239
        %v1241 = vrot.slane %v732, 1
        %v1242 = vsel %vm1190, %v1233, %v1241
        %v1243 = vrot.slane %v623, 1
        %v1244 = vsel %vm1190, %v1235, %v1243
        %v1245 = vrot.slane %v625, 1
        %v1246 = vsel %vm1190, %v1237, %v1245
        %v1247 = vrot.slane %v736, 1
        %v1248 = vsel %vm1190, %v1239, %v1247
        %v1249 = vrot.slane %v738, 1
        %v1250 = vsel %vm1190, %v1241, %v1249
        %v1283 = vsel %vm1190, 0.0, %v1191
        %v1284 = vsel %vm1190, 0.0, %v1192
        %v1285 = vsel %vm1190, 0.0, %v1193
        %v1286 = vsel %vm1190, 0.0, %v1194
        %v1287 = vsel %vm861, 1, 0
        %v1288 = vsel %vm862, 1, 0
        %v1289 = vsel %vm863, 1, 0
        %v1290 = vsel %vm864, 1, 0
        %v1291 = vsel %vm865, 1, 0
        %v1292 = vsel %vm866, 1, 0
        %v1293 = vsel %vm867, 1, 0
        %v1294 = vsel %vm868, 1, 0
        %vm1295 = vcmp.eq.s32.totalorder %v1287, 1
        %vm1296 = vcmp.eq.s32.totalorder %v1288, 1
        %vm1297 = vcmp.eq.s32.totalorder %v1289, 1
        %vm1298 = vcmp.eq.s32.totalorder %v1290, 1
        %vm1299 = vcmp.eq.s32.totalorder %v1291, 1
        %vm1300 = vcmp.eq.s32.totalorder %v1292, 1
        %vm1301 = vcmp.eq.s32.totalorder %v1293, 1
        %vm1302 = vcmp.eq.s32.totalorder %v1294, 1
        %v1303 = vsel %vm1295, %v1283, 0.0
        %v1304 = vsel %vm1295, %v1284, 0.0
        %v1305 = vsel %vm1295, %v1285, 0.0
        %v1306 = vsel %vm1295, %v1286, 0.0
        %v1307 = vsel %vm1296, %v1196, 0.0
        %v1308 = vsel %vm1296, %v1198, 0.0
        %v1309 = vsel %vm1296, %v1200, 0.0
        %v1310 = vsel %vm1296, %v1202, 0.0
        %v1311 = vsel %vm1297, %v1204, 0.0
        %v1312 = vsel %vm1297, %v1206, 0.0
        %v1313 = vsel %vm1297, %v1208, 0.0
        %v1314 = vsel %vm1297, %v1210, 0.0
        %v1315 = vsel %vm1298, %v1212, 0.0
        %v1316 = vsel %vm1298, %v1214, 0.0
        %v1317 = vsel %vm1298, %v1216, 0.0
        %v1318 = vsel %vm1298, %v1218, 0.0
        %v1319 = vsel %vm1299, %v1220, 0.0
        %v1320 = vsel %vm1299, %v1222, 0.0
        %v1321 = vsel %vm1299, %v1224, 0.0
        %v1322 = vsel %vm1299, %v1226, 0.0
        %v1323 = vsel %vm1300, %v1228, 0.0
        %v1324 = vsel %vm1300, %v1230, 0.0
        %v1325 = vsel %vm1300, %v1232, 0.0
        %v1326 = vsel %vm1300, %v1234, 0.0
        %v1327 = vsel %vm1301, %v1236, 0.0
        %v1328 = vsel %vm1301, %v1238, 0.0
        %v1329 = vsel %vm1301, %v1240, 0.0
        %v1330 = vsel %vm1301, %v1242, 0.0
        %v1331 = vsel %vm1302, %v1244, 0.0
        %v1332 = vsel %vm1302, %v1246, 0.0
        %v1333 = vsel %vm1302, %v1248, 0.0
        %v1334 = vsel %vm1302, %v1250, 0.0
        %v1335 = vlaneseq
        %v1336 = vshrl.u32 %v1335, 7
        %v1337 = vsub.s32 2, %v1336
        %v1338 = vrot.slane %v740, %v1337
        %v1339 = vlaneseq
        %v1340 = vshrl.u32 %v1339, 7
        %v1341 = vsub.s32 2, %v1340
        %v1342 = vrot.slane %v741, %v1341
        %v1343 = vlaneseq
        %v1344 = vshrl.u32 %v1343, 7
        %v1345 = vsub.s32 2, %v1344
        %v1346 = vrot.slane %v742, %v1345
        %v1347 = vlaneseq
        %v1348 = vshrl.u32 %v1347, 7
        %v1349 = vsub.s32 2, %v1348
        %v1350 = vrot.slane %v743, %v1349
        %v1351 = vmul.f32 %v1338, %v1303
        %v1352 = vmul.f32 %v1342, %v1304
        %v1353 = vmul.f32 %v1346, %v1305
        %v1354 = vmul.f32 %v1350, %v1306
        %v1355 = vmul.f32 %v1338, %v1307
        %v1356 = vmul.f32 %v1342, %v1308
        %v1357 = vmul.f32 %v1346, %v1309
        %v1358 = vmul.f32 %v1350, %v1310
        %v1359 = vmul.f32 %v1338, %v1311
        %v1360 = vmul.f32 %v1342, %v1312
        %v1361 = vmul.f32 %v1346, %v1313
        %v1362 = vmul.f32 %v1350, %v1314
        %v1363 = vmul.f32 %v1338, %v1315
        %v1364 = vmul.f32 %v1342, %v1316
        %v1365 = vmul.f32 %v1346, %v1317
        %v1366 = vmul.f32 %v1350, %v1318
        %v1367 = vmul.f32 %v1338, %v1319
        %v1368 = vmul.f32 %v1342, %v1320
        %v1369 = vmul.f32 %v1346, %v1321
        %v1370 = vmul.f32 %v1350, %v1322
        %v1371 = vmul.f32 %v1338, %v1323
        %v1372 = vmul.f32 %v1342, %v1324
        %v1373 = vmul.f32 %v1346, %v1325
        %v1374 = vmul.f32 %v1350, %v1326
        %v1375 = vmul.f32 %v1338, %v1327
        %v1376 = vmul.f32 %v1342, %v1328
        %v1377 = vmul.f32 %v1346, %v1329
        %v1378 = vmul.f32 %v1350, %v1330
        %v1379 = vmul.f32 %v1338, %v1331
        %v1380 = vmul.f32 %v1342, %v1332
        %v1381 = vmul.f32 %v1346, %v1333
        %v1382 = vmul.f32 %v1350, %v1334
        %v1383 = vadd.f32 %v1154, %v1351
        %v1384 = vadd.f32 %v1155, %v1352
        %v1385 = vadd.f32 %v1156, %v1353
        %v1386 = vadd.f32 %v1157, %v1354
        %v1387 = vadd.f32 %v1158, %v1355
        %v1388 = vadd.f32 %v1159, %v1356
        %v1389 = vadd.f32 %v1160, %v1357
        %v1390 = vadd.f32 %v1161, %v1358
        %v1391 = vadd.f32 %v1162, %v1359
        %v1392 = vadd.f32 %v1163, %v1360
        %v1393 = vadd.f32 %v1164, %v1361
        %v1394 = vadd.f32 %v1165, %v1362
        %v1395 = vadd.f32 %v1166, %v1363
        %v1396 = vadd.f32 %v1167, %v1364
        %v1397 = vadd.f32 %v1168, %v1365
        %v1398 = vadd.f32 %v1169, %v1366
        %v1399 = vadd.f32 %v1170, %v1367
        %v1400 = vadd.f32 %v1171, %v1368
        %v1401 = vadd.f32 %v1172, %v1369
        %v1402 = vadd.f32 %v1173, %v1370
        %v1403 = vadd.f32 %v1174, %v1371
        %v1404 = vadd.f32 %v1175, %v1372
        %v1405 = vadd.f32 %v1176, %v1373
        %v1406 = vadd.f32 %v1177, %v1374
        %v1407 = vadd.f32 %v1178, %v1375
        %v1408 = vadd.f32 %v1179, %v1376
        %v1409 = vadd.f32 %v1180, %v1377
        %v1410 = vadd.f32 %v1181, %v1378
        %v1411 = vadd.f32 %v1182, %v1379
        %v1412 = vadd.f32 %v1183, %v1380
        %v1413 = vadd.f32 %v1184, %v1381
        %v1414 = vadd.f32 %v1185, %v1382
        %v1415 = vrot.slane %v623, 7
        %v1416 = vsel %vm897, %v942, %v1415
        %v1417 = vrot.slane %v625, 7
        %v1418 = vsel %vm897, %v944, %v1417
        %v1419 = vrot.slane %v736, 7
        %v1420 = vsel %vm897, %v946, %v1419
        %v1421 = vrot.slane %v738, 7
        %v1422 = vsel %vm897, %v948, %v1421
        %v1427 = vsel %vm990, %v978, 0.0
        %v1428 = vsel %vm990, %v979, 0.0
        %v1429 = vsel %vm990, %v980, 0.0
        %v1430 = vsel %vm990, %v981, 0.0
        %v1431 = vsel %vm991, %v903, 0.0
        %v1432 = vsel %vm991, %v905, 0.0
        %v1433 = vsel %vm991, %v907, 0.0
        %v1434 = vsel %vm991, %v909, 0.0
        %v1435 = vsel %vm992, %v911, 0.0
        %v1436 = vsel %vm992, %v913, 0.0
        %v1437 = vsel %vm992, %v915, 0.0
        %v1438 = vsel %vm992, %v917, 0.0
        %v1439 = vsel %vm993, %v919, 0.0
        %v1440 = vsel %vm993, %v921, 0.0
        %v1441 = vsel %vm993, %v923, 0.0
        %v1442 = vsel %vm993, %v925, 0.0
        %v1443 = vsel %vm994, %v927, 0.0
        %v1444 = vsel %vm994, %v929, 0.0
        %v1445 = vsel %vm994, %v931, 0.0
        %v1446 = vsel %vm994, %v933, 0.0
        %v1447 = vsel %vm995, %v935, 0.0
        %v1448 = vsel %vm995, %v937, 0.0
        %v1449 = vsel %vm995, %v939, 0.0
        %v1450 = vsel %vm995, %v941, 0.0
        %v1451 = vsel %vm996, %v943, 0.0
        %v1452 = vsel %vm996, %v945, 0.0
        %v1453 = vsel %vm996, %v947, 0.0
        %v1454 = vsel %vm996, %v949, 0.0
        %v1455 = vsel %vm997, %v1416, 0.0
        %v1456 = vsel %vm997, %v1418, 0.0
        %v1457 = vsel %vm997, %v1420, 0.0
        %v1458 = vsel %vm997, %v1422, 0.0
        %v1459 = vlaneseq
        %v1460 = vshrl.u32 %v1459, 7
        %v1461 = vsub.s32 3, %v1460
        %v1462 = vrot.slane %v740, %v1461
        %v1463 = vlaneseq
        %v1464 = vshrl.u32 %v1463, 7
        %v1465 = vsub.s32 3, %v1464
        %v1466 = vrot.slane %v741, %v1465
        %v1467 = vlaneseq
        %v1468 = vshrl.u32 %v1467, 7
        %v1469 = vsub.s32 3, %v1468
        %v1470 = vrot.slane %v742, %v1469
        %v1471 = vlaneseq
        %v1472 = vshrl.u32 %v1471, 7
        %v1473 = vsub.s32 3, %v1472
        %v1474 = vrot.slane %v743, %v1473
        %v1475 = vmul.f32 %v1462, %v1427
        %v1476 = vmul.f32 %v1466, %v1428
        %v1477 = vmul.f32 %v1470, %v1429
        %v1478 = vmul.f32 %v1474, %v1430
        %v1479 = vmul.f32 %v1462, %v1431
        %v1480 = vmul.f32 %v1466, %v1432
        %v1481 = vmul.f32 %v1470, %v1433
        %v1482 = vmul.f32 %v1474, %v1434
        %v1483 = vmul.f32 %v1462, %v1435
        %v1484 = vmul.f32 %v1466, %v1436
        %v1485 = vmul.f32 %v1470, %v1437
        %v1486 = vmul.f32 %v1474, %v1438
        %v1487 = vmul.f32 %v1462, %v1439
        %v1488 = vmul.f32 %v1466, %v1440
        %v1489 = vmul.f32 %v1470, %v1441
        %v1490 = vmul.f32 %v1474, %v1442
        %v1491 = vmul.f32 %v1462, %v1443
        %v1492 = vmul.f32 %v1466, %v1444
        %v1493 = vmul.f32 %v1470, %v1445
        %v1494 = vmul.f32 %v1474, %v1446
        %v1495 = vmul.f32 %v1462, %v1447
        %v1496 = vmul.f32 %v1466, %v1448
        %v1497 = vmul.f32 %v1470, %v1449
        %v1498 = vmul.f32 %v1474, %v1450
        %v1499 = vmul.f32 %v1462, %v1451
        %v1500 = vmul.f32 %v1466, %v1452
        %v1501 = vmul.f32 %v1470, %v1453
        %v1502 = vmul.f32 %v1474, %v1454
        %v1503 = vmul.f32 %v1462, %v1455
        %v1504 = vmul.f32 %v1466, %v1456
        %v1505 = vmul.f32 %v1470, %v1457
        %v1506 = vmul.f32 %v1474, %v1458
        %v1507 = vadd.f32 %v1383, %v1475
        %v1508 = vadd.f32 %v1384, %v1476
        %v1509 = vadd.f32 %v1385, %v1477
        %v1510 = vadd.f32 %v1386, %v1478
        %v1511 = vadd.f32 %v1387, %v1479
        %v1512 = vadd.f32 %v1388, %v1480
        %v1513 = vadd.f32 %v1389, %v1481
        %v1514 = vadd.f32 %v1390, %v1482
        %v1515 = vadd.f32 %v1391, %v1483
        %v1516 = vadd.f32 %v1392, %v1484
        %v1517 = vadd.f32 %v1393, %v1485
        %v1518 = vadd.f32 %v1394, %v1486
        %v1519 = vadd.f32 %v1395, %v1487
        %v1520 = vadd.f32 %v1396, %v1488
        %v1521 = vadd.f32 %v1397, %v1489
        %v1522 = vadd.f32 %v1398, %v1490
        %v1523 = vadd.f32 %v1399, %v1491
        %v1524 = vadd.f32 %v1400, %v1492
        %v1525 = vadd.f32 %v1401, %v1493
        %v1526 = vadd.f32 %v1402, %v1494
        %v1527 = vadd.f32 %v1403, %v1495
        %v1528 = vadd.f32 %v1404, %v1496
        %v1529 = vadd.f32 %v1405, %v1497
        %v1530 = vadd.f32 %v1406, %v1498
        %v1531 = vadd.f32 %v1407, %v1499
        %v1532 = vadd.f32 %v1408, %v1500
        %v1533 = vadd.f32 %v1409, %v1501
        %v1534 = vadd.f32 %v1410, %v1502
        %v1535 = vadd.f32 %v1411, %v1503
        %v1536 = vadd.f32 %v1412, %v1504
        %v1537 = vadd.f32 %v1413, %v1505
        %v1538 = vadd.f32 %v1414, %v1506
        %v1539 = vlaneseq
        %v1540 = vshrl.u32 %v1539, 7
        %v1541 = vsub.s32 4, %v1540
        %v1542 = vrot.slane %v740, %v1541
        %v1543 = vlaneseq
        %v1544 = vshrl.u32 %v1543, 7
        %v1545 = vsub.s32 4, %v1544
        %v1546 = vrot.slane %v741, %v1545
        %v1547 = vlaneseq
        %v1548 = vshrl.u32 %v1547, 7
        %v1549 = vsub.s32 4, %v1548
        %v1550 = vrot.slane %v742, %v1549
        %v1551 = vlaneseq
        %v1552 = vshrl.u32 %v1551, 7
        %v1553 = vsub.s32 4, %v1552
        %v1554 = vrot.slane %v743, %v1553
        %v1555 = vmul.f32 %v1542, %v581
        %v1556 = vmul.f32 %v1546, %v583
        %v1557 = vmul.f32 %v1550, %v694
        %v1558 = vmul.f32 %v1554, %v696
        %v1559 = vmul.f32 %v1542, %v587
        %v1560 = vmul.f32 %v1546, %v589
        %v1561 = vmul.f32 %v1550, %v700
        %v1562 = vmul.f32 %v1554, %v702
        %v1563 = vmul.f32 %v1542, %v593
        %v1564 = vmul.f32 %v1546, %v595
        %v1565 = vmul.f32 %v1550, %v706
        %v1566 = vmul.f32 %v1554, %v708
        %v1567 = vmul.f32 %v1542, %v599
        %v1568 = vmul.f32 %v1546, %v601
        %v1569 = vmul.f32 %v1550, %v712
        %v1570 = vmul.f32 %v1554, %v714
        %v1571 = vmul.f32 %v1542, %v605
        %v1572 = vmul.f32 %v1546, %v607
        %v1573 = vmul.f32 %v1550, %v718
        %v1574 = vmul.f32 %v1554, %v720
        %v1575 = vmul.f32 %v1542, %v611
        %v1576 = vmul.f32 %v1546, %v613
        %v1577 = vmul.f32 %v1550, %v724
        %v1578 = vmul.f32 %v1554, %v726
        %v1579 = vmul.f32 %v1542, %v617
        %v1580 = vmul.f32 %v1546, %v619
        %v1581 = vmul.f32 %v1550, %v730
        %v1582 = vmul.f32 %v1554, %v732
        %v1583 = vmul.f32 %v1542, %v623
        %v1584 = vmul.f32 %v1546, %v625
        %v1585 = vmul.f32 %v1550, %v736
        %v1586 = vmul.f32 %v1554, %v738
        %v1587 = vadd.f32 %v1507, %v1555
        %v1588 = vadd.f32 %v1508, %v1556
        %v1589 = vadd.f32 %v1509, %v1557
        %v1590 = vadd.f32 %v1510, %v1558
        %v1591 = vadd.f32 %v1511, %v1559
        %v1592 = vadd.f32 %v1512, %v1560
        %v1593 = vadd.f32 %v1513, %v1561
        %v1594 = vadd.f32 %v1514, %v1562
        %v1595 = vadd.f32 %v1515, %v1563
        %v1596 = vadd.f32 %v1516, %v1564
        %v1597 = vadd.f32 %v1517, %v1565
        %v1598 = vadd.f32 %v1518, %v1566
        %v1599 = vadd.f32 %v1519, %v1567
        %v1600 = vadd.f32 %v1520, %v1568
        %v1601 = vadd.f32 %v1521, %v1569
        %v1602 = vadd.f32 %v1522, %v1570
        %v1603 = vadd.f32 %v1523, %v1571
        %v1604 = vadd.f32 %v1524, %v1572
        %v1605 = vadd.f32 %v1525, %v1573
        %v1606 = vadd.f32 %v1526, %v1574
        %v1607 = vadd.f32 %v1527, %v1575
        %v1608 = vadd.f32 %v1528, %v1576
        %v1609 = vadd.f32 %v1529, %v1577
        %v1610 = vadd.f32 %v1530, %v1578
        %v1611 = vadd.f32 %v1531, %v1579
        %v1612 = vadd.f32 %v1532, %v1580
        %v1613 = vadd.f32 %v1533, %v1581
        %v1614 = vadd.f32 %v1534, %v1582
        %v1615 = vadd.f32 %v1535, %v1583
        %v1616 = vadd.f32 %v1536, %v1584
        %v1617 = vadd.f32 %v1537, %v1585
        %v1618 = vadd.f32 %v1538, %v1586
        %v1623 = vsel %vm1190, %v1243, 0.0
        %v1624 = vsel %vm1190, %v1245, 0.0
        %v1625 = vsel %vm1190, %v1247, 0.0
        %v1626 = vsel %vm1190, %v1249, 0.0
        %v1627 = vsel %vm1295, %v1196, 0.0
        %v1628 = vsel %vm1295, %v1198, 0.0
        %v1629 = vsel %vm1295, %v1200, 0.0
        %v1630 = vsel %vm1295, %v1202, 0.0
        %v1631 = vsel %vm1296, %v1204, 0.0
        %v1632 = vsel %vm1296, %v1206, 0.0
        %v1633 = vsel %vm1296, %v1208, 0.0
        %v1634 = vsel %vm1296, %v1210, 0.0
        %v1635 = vsel %vm1297, %v1212, 0.0
        %v1636 = vsel %vm1297, %v1214, 0.0
        %v1637 = vsel %vm1297, %v1216, 0.0
        %v1638 = vsel %vm1297, %v1218, 0.0
        %v1639 = vsel %vm1298, %v1220, 0.0
        %v1640 = vsel %vm1298, %v1222, 0.0
        %v1641 = vsel %vm1298, %v1224, 0.0
        %v1642 = vsel %vm1298, %v1226, 0.0
        %v1643 = vsel %vm1299, %v1228, 0.0
        %v1644 = vsel %vm1299, %v1230, 0.0
        %v1645 = vsel %vm1299, %v1232, 0.0
        %v1646 = vsel %vm1299, %v1234, 0.0
        %v1647 = vsel %vm1300, %v1236, 0.0
        %v1648 = vsel %vm1300, %v1238, 0.0
        %v1649 = vsel %vm1300, %v1240, 0.0
        %v1650 = vsel %vm1300, %v1242, 0.0
        %v1651 = vsel %vm1301, %v1244, 0.0
        %v1652 = vsel %vm1301, %v1246, 0.0
        %v1653 = vsel %vm1301, %v1248, 0.0
        %v1654 = vsel %vm1301, %v1250, 0.0
        %v1655 = vsel %vm1302, %v1623, 0.0
        %v1656 = vsel %vm1302, %v1624, 0.0
        %v1657 = vsel %vm1302, %v1625, 0.0
        %v1658 = vsel %vm1302, %v1626, 0.0
        %v1659 = vlaneseq
        %v1660 = vshrl.u32 %v1659, 7
        %v1661 = vsub.s32 5, %v1660
        %v1662 = vrot.slane %v740, %v1661
        %v1663 = vlaneseq
        %v1664 = vshrl.u32 %v1663, 7
        %v1665 = vsub.s32 5, %v1664
        %v1666 = vrot.slane %v741, %v1665
        %v1667 = vlaneseq
        %v1668 = vshrl.u32 %v1667, 7
        %v1669 = vsub.s32 5, %v1668
        %v1670 = vrot.slane %v742, %v1669
        %v1671 = vlaneseq
        %v1672 = vshrl.u32 %v1671, 7
        %v1673 = vsub.s32 5, %v1672
        %v1674 = vrot.slane %v743, %v1673
        %v1675 = vmul.f32 %v1662, %v1627
        %v1676 = vmul.f32 %v1666, %v1628
        %v1677 = vmul.f32 %v1670, %v1629
        %v1678 = vmul.f32 %v1674, %v1630
        %v1679 = vmul.f32 %v1662, %v1631
        %v1680 = vmul.f32 %v1666, %v1632
        %v1681 = vmul.f32 %v1670, %v1633
        %v1682 = vmul.f32 %v1674, %v1634
        %v1683 = vmul.f32 %v1662, %v1635
        %v1684 = vmul.f32 %v1666, %v1636
        %v1685 = vmul.f32 %v1670, %v1637
        %v1686 = vmul.f32 %v1674, %v1638
        %v1687 = vmul.f32 %v1662, %v1639
        %v1688 = vmul.f32 %v1666, %v1640
        %v1689 = vmul.f32 %v1670, %v1641
        %v1690 = vmul.f32 %v1674, %v1642
        %v1691 = vmul.f32 %v1662, %v1643
        %v1692 = vmul.f32 %v1666, %v1644
        %v1693 = vmul.f32 %v1670, %v1645
        %v1694 = vmul.f32 %v1674, %v1646
        %v1695 = vmul.f32 %v1662, %v1647
        %v1696 = vmul.f32 %v1666, %v1648
        %v1697 = vmul.f32 %v1670, %v1649
        %v1698 = vmul.f32 %v1674, %v1650
        %v1699 = vmul.f32 %v1662, %v1651
        %v1700 = vmul.f32 %v1666, %v1652
        %v1701 = vmul.f32 %v1670, %v1653
        %v1702 = vmul.f32 %v1674, %v1654
        %v1703 = vmul.f32 %v1662, %v1655
        %v1704 = vmul.f32 %v1666, %v1656
        %v1705 = vmul.f32 %v1670, %v1657
        %v1706 = vmul.f32 %v1674, %v1658
        %v1707 = vadd.f32 %v1587, %v1675
        %v1708 = vadd.f32 %v1588, %v1676
        %v1709 = vadd.f32 %v1589, %v1677
        %v1710 = vadd.f32 %v1590, %v1678
        %v1711 = vadd.f32 %v1591, %v1679
        %v1712 = vadd.f32 %v1592, %v1680
        %v1713 = vadd.f32 %v1593, %v1681
        %v1714 = vadd.f32 %v1594, %v1682
        %v1715 = vadd.f32 %v1595, %v1683
        %v1716 = vadd.f32 %v1596, %v1684
        %v1717 = vadd.f32 %v1597, %v1685
        %v1718 = vadd.f32 %v1598, %v1686
        %v1719 = vadd.f32 %v1599, %v1687
        %v1720 = vadd.f32 %v1600, %v1688
        %v1721 = vadd.f32 %v1601, %v1689
        %v1722 = vadd.f32 %v1602, %v1690
        %v1723 = vadd.f32 %v1603, %v1691
        %v1724 = vadd.f32 %v1604, %v1692
        %v1725 = vadd.f32 %v1605, %v1693
        %v1726 = vadd.f32 %v1606, %v1694
        %v1727 = vadd.f32 %v1607, %v1695
        %v1728 = vadd.f32 %v1608, %v1696
        %v1729 = vadd.f32 %v1609, %v1697
        %v1730 = vadd.f32 %v1610, %v1698
        %v1731 = vadd.f32 %v1611, %v1699
        %v1732 = vadd.f32 %v1612, %v1700
        %v1733 = vadd.f32 %v1613, %v1701
        %v1734 = vadd.f32 %v1614, %v1702
        %v1735 = vadd.f32 %v1615, %v1703
        %v1736 = vadd.f32 %v1616, %v1704
        %v1737 = vadd.f32 %v1617, %v1705
        %v1738 = vadd.f32 %v1618, %v1706
        %v1743 = vsel %vm897, %v1415, 0.0
        %v1744 = vsel %vm897, %v1417, 0.0
        %v1745 = vsel %vm897, %v1419, 0.0
        %v1746 = vsel %vm897, %v1421, 0.0
        %v1747 = vsel %vm990, %v903, 0.0
        %v1748 = vsel %vm990, %v905, 0.0
        %v1749 = vsel %vm990, %v907, 0.0
        %v1750 = vsel %vm990, %v909, 0.0
        %v1751 = vsel %vm991, %v911, 0.0
        %v1752 = vsel %vm991, %v913, 0.0
        %v1753 = vsel %vm991, %v915, 0.0
        %v1754 = vsel %vm991, %v917, 0.0
        %v1755 = vsel %vm992, %v919, 0.0
        %v1756 = vsel %vm992, %v921, 0.0
        %v1757 = vsel %vm992, %v923, 0.0
        %v1758 = vsel %vm992, %v925, 0.0
        %v1759 = vsel %vm993, %v927, 0.0
        %v1760 = vsel %vm993, %v929, 0.0
        %v1761 = vsel %vm993, %v931, 0.0
        %v1762 = vsel %vm993, %v933, 0.0
        %v1763 = vsel %vm994, %v935, 0.0
        %v1764 = vsel %vm994, %v937, 0.0
        %v1765 = vsel %vm994, %v939, 0.0
        %v1766 = vsel %vm994, %v941, 0.0
        %v1767 = vsel %vm995, %v943, 0.0
        %v1768 = vsel %vm995, %v945, 0.0
        %v1769 = vsel %vm995, %v947, 0.0
        %v1770 = vsel %vm995, %v949, 0.0
        %v1771 = vsel %vm996, %v1416, 0.0
        %v1772 = vsel %vm996, %v1418, 0.0
        %v1773 = vsel %vm996, %v1420, 0.0
        %v1774 = vsel %vm996, %v1422, 0.0
        %v1775 = vsel %vm997, %v1743, 0.0
        %v1776 = vsel %vm997, %v1744, 0.0
        %v1777 = vsel %vm997, %v1745, 0.0
        %v1778 = vsel %vm997, %v1746, 0.0
        %v1779 = vlaneseq
        %v1780 = vshrl.u32 %v1779, 7
        %v1781 = vsub.s32 6, %v1780
        %v1782 = vrot.slane %v740, %v1781
        %v1783 = vlaneseq
        %v1784 = vshrl.u32 %v1783, 7
        %v1785 = vsub.s32 6, %v1784
        %v1786 = vrot.slane %v741, %v1785
        %v1787 = vlaneseq
        %v1788 = vshrl.u32 %v1787, 7
        %v1789 = vsub.s32 6, %v1788
        %v1790 = vrot.slane %v742, %v1789
        %v1791 = vlaneseq
        %v1792 = vshrl.u32 %v1791, 7
        %v1793 = vsub.s32 6, %v1792
        %v1794 = vrot.slane %v743, %v1793
        %v1795 = vmul.f32 %v1782, %v1747
        %v1796 = vmul.f32 %v1786, %v1748
        %v1797 = vmul.f32 %v1790, %v1749
        %v1798 = vmul.f32 %v1794, %v1750
        %v1799 = vmul.f32 %v1782, %v1751
        %v1800 = vmul.f32 %v1786, %v1752
        %v1801 = vmul.f32 %v1790, %v1753
        %v1802 = vmul.f32 %v1794, %v1754
        %v1803 = vmul.f32 %v1782, %v1755
        %v1804 = vmul.f32 %v1786, %v1756
        %v1805 = vmul.f32 %v1790, %v1757
        %v1806 = vmul.f32 %v1794, %v1758
        %v1807 = vmul.f32 %v1782, %v1759
        %v1808 = vmul.f32 %v1786, %v1760
        %v1809 = vmul.f32 %v1790, %v1761
        %v1810 = vmul.f32 %v1794, %v1762
        %v1811 = vmul.f32 %v1782, %v1763
        %v1812 = vmul.f32 %v1786, %v1764
        %v1813 = vmul.f32 %v1790, %v1765
        %v1814 = vmul.f32 %v1794, %v1766
        %v1815 = vmul.f32 %v1782, %v1767
        %v1816 = vmul.f32 %v1786, %v1768
        %v1817 = vmul.f32 %v1790, %v1769
        %v1818 = vmul.f32 %v1794, %v1770
        %v1819 = vmul.f32 %v1782, %v1771
        %v1820 = vmul.f32 %v1786, %v1772
        %v1821 = vmul.f32 %v1790, %v1773
        %v1822 = vmul.f32 %v1794, %v1774
        %v1823 = vmul.f32 %v1782, %v1775
        %v1824 = vmul.f32 %v1786, %v1776
        %v1825 = vmul.f32 %v1790, %v1777
        %v1826 = vmul.f32 %v1794, %v1778
        %v1827 = vadd.f32 %v1707, %v1795
        %v1828 = vadd.f32 %v1708, %v1796
        %v1829 = vadd.f32 %v1709, %v1797
        %v1830 = vadd.f32 %v1710, %v1798
        %v1831 = vadd.f32 %v1711, %v1799
        %v1832 = vadd.f32 %v1712, %v1800
        %v1833 = vadd.f32 %v1713, %v1801
        %v1834 = vadd.f32 %v1714, %v1802
        %v1835 = vadd.f32 %v1715, %v1803
        %v1836 = vadd.f32 %v1716, %v1804
        %v1837 = vadd.f32 %v1717, %v1805
        %v1838 = vadd.f32 %v1718, %v1806
        %v1839 = vadd.f32 %v1719, %v1807
        %v1840 = vadd.f32 %v1720, %v1808
        %v1841 = vadd.f32 %v1721, %v1809
        %v1842 = vadd.f32 %v1722, %v1810
        %v1843 = vadd.f32 %v1723, %v1811
        %v1844 = vadd.f32 %v1724, %v1812
        %v1845 = vadd.f32 %v1725, %v1813
        %v1846 = vadd.f32 %v1726, %v1814
        %v1847 = vadd.f32 %v1727, %v1815
        %v1848 = vadd.f32 %v1728, %v1816
        %v1849 = vadd.f32 %v1729, %v1817
        %v1850 = vadd.f32 %v1730, %v1818
        %v1851 = vadd.f32 %v1731, %v1819
        %v1852 = vadd.f32 %v1732, %v1820
        %v1853 = vadd.f32 %v1733, %v1821
        %v1854 = vadd.f32 %v1734, %v1822
        %v1855 = vadd.f32 %v1735, %v1823
        %v1856 = vadd.f32 %v1736, %v1824
        %v1857 = vadd.f32 %v1737, %v1825
        %v1858 = vadd.f32 %v1738, %v1826
        %v1859 = vlaneseq
        %v1860 = vshrl.u32 %v1859, 7
        %v1861 = vsub.s32 7, %v1860
        %v1862 = vrot.slane %v740, %v1861
        %v1863 = vlaneseq
        %v1864 = vshrl.u32 %v1863, 7
        %v1865 = vsub.s32 7, %v1864
        %v1866 = vrot.slane %v741, %v1865
        %v1867 = vlaneseq
        %v1868 = vshrl.u32 %v1867, 7
        %v1869 = vsub.s32 7, %v1868
        %v1870 = vrot.slane %v742, %v1869
        %v1871 = vlaneseq
        %v1872 = vshrl.u32 %v1871, 7
        %v1873 = vsub.s32 7, %v1872
        %v1874 = vrot.slane %v743, %v1873
        %v1875 = vmul.f32 %v1862, %v587
        %v1876 = vmul.f32 %v1866, %v589
        %v1877 = vmul.f32 %v1870, %v700
        %v1878 = vmul.f32 %v1874, %v702
        %v1879 = vmul.f32 %v1862, %v593
        %v1880 = vmul.f32 %v1866, %v595
        %v1881 = vmul.f32 %v1870, %v706
        %v1882 = vmul.f32 %v1874, %v708
        %v1883 = vmul.f32 %v1862, %v599
        %v1884 = vmul.f32 %v1866, %v601
        %v1885 = vmul.f32 %v1870, %v712
        %v1886 = vmul.f32 %v1874, %v714
        %v1887 = vmul.f32 %v1862, %v605
        %v1888 = vmul.f32 %v1866, %v607
        %v1889 = vmul.f32 %v1870, %v718
        %v1890 = vmul.f32 %v1874, %v720
        %v1891 = vmul.f32 %v1862, %v611
        %v1892 = vmul.f32 %v1866, %v613
        %v1893 = vmul.f32 %v1870, %v724
        %v1894 = vmul.f32 %v1874, %v726
        %v1895 = vmul.f32 %v1862, %v617
        %v1896 = vmul.f32 %v1866, %v619
        %v1897 = vmul.f32 %v1870, %v730
        %v1898 = vmul.f32 %v1874, %v732
        %v1899 = vmul.f32 %v1862, %v623
        %v1900 = vmul.f32 %v1866, %v625
        %v1901 = vmul.f32 %v1870, %v736
        %v1902 = vmul.f32 %v1874, %v738
        %v1903 = vmul.f32 %v1862, 0.0
        %v1904 = vmul.f32 %v1866, 0.0
        %v1905 = vmul.f32 %v1870, 0.0
        %v1906 = vmul.f32 %v1874, 0.0
        %v1907 = vadd.f32 %v1827, %v1875
        %v1908 = vadd.f32 %v1828, %v1876
        %v1909 = vadd.f32 %v1829, %v1877
        %v1910 = vadd.f32 %v1830, %v1878
        %v1911 = vadd.f32 %v1831, %v1879
        %v1912 = vadd.f32 %v1832, %v1880
        %v1913 = vadd.f32 %v1833, %v1881
        %v1914 = vadd.f32 %v1834, %v1882
        %v1915 = vadd.f32 %v1835, %v1883
        %v1916 = vadd.f32 %v1836, %v1884
        %v1917 = vadd.f32 %v1837, %v1885
        %v1918 = vadd.f32 %v1838, %v1886
        %v1919 = vadd.f32 %v1839, %v1887
        %v1920 = vadd.f32 %v1840, %v1888
        %v1921 = vadd.f32 %v1841, %v1889
        %v1922 = vadd.f32 %v1842, %v1890
        %v1923 = vadd.f32 %v1843, %v1891
        %v1924 = vadd.f32 %v1844, %v1892
        %v1925 = vadd.f32 %v1845, %v1893
        %v1926 = vadd.f32 %v1846, %v1894
        %v1927 = vadd.f32 %v1847, %v1895
        %v1928 = vadd.f32 %v1848, %v1896
        %v1929 = vadd.f32 %v1849, %v1897
        %v1930 = vadd.f32 %v1850, %v1898
        %v1931 = vadd.f32 %v1851, %v1899
        %v1932 = vadd.f32 %v1852, %v1900
        %v1933 = vadd.f32 %v1853, %v1901
        %v1934 = vadd.f32 %v1854, %v1902
        %v1935 = vadd.f32 %v1855, %v1903
        %v1936 = vadd.f32 %v1856, %v1904
        %v1937 = vadd.f32 %v1857, %v1905
        %v1938 = vadd.f32 %v1858, %v1906
        %v1939 = vsel %vm1295, %v1204, 0.0
        %v1940 = vsel %vm1295, %v1206, 0.0
        %v1941 = vsel %vm1295, %v1208, 0.0
        %v1942 = vsel %vm1295, %v1210, 0.0
        %v1943 = vsel %vm1296, %v1212, 0.0
        %v1944 = vsel %vm1296, %v1214, 0.0
        %v1945 = vsel %vm1296, %v1216, 0.0
        %v1946 = vsel %vm1296, %v1218, 0.0
        %v1947 = vsel %vm1297, %v1220, 0.0
        %v1948 = vsel %vm1297, %v1222, 0.0
        %v1949 = vsel %vm1297, %v1224, 0.0
        %v1950 = vsel %vm1297, %v1226, 0.0
        %v1951 = vsel %vm1298, %v1228, 0.0
        %v1952 = vsel %vm1298, %v1230, 0.0
        %v1953 = vsel %vm1298, %v1232, 0.0
        %v1954 = vsel %vm1298, %v1234, 0.0
        %v1955 = vsel %vm1299, %v1236, 0.0
        %v1956 = vsel %vm1299, %v1238, 0.0
        %v1957 = vsel %vm1299, %v1240, 0.0
        %v1958 = vsel %vm1299, %v1242, 0.0
        %v1959 = vsel %vm1300, %v1244, 0.0
        %v1960 = vsel %vm1300, %v1246, 0.0
        %v1961 = vsel %vm1300, %v1248, 0.0
        %v1962 = vsel %vm1300, %v1250, 0.0
        %v1963 = vsel %vm1301, %v1623, 0.0
        %v1964 = vsel %vm1301, %v1624, 0.0
        %v1965 = vsel %vm1301, %v1625, 0.0
        %v1966 = vsel %vm1301, %v1626, 0.0
        %v1967 = vlaneseq
        %v1968 = vshrl.u32 %v1967, 7
        %v1969 = vsub.s32 0, %v1968
        %v1970 = vrot.slane %v744, %v1969
        %v1971 = vlaneseq
        %v1972 = vshrl.u32 %v1971, 7
        %v1973 = vsub.s32 0, %v1972
        %v1974 = vrot.slane %v745, %v1973
        %v1975 = vlaneseq
        %v1976 = vshrl.u32 %v1975, 7
        %v1977 = vsub.s32 0, %v1976
        %v1978 = vrot.slane %v746, %v1977
        %v1979 = vlaneseq
        %v1980 = vshrl.u32 %v1979, 7
        %v1981 = vsub.s32 0, %v1980
        %v1982 = vrot.slane %v747, %v1981
        %v1983 = vmul.f32 %v1970, %v1939
        %v1984 = vmul.f32 %v1974, %v1940
        %v1985 = vmul.f32 %v1978, %v1941
        %v1986 = vmul.f32 %v1982, %v1942
        %v1987 = vmul.f32 %v1970, %v1943
        %v1988 = vmul.f32 %v1974, %v1944
        %v1989 = vmul.f32 %v1978, %v1945
        %v1990 = vmul.f32 %v1982, %v1946
        %v1991 = vmul.f32 %v1970, %v1947
        %v1992 = vmul.f32 %v1974, %v1948
        %v1993 = vmul.f32 %v1978, %v1949
        %v1994 = vmul.f32 %v1982, %v1950
        %v1995 = vmul.f32 %v1970, %v1951
        %v1996 = vmul.f32 %v1974, %v1952
        %v1997 = vmul.f32 %v1978, %v1953
        %v1998 = vmul.f32 %v1982, %v1954
        %v1999 = vmul.f32 %v1970, %v1955
        %v2000 = vmul.f32 %v1974, %v1956
        %v2001 = vmul.f32 %v1978, %v1957
        %v2002 = vmul.f32 %v1982, %v1958
        %v2003 = vmul.f32 %v1970, %v1959
        %v2004 = vmul.f32 %v1974, %v1960
        %v2005 = vmul.f32 %v1978, %v1961
        %v2006 = vmul.f32 %v1982, %v1962
        %v2007 = vmul.f32 %v1970, %v1963
        %v2008 = vmul.f32 %v1974, %v1964
        %v2009 = vmul.f32 %v1978, %v1965
        %v2010 = vmul.f32 %v1982, %v1966
        %v2011 = vmul.f32 %v1970, 0.0
        %v2012 = vmul.f32 %v1974, 0.0
        %v2013 = vmul.f32 %v1978, 0.0
        %v2014 = vmul.f32 %v1982, 0.0
        %v2015 = vadd.f32 %v1907, %v1983
        %v2016 = vadd.f32 %v1908, %v1984
        %v2017 = vadd.f32 %v1909, %v1985
        %v2018 = vadd.f32 %v1910, %v1986
        %v2019 = vadd.f32 %v1911, %v1987
        %v2020 = vadd.f32 %v1912, %v1988
        %v2021 = vadd.f32 %v1913, %v1989
        %v2022 = vadd.f32 %v1914, %v1990
        %v2023 = vadd.f32 %v1915, %v1991
        %v2024 = vadd.f32 %v1916, %v1992
        %v2025 = vadd.f32 %v1917, %v1993
        %v2026 = vadd.f32 %v1918, %v1994
        %v2027 = vadd.f32 %v1919, %v1995
        %v2028 = vadd.f32 %v1920, %v1996
        %v2029 = vadd.f32 %v1921, %v1997
        %v2030 = vadd.f32 %v1922, %v1998
        %v2031 = vadd.f32 %v1923, %v1999
        %v2032 = vadd.f32 %v1924, %v2000
        %v2033 = vadd.f32 %v1925, %v2001
        %v2034 = vadd.f32 %v1926, %v2002
        %v2035 = vadd.f32 %v1927, %v2003
        %v2036 = vadd.f32 %v1928, %v2004
        %v2037 = vadd.f32 %v1929, %v2005
        %v2038 = vadd.f32 %v1930, %v2006
        %v2039 = vadd.f32 %v1931, %v2007
        %v2040 = vadd.f32 %v1932, %v2008
        %v2041 = vadd.f32 %v1933, %v2009
        %v2042 = vadd.f32 %v1934, %v2010
        %v2043 = vadd.f32 %v1935, %v2011
        %v2044 = vadd.f32 %v1936, %v2012
        %v2045 = vadd.f32 %v1937, %v2013
        %v2046 = vadd.f32 %v1938, %v2014
        %v2047 = vld [vmem:[%s4] sm:$0xf]
        %v2049 = vlaneseq
        %v2050 = vshrl.u32 %v2049, 7
        %v2051 = vsub.s32 0, %v2050
        %v2052 = vrot.slane %v2047, %v2051
        %v2053 = vlaneseq
        %v2054 = vshrl.u32 %v2053, 7
        %v2055 = vsub.s32 1, %v2054
        %v2056 = vrot.slane %v2047, %v2055
        %v2057 = vlaneseq
        %v2058 = vshrl.u32 %v2057, 7
        %v2059 = vsub.s32 2, %v2058
        %v2060 = vrot.slane %v2047, %v2059
        %v2061 = vlaneseq
        %v2062 = vshrl.u32 %v2061, 7
        %v2063 = vsub.s32 3, %v2062
        %v2064 = vrot.slane %v2047, %v2063
        %v2069 = vadd.f32 %v2015, %v2052
        %v2070 = vadd.f32 %v2016, %v2056
        %v2071 = vadd.f32 %v2017, %v2060
        %v2072 = vadd.f32 %v2018, %v2064
        %v2073 = vadd.f32 %v2019, %v2052
        %v2074 = vadd.f32 %v2020, %v2056
        %v2075 = vadd.f32 %v2021, %v2060
        %v2076 = vadd.f32 %v2022, %v2064
        %v2077 = vadd.f32 %v2023, %v2052
        %v2078 = vadd.f32 %v2024, %v2056
        %v2079 = vadd.f32 %v2025, %v2060
        %v2080 = vadd.f32 %v2026, %v2064
        %v2081 = vadd.f32 %v2027, %v2052
        %v2082 = vadd.f32 %v2028, %v2056
        %v2083 = vadd.f32 %v2029, %v2060
        %v2084 = vadd.f32 %v2030, %v2064
        %v2085 = vadd.f32 %v2031, %v2052
        %v2086 = vadd.f32 %v2032, %v2056
        %v2087 = vadd.f32 %v2033, %v2060
        %v2088 = vadd.f32 %v2034, %v2064
        %v2089 = vadd.f32 %v2035, %v2052
        %v2090 = vadd.f32 %v2036, %v2056
        %v2091 = vadd.f32 %v2037, %v2060
        %v2092 = vadd.f32 %v2038, %v2064
        %v2093 = vadd.f32 %v2039, %v2052
        %v2094 = vadd.f32 %v2040, %v2056
        %v2095 = vadd.f32 %v2041, %v2060
        %v2096 = vadd.f32 %v2042, %v2064
        %v2097 = vadd.f32 %v2043, %v2052
        %v2098 = vadd.f32 %v2044, %v2056
        %v2099 = vadd.f32 %v2045, %v2060
        %v2100 = vadd.f32 %v2046, %v2064
        %v2101 = vadd.f32 %v2069, %v581
        %v2102 = vadd.f32 %v2070, %v583
        %v2103 = vadd.f32 %v2071, %v694
        %v2104 = vadd.f32 %v2072, %v696
        %v2105 = vadd.f32 %v2073, %v587
        %v2106 = vadd.f32 %v2074, %v589
        %v2107 = vadd.f32 %v2075, %v700
        %v2108 = vadd.f32 %v2076, %v702
        %v2109 = vadd.f32 %v2077, %v593
        %v2110 = vadd.f32 %v2078, %v595
        %v2111 = vadd.f32 %v2079, %v706
        %v2112 = vadd.f32 %v2080, %v708
        %v2113 = vadd.f32 %v2081, %v599
        %v2114 = vadd.f32 %v2082, %v601
        %v2115 = vadd.f32 %v2083, %v712
        %v2116 = vadd.f32 %v2084, %v714
        %v2117 = vadd.f32 %v2085, %v605
        %v2118 = vadd.f32 %v2086, %v607
        %v2119 = vadd.f32 %v2087, %v718
        %v2120 = vadd.f32 %v2088, %v720
        %v2121 = vadd.f32 %v2089, %v611
        %v2122 = vadd.f32 %v2090, %v613
        %v2123 = vadd.f32 %v2091, %v724
        %v2124 = vadd.f32 %v2092, %v726
        %v2125 = vadd.f32 %v2093, %v617
        %v2126 = vadd.f32 %v2094, %v619
        %v2127 = vadd.f32 %v2095, %v730
        %v2128 = vadd.f32 %v2096, %v732
        %v2129 = vadd.f32 %v2097, %v623
        %v2130 = vadd.f32 %v2098, %v625
        %v2131 = vadd.f32 %v2099, %v736
        %v2132 = vadd.f32 %v2100, %v738
        %v2133 = vadd.f32 %v2101, %v2102
        %v2134 = vadd.f32 %v2133, %v2103
        %v2135 = vadd.f32 %v2134, %v2104
        %2136 = vadd.xlane.f32.xlu0 %v2135
        %v2137 = vpop.xlane.xlu0 %2136
        %v2138 = vadd.f32 %v2105, %v2106
        %v2139 = vadd.f32 %v2138, %v2107
        %v2140 = vadd.f32 %v2139, %v2108
        %2141 = vadd.xlane.f32.xlu0 %v2140
        %v2142 = vpop.xlane.xlu0 %2141
        %v2143 = vadd.f32 %v2109, %v2110
        %v2144 = vadd.f32 %v2143, %v2111
        %v2145 = vadd.f32 %v2144, %v2112
        %2146 = vadd.xlane.f32.xlu0 %v2145
        %v2147 = vpop.xlane.xlu0 %2146
        %v2148 = vadd.f32 %v2113, %v2114
        %v2149 = vadd.f32 %v2148, %v2115
        %v2150 = vadd.f32 %v2149, %v2116
        %2151 = vadd.xlane.f32.xlu0 %v2150
        %v2152 = vpop.xlane.xlu0 %2151
        %v2153 = vadd.f32 %v2117, %v2118
        %v2154 = vadd.f32 %v2153, %v2119
        %v2155 = vadd.f32 %v2154, %v2120
        %2156 = vadd.xlane.f32.xlu0 %v2155
        %v2157 = vpop.xlane.xlu0 %2156
        %v2158 = vadd.f32 %v2121, %v2122
        %v2159 = vadd.f32 %v2158, %v2123
        %v2160 = vadd.f32 %v2159, %v2124
        %2161 = vadd.xlane.f32.xlu0 %v2160
        %v2162 = vpop.xlane.xlu0 %2161
        %v2163 = vadd.f32 %v2125, %v2126
        %v2164 = vadd.f32 %v2163, %v2127
        %v2165 = vadd.f32 %v2164, %v2128
        %2166 = vadd.xlane.f32.xlu0 %v2165
        %v2167 = vpop.xlane.xlu0 %2166
        %v2168 = vadd.f32 %v2129, %v2130
        %v2169 = vadd.f32 %v2168, %v2131
        %v2170 = vadd.f32 %v2169, %v2132
        %2171 = vadd.xlane.f32.xlu0 %v2170
        %v2172 = vpop.xlane.xlu0 %2171
        %v2173 = vmul.f32 %v2137, 0.001953125
        %v2174 = vmul.f32 %v2142, 0.001953125
        %v2175 = vmul.f32 %v2147, 0.001953125
        %v2176 = vmul.f32 %v2152, 0.001953125
        %v2177 = vmul.f32 %v2157, 0.001953125
        %v2178 = vmul.f32 %v2162, 0.001953125
        %v2179 = vmul.f32 %v2167, 0.001953125
        %v2180 = vmul.f32 %v2172, 0.001953125
        %v2181 = vmul.f32 %v2101, %v2101
        %v2182 = vmul.f32 %v2102, %v2102
        %v2183 = vmul.f32 %v2103, %v2103
        %v2184 = vmul.f32 %v2104, %v2104
        %v2185 = vmul.f32 %v2105, %v2105
        %v2186 = vmul.f32 %v2106, %v2106
        %v2187 = vmul.f32 %v2107, %v2107
        %v2188 = vmul.f32 %v2108, %v2108
        %v2189 = vmul.f32 %v2109, %v2109
        %v2190 = vmul.f32 %v2110, %v2110
        %v2191 = vmul.f32 %v2111, %v2111
        %v2192 = vmul.f32 %v2112, %v2112
        %v2193 = vmul.f32 %v2113, %v2113
        %v2194 = vmul.f32 %v2114, %v2114
        %v2195 = vmul.f32 %v2115, %v2115
        %v2196 = vmul.f32 %v2116, %v2116
        %v2197 = vmul.f32 %v2117, %v2117
        %v2198 = vmul.f32 %v2118, %v2118
        %v2199 = vmul.f32 %v2119, %v2119
        %v2200 = vmul.f32 %v2120, %v2120
        %v2201 = vmul.f32 %v2121, %v2121
        %v2202 = vmul.f32 %v2122, %v2122
        %v2203 = vmul.f32 %v2123, %v2123
        %v2204 = vmul.f32 %v2124, %v2124
        %v2205 = vmul.f32 %v2125, %v2125
        %v2206 = vmul.f32 %v2126, %v2126
        %v2207 = vmul.f32 %v2127, %v2127
        %v2208 = vmul.f32 %v2128, %v2128
        %v2209 = vmul.f32 %v2129, %v2129
        %v2210 = vmul.f32 %v2130, %v2130
        %v2211 = vmul.f32 %v2131, %v2131
        %v2212 = vmul.f32 %v2132, %v2132
        %v2213 = vadd.f32 %v2181, %v2182
        %v2214 = vadd.f32 %v2213, %v2183
        %v2215 = vadd.f32 %v2214, %v2184
        %2216 = vadd.xlane.f32.xlu0 %v2215
        %v2217 = vpop.xlane.xlu0 %2216
        %v2218 = vadd.f32 %v2185, %v2186
        %v2219 = vadd.f32 %v2218, %v2187
        %v2220 = vadd.f32 %v2219, %v2188
        %2221 = vadd.xlane.f32.xlu0 %v2220
        %v2222 = vpop.xlane.xlu0 %2221
        %v2223 = vadd.f32 %v2189, %v2190
        %v2224 = vadd.f32 %v2223, %v2191
        %v2225 = vadd.f32 %v2224, %v2192
        %2226 = vadd.xlane.f32.xlu0 %v2225
        %v2227 = vpop.xlane.xlu0 %2226
        %v2228 = vadd.f32 %v2193, %v2194
        %v2229 = vadd.f32 %v2228, %v2195
        %v2230 = vadd.f32 %v2229, %v2196
        %2231 = vadd.xlane.f32.xlu0 %v2230
        %v2232 = vpop.xlane.xlu0 %2231
        %v2233 = vadd.f32 %v2197, %v2198
        %v2234 = vadd.f32 %v2233, %v2199
        %v2235 = vadd.f32 %v2234, %v2200
        %2236 = vadd.xlane.f32.xlu0 %v2235
        %v2237 = vpop.xlane.xlu0 %2236
        %v2238 = vadd.f32 %v2201, %v2202
        %v2239 = vadd.f32 %v2238, %v2203
        %v2240 = vadd.f32 %v2239, %v2204
        %2241 = vadd.xlane.f32.xlu0 %v2240
        %v2242 = vpop.xlane.xlu0 %2241
        %v2243 = vadd.f32 %v2205, %v2206
        %v2244 = vadd.f32 %v2243, %v2207
        %v2245 = vadd.f32 %v2244, %v2208
        %2246 = vadd.xlane.f32.xlu0 %v2245
        %v2247 = vpop.xlane.xlu0 %2246
        %v2248 = vadd.f32 %v2209, %v2210
        %v2249 = vadd.f32 %v2248, %v2211
        %v2250 = vadd.f32 %v2249, %v2212
        %2251 = vadd.xlane.f32.xlu0 %v2250
        %v2252 = vpop.xlane.xlu0 %2251
        %v2253 = vmul.f32 %v2217, 0.001953125
        %v2254 = vmul.f32 %v2222, 0.001953125
        %v2255 = vmul.f32 %v2227, 0.001953125
        %v2256 = vmul.f32 %v2232, 0.001953125
        %v2257 = vmul.f32 %v2237, 0.001953125
        %v2258 = vmul.f32 %v2242, 0.001953125
        %v2259 = vmul.f32 %v2247, 0.001953125
        %v2260 = vmul.f32 %v2252, 0.001953125
        %v2261 = vmul.f32 %v2173, %v2173
        %v2262 = vmul.f32 %v2174, %v2174
        %v2263 = vmul.f32 %v2175, %v2175
        %v2264 = vmul.f32 %v2176, %v2176
        %v2265 = vmul.f32 %v2177, %v2177
        %v2266 = vmul.f32 %v2178, %v2178
        %v2267 = vmul.f32 %v2179, %v2179
        %v2268 = vmul.f32 %v2180, %v2180
        %v2269 = vsub.f32 %v2253, %v2261
        %v2270 = vsub.f32 %v2254, %v2262
        %v2271 = vsub.f32 %v2255, %v2263
        %v2272 = vsub.f32 %v2256, %v2264
        %v2273 = vsub.f32 %v2257, %v2265
        %v2274 = vsub.f32 %v2258, %v2266
        %v2275 = vsub.f32 %v2259, %v2267
        %v2276 = vsub.f32 %v2260, %v2268
        %v2277 = vsub.f32 %v2101, %v2173
        %v2278 = vsub.f32 %v2102, %v2173
        %v2279 = vsub.f32 %v2103, %v2173
        %v2280 = vsub.f32 %v2104, %v2173
        %v2281 = vsub.f32 %v2105, %v2174
        %v2282 = vsub.f32 %v2106, %v2174
        %v2283 = vsub.f32 %v2107, %v2174
        %v2284 = vsub.f32 %v2108, %v2174
        %v2285 = vsub.f32 %v2109, %v2175
        %v2286 = vsub.f32 %v2110, %v2175
        %v2287 = vsub.f32 %v2111, %v2175
        %v2288 = vsub.f32 %v2112, %v2175
        %v2289 = vsub.f32 %v2113, %v2176
        %v2290 = vsub.f32 %v2114, %v2176
        %v2291 = vsub.f32 %v2115, %v2176
        %v2292 = vsub.f32 %v2116, %v2176
        %v2293 = vsub.f32 %v2117, %v2177
        %v2294 = vsub.f32 %v2118, %v2177
        %v2295 = vsub.f32 %v2119, %v2177
        %v2296 = vsub.f32 %v2120, %v2177
        %v2297 = vsub.f32 %v2121, %v2178
        %v2298 = vsub.f32 %v2122, %v2178
        %v2299 = vsub.f32 %v2123, %v2178
        %v2300 = vsub.f32 %v2124, %v2178
        %v2301 = vsub.f32 %v2125, %v2179
        %v2302 = vsub.f32 %v2126, %v2179
        %v2303 = vsub.f32 %v2127, %v2179
        %v2304 = vsub.f32 %v2128, %v2179
        %v2305 = vsub.f32 %v2129, %v2180
        %v2306 = vsub.f32 %v2130, %v2180
        %v2307 = vsub.f32 %v2131, %v2180
        %v2308 = vsub.f32 %v2132, %v2180
        %v2309 = vadd.f32 %v2269, 1e-05
        %v2310 = vadd.f32 %v2270, 1e-05
        %v2311 = vadd.f32 %v2271, 1e-05
        %v2312 = vadd.f32 %v2272, 1e-05
        %v2313 = vadd.f32 %v2273, 1e-05
        %v2314 = vadd.f32 %v2274, 1e-05
        %v2315 = vadd.f32 %v2275, 1e-05
        %v2316 = vadd.f32 %v2276, 1e-05
        %v2317 = vrsqrt.pop %v2309
        %v2318 = vrsqrt.pop %v2310
        %v2319 = vrsqrt.pop %v2311
        %v2320 = vrsqrt.pop %v2312
        %v2321 = vrsqrt.pop %v2313
        %v2322 = vrsqrt.pop %v2314
        %v2323 = vrsqrt.pop %v2315
        %v2324 = vrsqrt.pop %v2316
        %v2325 = vmul.f32 %v2277, %v2317
        %v2326 = vmul.f32 %v2278, %v2317
        %v2327 = vmul.f32 %v2279, %v2317
        %v2328 = vmul.f32 %v2280, %v2317
        %v2329 = vmul.f32 %v2281, %v2318
        %v2330 = vmul.f32 %v2282, %v2318
        %v2331 = vmul.f32 %v2283, %v2318
        %v2332 = vmul.f32 %v2284, %v2318
        %v2333 = vmul.f32 %v2285, %v2319
        %v2334 = vmul.f32 %v2286, %v2319
        %v2335 = vmul.f32 %v2287, %v2319
        %v2336 = vmul.f32 %v2288, %v2319
        %v2337 = vmul.f32 %v2289, %v2320
        %v2338 = vmul.f32 %v2290, %v2320
        %v2339 = vmul.f32 %v2291, %v2320
        %v2340 = vmul.f32 %v2292, %v2320
        %v2341 = vmul.f32 %v2293, %v2321
        %v2342 = vmul.f32 %v2294, %v2321
        %v2343 = vmul.f32 %v2295, %v2321
        %v2344 = vmul.f32 %v2296, %v2321
        %v2345 = vmul.f32 %v2297, %v2322
        %v2346 = vmul.f32 %v2298, %v2322
        %v2347 = vmul.f32 %v2299, %v2322
        %v2348 = vmul.f32 %v2300, %v2322
        %v2349 = vmul.f32 %v2301, %v2323
        %v2350 = vmul.f32 %v2302, %v2323
        %v2351 = vmul.f32 %v2303, %v2323
        %v2352 = vmul.f32 %v2304, %v2323
        %v2353 = vmul.f32 %v2305, %v2324
        %v2354 = vmul.f32 %v2306, %v2324
        %v2355 = vmul.f32 %v2307, %v2324
        %v2356 = vmul.f32 %v2308, %v2324
        %v2357 = vld [vmem:[%s5] sm:$0xf]
        %v2359 = vlaneseq
        %v2360 = vshrl.u32 %v2359, 7
        %v2361 = vsub.s32 0, %v2360
        %v2362 = vrot.slane %v2357, %v2361
        %v2363 = vlaneseq
        %v2364 = vshrl.u32 %v2363, 7
        %v2365 = vsub.s32 1, %v2364
        %v2366 = vrot.slane %v2357, %v2365
        %v2367 = vlaneseq
        %v2368 = vshrl.u32 %v2367, 7
        %v2369 = vsub.s32 2, %v2368
        %v2370 = vrot.slane %v2357, %v2369
        %v2371 = vlaneseq
        %v2372 = vshrl.u32 %v2371, 7
        %v2373 = vsub.s32 3, %v2372
        %v2374 = vrot.slane %v2357, %v2373
        %v2379 = vmul.f32 %v2325, %v2362
        %v2380 = vmul.f32 %v2326, %v2366
        %v2381 = vmul.f32 %v2327, %v2370
        %v2382 = vmul.f32 %v2328, %v2374
        %v2383 = vmul.f32 %v2329, %v2362
        %v2384 = vmul.f32 %v2330, %v2366
        %v2385 = vmul.f32 %v2331, %v2370
        %v2386 = vmul.f32 %v2332, %v2374
        %v2387 = vmul.f32 %v2333, %v2362
        %v2388 = vmul.f32 %v2334, %v2366
        %v2389 = vmul.f32 %v2335, %v2370
        %v2390 = vmul.f32 %v2336, %v2374
        %v2391 = vmul.f32 %v2337, %v2362
        %v2392 = vmul.f32 %v2338, %v2366
        %v2393 = vmul.f32 %v2339, %v2370
        %v2394 = vmul.f32 %v2340, %v2374
        %v2395 = vmul.f32 %v2341, %v2362
        %v2396 = vmul.f32 %v2342, %v2366
        %v2397 = vmul.f32 %v2343, %v2370
        %v2398 = vmul.f32 %v2344, %v2374
        %v2399 = vmul.f32 %v2345, %v2362
        %v2400 = vmul.f32 %v2346, %v2366
        %v2401 = vmul.f32 %v2347, %v2370
        %v2402 = vmul.f32 %v2348, %v2374
        %v2403 = vmul.f32 %v2349, %v2362
        %v2404 = vmul.f32 %v2350, %v2366
        %v2405 = vmul.f32 %v2351, %v2370
        %v2406 = vmul.f32 %v2352, %v2374
        %v2407 = vmul.f32 %v2353, %v2362
        %v2408 = vmul.f32 %v2354, %v2366
        %v2409 = vmul.f32 %v2355, %v2370
        %v2410 = vmul.f32 %v2356, %v2374
        %v2411 = vld [vmem:[#allocation10] sm:$0xf]
        %v2413 = vlaneseq
        %v2414 = vshrl.u32 %v2413, 7
        %v2415 = vsub.s32 0, %v2414
        %v2416 = vrot.slane %v2411, %v2415
        %v2417 = vlaneseq
        %v2418 = vshrl.u32 %v2417, 7
        %v2419 = vsub.s32 1, %v2418
        %v2420 = vrot.slane %v2411, %v2419
        %v2421 = vlaneseq
        %v2422 = vshrl.u32 %v2421, 7
        %v2423 = vsub.s32 2, %v2422
        %v2424 = vrot.slane %v2411, %v2423
        %v2425 = vlaneseq
        %v2426 = vshrl.u32 %v2425, 7
        %v2427 = vsub.s32 3, %v2426
        %v2428 = vrot.slane %v2411, %v2427
        %v2433 = vadd.f32 %v2379, %v2416
        %v2434 = vadd.f32 %v2380, %v2420
        %v2435 = vadd.f32 %v2381, %v2424
        %v2436 = vadd.f32 %v2382, %v2428
        %v2437 = vadd.f32 %v2383, %v2416
        %v2438 = vadd.f32 %v2384, %v2420
        %v2439 = vadd.f32 %v2385, %v2424
        %v2440 = vadd.f32 %v2386, %v2428
        %v2441 = vadd.f32 %v2387, %v2416
        %v2442 = vadd.f32 %v2388, %v2420
        %v2443 = vadd.f32 %v2389, %v2424
        %v2444 = vadd.f32 %v2390, %v2428
        %v2445 = vadd.f32 %v2391, %v2416
        %v2446 = vadd.f32 %v2392, %v2420
        %v2447 = vadd.f32 %v2393, %v2424
        %v2448 = vadd.f32 %v2394, %v2428
        %v2449 = vadd.f32 %v2395, %v2416
        %v2450 = vadd.f32 %v2396, %v2420
        %v2451 = vadd.f32 %v2397, %v2424
        %v2452 = vadd.f32 %v2398, %v2428
        %v2453 = vadd.f32 %v2399, %v2416
        %v2454 = vadd.f32 %v2400, %v2420
        %v2455 = vadd.f32 %v2401, %v2424
        %v2456 = vadd.f32 %v2402, %v2428
        %v2457 = vadd.f32 %v2403, %v2416
        %v2458 = vadd.f32 %v2404, %v2420
        %v2459 = vadd.f32 %v2405, %v2424
        %v2460 = vadd.f32 %v2406, %v2428
        %v2461 = vadd.f32 %v2407, %v2416
        %v2462 = vadd.f32 %v2408, %v2420
        %v2463 = vadd.f32 %v2409, %v2424
        %v2464 = vadd.f32 %v2410, %v2428
        %v2465 = vmul.f32 %v2433, 0.5
        %v2466 = vmul.f32 %v2434, 0.5
        %v2467 = vmul.f32 %v2435, 0.5
        %v2468 = vmul.f32 %v2436, 0.5
        %v2469 = vmul.f32 %v2437, 0.5
        %v2470 = vmul.f32 %v2438, 0.5
        %v2471 = vmul.f32 %v2439, 0.5
        %v2472 = vmul.f32 %v2440, 0.5
        %v2473 = vmul.f32 %v2441, 0.5
        %v2474 = vmul.f32 %v2442, 0.5
        %v2475 = vmul.f32 %v2443, 0.5
        %v2476 = vmul.f32 %v2444, 0.5
        %v2477 = vmul.f32 %v2445, 0.5
        %v2478 = vmul.f32 %v2446, 0.5
        %v2479 = vmul.f32 %v2447, 0.5
        %v2480 = vmul.f32 %v2448, 0.5
        %v2481 = vmul.f32 %v2449, 0.5
        %v2482 = vmul.f32 %v2450, 0.5
        %v2483 = vmul.f32 %v2451, 0.5
        %v2484 = vmul.f32 %v2452, 0.5
        %v2485 = vmul.f32 %v2453, 0.5
        %v2486 = vmul.f32 %v2454, 0.5
        %v2487 = vmul.f32 %v2455, 0.5
        %v2488 = vmul.f32 %v2456, 0.5
        %v2489 = vmul.f32 %v2457, 0.5
        %v2490 = vmul.f32 %v2458, 0.5
        %v2491 = vmul.f32 %v2459, 0.5
        %v2492 = vmul.f32 %v2460, 0.5
        %v2493 = vmul.f32 %v2461, 0.5
        %v2494 = vmul.f32 %v2462, 0.5
        %v2495 = vmul.f32 %v2463, 0.5
        %v2496 = vmul.f32 %v2464, 0.5
        %v2497 = vmul.f32 %v2433, 0.70710677
        %v2498 = vmul.f32 %v2434, 0.70710677
        %v2499 = vmul.f32 %v2435, 0.70710677
        %v2500 = vmul.f32 %v2436, 0.70710677
        %v2501 = vmul.f32 %v2437, 0.70710677
        %v2502 = vmul.f32 %v2438, 0.70710677
        %v2503 = vmul.f32 %v2439, 0.70710677
        %v2504 = vmul.f32 %v2440, 0.70710677
        %v2505 = vmul.f32 %v2441, 0.70710677
        %v2506 = vmul.f32 %v2442, 0.70710677
        %v2507 = vmul.f32 %v2443, 0.70710677
        %v2508 = vmul.f32 %v2444, 0.70710677
        %v2509 = vmul.f32 %v2445, 0.70710677
        %v2510 = vmul.f32 %v2446, 0.70710677
        %v2511 = vmul.f32 %v2447, 0.70710677
        %v2512 = vmul.f32 %v2448, 0.70710677
        %v2513 = vmul.f32 %v2449, 0.70710677
        %v2514 = vmul.f32 %v2450, 0.70710677
        %v2515 = vmul.f32 %v2451, 0.70710677
        %v2516 = vmul.f32 %v2452, 0.70710677
        %v2517 = vmul.f32 %v2453, 0.70710677
        %v2518 = vmul.f32 %v2454, 0.70710677
        %v2519 = vmul.f32 %v2455, 0.70710677
        %v2520 = vmul.f32 %v2456, 0.70710677
        %v2521 = vmul.f32 %v2457, 0.70710677
        %v2522 = vmul.f32 %v2458, 0.70710677
        %v2523 = vmul.f32 %v2459, 0.70710677
        %v2524 = vmul.f32 %v2460, 0.70710677
        %v2525 = vmul.f32 %v2461, 0.70710677
        %v2526 = vmul.f32 %v2462, 0.70710677
        %v2527 = vmul.f32 %v2463, 0.70710677
        %v2528 = vmul.f32 %v2464, 0.70710677
        %v2529 = verf.f32.pop %v2497
        %v2530 = verf.f32.pop %v2498
        %v2531 = verf.f32.pop %v2499
        %v2532 = verf.f32.pop %v2500
        %v2533 = verf.f32.pop %v2501
        %v2534 = verf.f32.pop %v2502
        %v2535 = verf.f32.pop %v2503
        %v2536 = verf.f32.pop %v2504
        %v2537 = verf.f32.pop %v2505
        %v2538 = verf.f32.pop %v2506
        %v2539 = verf.f32.pop %v2507
        %v2540 = verf.f32.pop %v2508
        %v2541 = verf.f32.pop %v2509
        %v2542 = verf.f32.pop %v2510
        %v2543 = verf.f32.pop %v2511
        %v2544 = verf.f32.pop %v2512
        %v2545 = verf.f32.pop %v2513
        %v2546 = verf.f32.pop %v2514
        %v2547 = verf.f32.pop %v2515
        %v2548 = verf.f32.pop %v2516
        %v2549 = verf.f32.pop %v2517
        %v2550 = verf.f32.pop %v2518
        %v2551 = verf.f32.pop %v2519
        %v2552 = verf.f32.pop %v2520
        %v2553 = verf.f32.pop %v2521
        %v2554 = verf.f32.pop %v2522
        %v2555 = verf.f32.pop %v2523
        %v2556 = verf.f32.pop %v2524
        %v2557 = verf.f32.pop %v2525
        %v2558 = verf.f32.pop %v2526
        %v2559 = verf.f32.pop %v2527
        %v2560 = verf.f32.pop %v2528
        %v2561 = vadd.f32 %v2529, 1.0
        %v2562 = vadd.f32 %v2530, 1.0
        %v2563 = vadd.f32 %v2531, 1.0
        %v2564 = vadd.f32 %v2532, 1.0
        %v2565 = vadd.f32 %v2533, 1.0
        %v2566 = vadd.f32 %v2534, 1.0
        %v2567 = vadd.f32 %v2535, 1.0
        %v2568 = vadd.f32 %v2536, 1.0
        %v2569 = vadd.f32 %v2537, 1.0
        %v2570 = vadd.f32 %v2538, 1.0
        %v2571 = vadd.f32 %v2539, 1.0
        %v2572 = vadd.f32 %v2540, 1.0
        %v2573 = vadd.f32 %v2541, 1.0
        %v2574 = vadd.f32 %v2542, 1.0
        %v2575 = vadd.f32 %v2543, 1.0
        %v2576 = vadd.f32 %v2544, 1.0
        %v2577 = vadd.f32 %v2545, 1.0
        %v2578 = vadd.f32 %v2546, 1.0
        %v2579 = vadd.f32 %v2547, 1.0
        %v2580 = vadd.f32 %v2548, 1.0
        %v2581 = vadd.f32 %v2549, 1.0
        %v2582 = vadd.f32 %v2550, 1.0
        %v2583 = vadd.f32 %v2551, 1.0
        %v2584 = vadd.f32 %v2552, 1.0
        %v2585 = vadd.f32 %v2553, 1.0
        %v2586 = vadd.f32 %v2554, 1.0
        %v2587 = vadd.f32 %v2555, 1.0
        %v2588 = vadd.f32 %v2556, 1.0
        %v2589 = vadd.f32 %v2557, 1.0
        %v2590 = vadd.f32 %v2558, 1.0
        %v2591 = vadd.f32 %v2559, 1.0
        %v2592 = vadd.f32 %v2560, 1.0
        %v2593 = vmul.f32 %v2465, %v2561
        %v2594 = vmul.f32 %v2466, %v2562
        %v2595 = vmul.f32 %v2467, %v2563
        %v2596 = vmul.f32 %v2468, %v2564
        %v2597 = vmul.f32 %v2469, %v2565
        %v2598 = vmul.f32 %v2470, %v2566
        %v2599 = vmul.f32 %v2471, %v2567
        %v2600 = vmul.f32 %v2472, %v2568
        %v2601 = vmul.f32 %v2473, %v2569
        %v2602 = vmul.f32 %v2474, %v2570
        %v2603 = vmul.f32 %v2475, %v2571
        %v2604 = vmul.f32 %v2476, %v2572
        %v2605 = vmul.f32 %v2477, %v2573
        %v2606 = vmul.f32 %v2478, %v2574
        %v2607 = vmul.f32 %v2479, %v2575
        %v2608 = vmul.f32 %v2480, %v2576
        %v2609 = vmul.f32 %v2481, %v2577
        %v2610 = vmul.f32 %v2482, %v2578
        %v2611 = vmul.f32 %v2483, %v2579
        %v2612 = vmul.f32 %v2484, %v2580
        %v2613 = vmul.f32 %v2485, %v2581
        %v2614 = vmul.f32 %v2486, %v2582
        %v2615 = vmul.f32 %v2487, %v2583
        %v2616 = vmul.f32 %v2488, %v2584
        %v2617 = vmul.f32 %v2489, %v2585
        %v2618 = vmul.f32 %v2490, %v2586
        %v2619 = vmul.f32 %v2491, %v2587
        %v2620 = vmul.f32 %v2492, %v2588
        %v2621 = vmul.f32 %v2493, %v2589
        %v2622 = vmul.f32 %v2494, %v2590
        %v2623 = vmul.f32 %v2495, %v2591
        %v2624 = vmul.f32 %v2496, %v2592
        %v2625 = vld [vmem:[#allocation11] sm:$0xff]
        %v2626 = vld [vmem:[#allocation11 + $0x8] sm:$0xff]
        %v2627 = vld [vmem:[#allocation11 + $0x10] sm:$0xff]
        %v2628 = vld [vmem:[#allocation11 + $0x18] sm:$0xff]
        %v2629 = vld [vmem:[#allocation11 + $0x20] sm:$0xff]
        %v2630 = vld [vmem:[#allocation11 + $0x28] sm:$0xff]
        %v2631 = vld [vmem:[#allocation11 + $0x30] sm:$0xff]
        %v2632 = vld [vmem:[#allocation11 + $0x38] sm:$0xff]
        %v2633 = vld [vmem:[#allocation11 + $0x40] sm:$0xff]
        %v2634 = vld [vmem:[#allocation11 + $0x48] sm:$0xff]
        %v2635 = vld [vmem:[#allocation11 + $0x50] sm:$0xff]
        %v2636 = vld [vmem:[#allocation11 + $0x58] sm:$0xff]
        %v2637 = vld [vmem:[#allocation11 + $0x60] sm:$0xff]
        %v2638 = vld [vmem:[#allocation11 + $0x68] sm:$0xff]
        %v2639 = vld [vmem:[#allocation11 + $0x70] sm:$0xff]
        %v2640 = vld [vmem:[#allocation11 + $0x78] sm:$0xff]
        %v2641 = vld [vmem:[#allocation11 + $0x80] sm:$0xff]
        %v2642 = vld [vmem:[#allocation11 + $0x88] sm:$0xff]
        %v2643 = vld [vmem:[#allocation11 + $0x90] sm:$0xff]
        %v2644 = vld [vmem:[#allocation11 + $0x98] sm:$0xff]
        %v2645 = vld [vmem:[#allocation11 + $0xa0] sm:$0xff]
        %v2646 = vld [vmem:[#allocation11 + $0xa8] sm:$0xff]
        %v2647 = vld [vmem:[#allocation11 + $0xb0] sm:$0xff]
        %v2648 = vld [vmem:[#allocation11 + $0xb8] sm:$0xff]
        %v2649 = vld [vmem:[#allocation11 + $0xc0] sm:$0xff]
        %v2650 = vld [vmem:[#allocation11 + $0xc8] sm:$0xff]
        %v2651 = vld [vmem:[#allocation11 + $0xd0] sm:$0xff]
        %v2652 = vld [vmem:[#allocation11 + $0xd8] sm:$0xff]
        %v2653 = vld [vmem:[#allocation11 + $0xe0] sm:$0xff]
        %v2654 = vld [vmem:[#allocation11 + $0xe8] sm:$0xff]
        %v2655 = vld [vmem:[#allocation11 + $0xf0] sm:$0xff]
        %v2656 = vld [vmem:[#allocation11 + $0xf8] sm:$0xff]
        %v2657 = vld [vmem:[#allocation11 + $0x100] sm:$0xff]
        %v2658 = vld [vmem:[#allocation11 + $0x108] sm:$0xff]
        %v2659 = vld [vmem:[#allocation11 + $0x110] sm:$0xff]
        %v2660 = vld [vmem:[#allocation11 + $0x118] sm:$0xff]
        %v2661 = vld [vmem:[#allocation11 + $0x120] sm:$0xff]
        %v2662 = vld [vmem:[#allocation11 + $0x128] sm:$0xff]
        %v2663 = vld [vmem:[#allocation11 + $0x130] sm:$0xff]
        %v2664 = vld [vmem:[#allocation11 + $0x138] sm:$0xff]
        %v2665 = vld [vmem:[#allocation11 + $0x140] sm:$0xff]
        %v2666 = vld [vmem:[#allocation11 + $0x148] sm:$0xff]
        %v2667 = vld [vmem:[#allocation11 + $0x150] sm:$0xff]
        %v2668 = vld [vmem:[#allocation11 + $0x158] sm:$0xff]
        %v2669 = vld [vmem:[#allocation11 + $0x160] sm:$0xff]
        %v2670 = vld [vmem:[#allocation11 + $0x168] sm:$0xff]
        %v2671 = vld [vmem:[#allocation11 + $0x170] sm:$0xff]
        %v2672 = vld [vmem:[#allocation11 + $0x178] sm:$0xff]
        %v2673 = vld [vmem:[#allocation11 + $0x180] sm:$0xff]
        %v2674 = vld [vmem:[#allocation11 + $0x188] sm:$0xff]
        %v2675 = vld [vmem:[#allocation11 + $0x190] sm:$0xff]
        %v2676 = vld [vmem:[#allocation11 + $0x198] sm:$0xff]
        %v2677 = vld [vmem:[#allocation11 + $0x1a0] sm:$0xff]
        %v2678 = vld [vmem:[#allocation11 + $0x1a8] sm:$0xff]
        %v2679 = vld [vmem:[#allocation11 + $0x1b0] sm:$0xff]
        %v2680 = vld [vmem:[#allocation11 + $0x1b8] sm:$0xff]
        %v2681 = vld [vmem:[#allocation11 + $0x1c0] sm:$0xff]
        %v2682 = vld [vmem:[#allocation11 + $0x1c8] sm:$0xff]
        %v2683 = vld [vmem:[#allocation11 + $0x1d0] sm:$0xff]
        %v2684 = vld [vmem:[#allocation11 + $0x1d8] sm:$0xff]
        %v2685 = vld [vmem:[#allocation11 + $0x1e0] sm:$0xff]
        %v2686 = vld [vmem:[#allocation11 + $0x1e8] sm:$0xff]
        %v2687 = vld [vmem:[#allocation11 + $0x1f0] sm:$0xff]
        %v2688 = vld [vmem:[#allocation11 + $0x1f8] sm:$0xff]
        %v2689 = vld [vmem:[%s8] sm:$0x1]
        %v2691 = vlaneseq
        %v2692 = vshrl.u32 %v2691, 7
        %v2693 = vsub.s32 0, %v2692
        %v2694 = vrot.slane %v2689, %v2693
        %2696 = vmatprep.subr.mxu0 0.0
        %2697 = vmatpush1.msra.mxu0 %v2640
        %2698 = vmatprep.subr.mxu0 0.0
        %2699 = vmatpush1.msra.mxu0 %v2639
        %2700 = vmatprep.subr.mxu0 0.0
        %2701 = vmatpush1.msra.mxu0 %v2638
        %2702 = vmatprep.subr.mxu0 0.0
        %2703 = vmatpush1.msra.mxu0 %v2637
        %2704 = vmatprep.subr.mxu0 0.0
        %2705 = vmatpush1.msra.mxu0 %v2636
        %2706 = vmatprep.subr.mxu0 0.0
        %2707 = vmatpush1.msra.mxu0 %v2635
        %2708 = vmatprep.subr.mxu0 0.0
        %2709 = vmatpush1.msra.mxu0 %v2634
        %2710 = vmatprep.subr.mxu0 0.0
        %2711 = vmatpush1.msra.mxu0 %v2633
        %2712 = vmatprep.subr.mxu0 0.0
        %2713 = vmatpush1.msra.mxu0 %v2632
        %2714 = vmatprep.subr.mxu0 0.0
        %2715 = vmatpush1.msra.mxu0 %v2631
        %2716 = vmatprep.subr.mxu0 0.0
        %2717 = vmatpush1.msra.mxu0 %v2630
        %2718 = vmatprep.subr.mxu0 0.0
        %2719 = vmatpush1.msra.mxu0 %v2629
        %2720 = vmatprep.subr.mxu0 0.0
        %2721 = vmatpush1.msra.mxu0 %v2628
        %2722 = vmatprep.subr.mxu0 0.0
        %2723 = vmatpush1.msra.mxu0 %v2627
        %2724 = vmatprep.subr.mxu0 0.0
        %2725 = vmatpush1.msra.mxu0 %v2626
        %2726 = vmatprep.subr.mxu0 0.0
        %2727 = vmatpush1.msra.mxu0 %v2625
        %2728 = vmatprep.subr.mxu0 0.0
        %2729 = vmatpush2.msra.mxu0 %v2656
        %2730 = vmatprep.subr.mxu0 0.0
        %2731 = vmatpush2.msra.mxu0 %v2655
        %2732 = vmatprep.subr.mxu0 0.0
        %2733 = vmatpush2.msra.mxu0 %v2654
        %2734 = vmatprep.subr.mxu0 0.0
        %2735 = vmatpush2.msra.mxu0 %v2653
        %2736 = vmatprep.subr.mxu0 0.0
        %2737 = vmatpush2.msra.mxu0 %v2652
        %2738 = vmatprep.subr.mxu0 0.0
        %2739 = vmatpush2.msra.mxu0 %v2651
        %2740 = vmatprep.subr.mxu0 0.0
        %2741 = vmatpush2.msra.mxu0 %v2650
        %2742 = vmatprep.subr.mxu0 0.0
        %2743 = vmatpush2.msra.mxu0 %v2649
        %2744 = vmatprep.subr.mxu0 0.0
        %2745 = vmatpush2.msra.mxu0 %v2648
        %2746 = vmatprep.subr.mxu0 0.0
        %2747 = vmatpush2.msra.mxu0 %v2647
        %2748 = vmatprep.subr.mxu0 0.0
        %2749 = vmatpush2.msra.mxu0 %v2646
        %2750 = vmatprep.subr.mxu0 0.0
        %2751 = vmatpush2.msra.mxu0 %v2645
        %2752 = vmatprep.subr.mxu0 0.0
        %2753 = vmatpush2.msra.mxu0 %v2644
        %2754 = vmatprep.subr.mxu0 0.0
        %2755 = vmatpush2.msra.mxu0 %v2643
        %2756 = vmatprep.subr.mxu0 0.0
        %2757 = vmatpush2.msra.mxu0 %v2642
        %2758 = vmatprep.subr.mxu0 0.0
        %2759 = vmatpush2.msra.mxu0 %v2641
        %2760 = vmatprep.mubr.f32.mxu0 %v2594
        %2761 = vmatmul.mubr.f32.gmra.mxu0 %v2593
        %v2762 = vpop.f32.mrf.mxu0
        %v2763 = vadd.f32 %v2694, %v2762
        %v2764 = vpop.f32.mrf.mxu0
        %2765 = vmatprep.mubr.f32.mxu0 %v2598
        %2766 = vmatmul.mubr.f32.gmra.mxu0 %v2597
        %v2767 = vpop.f32.mrf.mxu0
        %v2768 = vadd.f32 %v2694, %v2767
        %v2769 = vpop.f32.mrf.mxu0
        %2770 = vmatprep.mubr.f32.mxu0 %v2602
        %2771 = vmatmul.mubr.f32.gmra.mxu0 %v2601
        %v2772 = vpop.f32.mrf.mxu0
        %v2773 = vadd.f32 %v2694, %v2772
        %v2774 = vpop.f32.mrf.mxu0
        %2775 = vmatprep.mubr.f32.mxu0 %v2606
        %2776 = vmatmul.mubr.f32.gmra.mxu0 %v2605
        %v2777 = vpop.f32.mrf.mxu0
        %v2778 = vadd.f32 %v2694, %v2777
        %v2779 = vpop.f32.mrf.mxu0
        %2780 = vmatprep.mubr.f32.mxu0 %v2610
        %2781 = vmatmul.mubr.f32.gmra.mxu0 %v2609
        %v2782 = vpop.f32.mrf.mxu0
        %v2783 = vadd.f32 %v2694, %v2782
        %v2784 = vpop.f32.mrf.mxu0
        %2785 = vmatprep.mubr.f32.mxu0 %v2614
        %2786 = vmatmul.mubr.f32.gmra.mxu0 %v2613
        %v2787 = vpop.f32.mrf.mxu0
        %v2788 = vadd.f32 %v2694, %v2787
        %v2789 = vpop.f32.mrf.mxu0
        %2790 = vmatprep.mubr.f32.mxu0 %v2618
        %2791 = vmatmul.mubr.f32.gmra.mxu0 %v2617
        %v2792 = vpop.f32.mrf.mxu0
        %v2793 = vadd.f32 %v2694, %v2792
        %v2794 = vpop.f32.mrf.mxu0
        %2795 = vmatprep.mubr.f32.mxu0 %v2622
        %2796 = vmatmul.mubr.f32.gmra.mxu0 %v2621
        %v2797 = vpop.f32.mrf.mxu0
        %v2798 = vadd.f32 %v2694, %v2797
        %v2799 = vpop.f32.mrf.mxu0
        %2800 = vdwg.mxu0
        %2801 = vmatprep.subr.mxu0 0.0
        %2802 = vmatpush1.msra.mxu0 %v2672
        %2803 = vmatprep.subr.mxu0 0.0
        %2804 = vmatpush1.msra.mxu0 %v2671
        %2805 = vmatprep.subr.mxu0 0.0
        %2806 = vmatpush1.msra.mxu0 %v2670
        %2807 = vmatprep.subr.mxu0 0.0
        %2808 = vmatpush1.msra.mxu0 %v2669
        %2809 = vmatprep.subr.mxu0 0.0
        %2810 = vmatpush1.msra.mxu0 %v2668
        %2811 = vmatprep.subr.mxu0 0.0
        %2812 = vmatpush1.msra.mxu0 %v2667
        %2813 = vmatprep.subr.mxu0 0.0
        %2814 = vmatpush1.msra.mxu0 %v2666
        %2815 = vmatprep.subr.mxu0 0.0
        %2816 = vmatpush1.msra.mxu0 %v2665
        %2817 = vmatprep.subr.mxu0 0.0
        %2818 = vmatpush1.msra.mxu0 %v2664
        %2819 = vmatprep.subr.mxu0 0.0
        %2820 = vmatpush1.msra.mxu0 %v2663
        %2821 = vmatprep.subr.mxu0 0.0
        %2822 = vmatpush1.msra.mxu0 %v2662
        %2823 = vmatprep.subr.mxu0 0.0
        %2824 = vmatpush1.msra.mxu0 %v2661
        %2825 = vmatprep.subr.mxu0 0.0
        %2826 = vmatpush1.msra.mxu0 %v2660
        %2827 = vmatprep.subr.mxu0 0.0
        %2828 = vmatpush1.msra.mxu0 %v2659
        %2829 = vmatprep.subr.mxu0 0.0
        %2830 = vmatpush1.msra.mxu0 %v2658
        %2831 = vmatprep.subr.mxu0 0.0
        %2832 = vmatpush1.msra.mxu0 %v2657
        %2833 = vmatprep.subr.mxu0 0.0
        %2834 = vmatpush2.msra.mxu0 %v2688
        %2835 = vmatprep.subr.mxu0 0.0
        %2836 = vmatpush2.msra.mxu0 %v2687
        %2837 = vmatprep.subr.mxu0 0.0
        %2838 = vmatpush2.msra.mxu0 %v2686
        %2839 = vmatprep.subr.mxu0 0.0
        %2840 = vmatpush2.msra.mxu0 %v2685
        %2841 = vmatprep.subr.mxu0 0.0
        %2842 = vmatpush2.msra.mxu0 %v2684
        %2843 = vmatprep.subr.mxu0 0.0
        %2844 = vmatpush2.msra.mxu0 %v2683
        %2845 = vmatprep.subr.mxu0 0.0
        %2846 = vmatpush2.msra.mxu0 %v2682
        %2847 = vmatprep.subr.mxu0 0.0
        %2848 = vmatpush2.msra.mxu0 %v2681
        %2849 = vmatprep.subr.mxu0 0.0
        %2850 = vmatpush2.msra.mxu0 %v2680
        %2851 = vmatprep.subr.mxu0 0.0
        %2852 = vmatpush2.msra.mxu0 %v2679
        %2853 = vmatprep.subr.mxu0 0.0
        %2854 = vmatpush2.msra.mxu0 %v2678
        %2855 = vmatprep.subr.mxu0 0.0
        %2856 = vmatpush2.msra.mxu0 %v2677
        %2857 = vmatprep.subr.mxu0 0.0
        %2858 = vmatpush2.msra.mxu0 %v2676
        %2859 = vmatprep.subr.mxu0 0.0
        %2860 = vmatpush2.msra.mxu0 %v2675
        %2861 = vmatprep.subr.mxu0 0.0
        %2862 = vmatpush2.msra.mxu0 %v2674
        %2863 = vmatprep.subr.mxu0 0.0
        %2864 = vmatpush2.msra.mxu0 %v2673
        %2865 = vmatprep.mubr.f32.mxu0 %v2596
        %2866 = vmatmul.mubr.f32.gmra.mxu0 %v2595
        %v2867 = vpop.f32.mrf.mxu0
        %v2868 = vadd.f32 %v2763, %v2867
        %v2869 = vpop.f32.mrf.mxu0
        %2870 = vmatprep.mubr.f32.mxu0 %v2600
        %2871 = vmatmul.mubr.f32.gmra.mxu0 %v2599
        %v2872 = vpop.f32.mrf.mxu0
        %v2873 = vadd.f32 %v2768, %v2872
        %v2874 = vpop.f32.mrf.mxu0
        %2875 = vmatprep.mubr.f32.mxu0 %v2604
        %2876 = vmatmul.mubr.f32.gmra.mxu0 %v2603
        %v2877 = vpop.f32.mrf.mxu0
        %v2878 = vadd.f32 %v2773, %v2877
        %v2879 = vpop.f32.mrf.mxu0
        %2880 = vmatprep.mubr.f32.mxu0 %v2608
        %2881 = vmatmul.mubr.f32.gmra.mxu0 %v2607
        %v2882 = vpop.f32.mrf.mxu0
        %v2883 = vadd.f32 %v2778, %v2882
        %v2884 = vpop.f32.mrf.mxu0
        %2885 = vmatprep.mubr.f32.mxu0 %v2612
        %2886 = vmatmul.mubr.f32.gmra.mxu0 %v2611
        %v2887 = vpop.f32.mrf.mxu0
        %v2888 = vadd.f32 %v2783, %v2887
        %v2889 = vpop.f32.mrf.mxu0
        %2890 = vmatprep.mubr.f32.mxu0 %v2616
        %2891 = vmatmul.mubr.f32.gmra.mxu0 %v2615
        %v2892 = vpop.f32.mrf.mxu0
        %v2893 = vadd.f32 %v2788, %v2892
        %v2894 = vpop.f32.mrf.mxu0
        %2895 = vmatprep.mubr.f32.mxu0 %v2620
        %2896 = vmatmul.mubr.f32.gmra.mxu0 %v2619
        %v2897 = vpop.f32.mrf.mxu0
        %v2898 = vadd.f32 %v2793, %v2897
        %v2899 = vpop.f32.mrf.mxu0
        %2900 = vmatprep.mubr.f32.mxu0 %v2624
        %2901 = vmatmul.mubr.f32.gmra.mxu0 %v2623
        %v2902 = vpop.f32.mrf.mxu0
        %v2903 = vadd.f32 %v2798, %v2902
        %v2904 = vpop.f32.mrf.mxu0
        %2905 = vdwg.mxu0
        %2906 = vst [vmem:[%s419] sm:$0xff] %v2868
        %2907 = vst [vmem:[%s419 + $0x8] sm:$0xff] %v2873
        %2908 = vst [vmem:[%s419 + $0x10] sm:$0xff] %v2878
        %2909 = vst [vmem:[%s419 + $0x18] sm:$0xff] %v2883
        %2910 = vst [vmem:[%s419 + $0x20] sm:$0xff] %v2888
        %2911 = vst [vmem:[%s419 + $0x28] sm:$0xff] %v2893
        %2912 = vst [vmem:[%s419 + $0x30] sm:$0xff] %v2898
        %2913 = vst [vmem:[%s419 + $0x38] sm:$0xff] %v2903
        %s2914 = sand.u32 %s231, 1
        %s2915 = scalar_lea.sflag [#allocation4], %s2914
        %s2916 = sand.u32 %s231, 1
        %s2917 = smul.addr %s2916, 64
        %s2918 = scalar_lea.vmem [#allocation13], %s2917
        // Predicated region
        $region81: #{tpu_custom_call.1} parent=55 // pred_check
          %p2919 = pneg %p241
        $region82: #{tpu_custom_call.1} parent=55 // pred_check_branch
          %2921 = sbr.rel (%p2919) target = $region84
        $region83: #{tpu_custom_call.1} parent=55 // pred_region
          %s2923 = ssub.s32 1024, 1024
          %2924 = vsyncadd %s2915, %s2923
          %s2925 = smul.addr %s29, 8
          %s2926 = smul.addr %s2925, 128
          %s2927 = scalar_lea.hbm %s9, %s2926
          %s2928 = sshll.u32 %s2918, 4
          %s2929 = int_to_ptr.vmem [resolvable:$true] %s2928
          %2934 = dma.vmem_to_hbm [thread:$0]  %s2929, 1024, %s2927, %s2915, 128, 128, 8
        $region84: #{tpu_custom_call.1} parent=55 // pred_fallthru
          _
      $region56: #{tpu_custom_call.1} parent=5 // pred_fallthru
        _
      %p2935 = scmp.le.s32.totalorder 2, %s24
      // Predicated region
      $region85: #{tpu_custom_call.1} parent=5 // pred_check
        %p2936 = pneg %p2935
      $region86: #{tpu_custom_call.1} parent=5 // pred_check_branch
        %2938 = sbr.rel (%p2936) target = $region88
      $region87: #{tpu_custom_call.1} parent=5 // pred_region
        %s2939 = ssub.s32 %s24, 2
        // Predicated region
        $region89: #{tpu_custom_call.1} parent=87 // pred_check
          %p2940 = pneg %p247
        $region90: #{tpu_custom_call.1} parent=87 // pred_check_branch
          %2942 = sbr.rel (%p2940) target = $region92
        $region91: #{tpu_custom_call.1} parent=87 // pred_region
          %s2943 = sand.u32 %s232, 1
          %s2944 = scalar_lea.sflag [#allocation4], %s2943
          %s2945 = sand.u32 %s232, 1
          %s2946 = smul.addr %s2945, 64
          %s2947 = scalar_lea.vmem [#allocation13], %s2946
          %2948 = dma.done %s2944, 1024
        $region92: #{tpu_custom_call.1} parent=87 // pred_fallthru
          _
      $region88: #{tpu_custom_call.1} parent=5 // pred_fallthru
        _
    $region6: #{tpu_custom_call.1} parent=1 // loop_footer
      %s28 = sadd.s32 1, %s24
    $region7: #{tpu_custom_call.1} parent=1 // loop_footer_branch
      %23 = sbr.rel target = $region3
    $region8: #{tpu_custom_call.1} parent=1 // loop_exit
      _
    %2949 = vsyncpa [#allocation3], 1
    %s2950 = scalar_lea.sflag [#allocation3], 1
    %2951 = vsyncpa %s2950, 1
    %2952 = vsyncpa [#allocation6], 1
    %2953 = vsyncpa [#allocation9], 1
    %2954 = vsyncpa [#allocation12], 1
    %2955 = vsyncpa [#allocation4], 1
    %s2956 = scalar_lea.sflag [#allocation4], 1
    %2957 = vsyncpa %s2956, 1

</llo_original>
